<compile_context>
chip_gen: v7x
topology: tpu7x:2x2x1
jax: 0.10.0
libtpu: 0.0.40
codegen_flags: <defaults>
</compile_context>

<pallas_src>
import functools

import jax
import jax.numpy as jnp
from jax.experimental import pallas as pl
from jax.experimental.pallas import tpu as pltpu

LEAKY_SLOPE = 0.2
DEC_PAD = 128  # lane-dense padding of the final N=1 decoder output


def _round_up(x, m):
    return ((x + m - 1) // m) * m


def _pick_tile(mp, cap=512):
    """Largest row tile (multiple of 16) that divides mp, capped at `cap`."""
    if mp <= cap:
        return mp
    for t in (cap, 256, 128, 64, 32, 16):
        if mp % t == 0:
            return t
    return mp


# --------------------------------------------------------------------------
# Kernel 1: batched GEMM + bias + LeakyReLU over a leading "encoder" axis E.
#   x: (E, M, K) bf16, w: (E, K, N) bf16, b: (E, 1, N) f32 -> (E, M, N)
# Used for every conv level (after im2col) and the per-encoder flatten Linear.
# --------------------------------------------------------------------------
def _bgemm_kernel(x_ref, w_ref, b_ref, o_ref, *, leaky):
    y = jnp.dot(x_ref[0], w_ref[0], preferred_element_type=jnp.float32)
    y = y + b_ref[0]
    if leaky:
        y = jnp.where(y >= 0.0, y, LEAKY_SLOPE * y)
    o_ref[0] = y.astype(o_ref.dtype)


def batched_linear_leaky(x, w, b, *, leaky=True, out_dtype=jnp.bfloat16):
    E, M, K = x.shape
    N = w.shape[2]
    Mp = _round_up(M, 16)
    if Mp != M:
        x = jnp.pad(x, ((0, 0), (0, Mp - M), (0, 0)))
    tm = _pick_tile(Mp)
    grid = (E, Mp // tm)
    out = pl.pallas_call(
        functools.partial(_bgemm_kernel, leaky=leaky),
        out_shape=jax.ShapeDtypeStruct((E, Mp, N), out_dtype),
        grid_spec=pltpu.PrefetchScalarGridSpec(
            num_scalar_prefetch=0,
            grid=grid,
            in_specs=[
                pl.BlockSpec((1, tm, K), lambda e, i: (e, i, 0)),   # activation tile
                pl.BlockSpec((1, K, N), lambda e, i: (e, 0, 0)),    # per-encoder weight
                pl.BlockSpec((1, 1, N), lambda e, i: (e, 0, 0)),    # per-encoder bias
            ],
            out_specs=pl.BlockSpec((1, tm, N), lambda e, i: (e, i, 0)),
        ),
        compiler_params=pltpu.CompilerParams(
            dimension_semantics=("parallel", "parallel")),
    )(x, w, b)
    return out[:, :M, :]


# --------------------------------------------------------------------------
# Kernel 2: fused 2-layer MLP (feature_encoder):  leaky(leaky(x@W1+b1)@W2+b2)
# --------------------------------------------------------------------------
def _mlp2_kernel(x_ref, w1_ref, b1_ref, w2_ref, b2_ref, o_ref):
    h = jnp.dot(x_ref[...], w1_ref[...], preferred_element_type=jnp.float32)
    h = h + b1_ref[...]
    h = jnp.where(h >= 0.0, h, LEAKY_SLOPE * h).astype(jnp.bfloat16)
    y = jnp.dot(h, w2_ref[...], preferred_element_type=jnp.float32)
    y = y + b2_ref[...]
    y = jnp.where(y >= 0.0, y, LEAKY_SLOPE * y)
    o_ref[...] = y.astype(o_ref.dtype)


def feature_encoder(x, p):
    """x: (M, feature_dim) bf16 -> (M, hidden) bf16."""
    M, K = x.shape
    N1 = p["w1"].shape[1]
    N2 = p["w2"].shape[1]
    Mp = _round_up(M, 16)
    if Mp != M:
        x = jnp.pad(x, ((0, Mp - M), (0, 0)))
    tm = _pick_tile(Mp)
    out = pl.pallas_call(
        _mlp2_kernel,
        out_shape=jax.ShapeDtypeStruct((Mp, N2), jnp.bfloat16),
        grid_spec=pltpu.PrefetchScalarGridSpec(
            num_scalar_prefetch=0,
            grid=(Mp // tm,),
            in_specs=[
                pl.BlockSpec((tm, K), lambda i: (i, 0)),
                pl.BlockSpec((K, N1), lambda i: (0, 0)),
                pl.BlockSpec((1, N1), lambda i: (0, 0)),
                pl.BlockSpec((N1, N2), lambda i: (0, 0)),
                pl.BlockSpec((1, N2), lambda i: (0, 0)),
            ],
            out_specs=pl.BlockSpec((tm, N2), lambda i: (i, 0)),
        ),
        compiler_params=pltpu.CompilerParams(dimension_semantics=("parallel",)),
    )(x, p["w1"], p["b1"], p["w2"], p["b2"])
    return out[:M]


# --------------------------------------------------------------------------
# Kernel 3: fused fusion(2 Linears) + decoder(2 Linears).
# Final Linear (true N=1) is zero-padded to 128 output lanes -> lane-dense store.
# --------------------------------------------------------------------------
def _fusion_decoder_kernel(x_ref, w1, b1, w2, b2, w3, b3, w4, b4, o_ref):
    def step(x, w_ref, b_ref, leaky):
        y = jnp.dot(x, w_ref[...], preferred_element_type=jnp.float32) + b_ref[...]
        if leaky:
            y = jnp.where(y >= 0.0, y, LEAKY_SLOPE * y)
        return y

    h = step(x_ref[...], w1, b1, True).astype(jnp.bfloat16)
    h = step(h, w2, b2, True).astype(jnp.bfloat16)
    h = step(h, w3, b3, True).astype(jnp.bfloat16)
    o_ref[...] = step(h, w4, b4, False).astype(o_ref.dtype)


def fusion_decoder(x, p):
    """x: (M, 4*hidden) bf16 -> (M,) f32 (decoder output, column 0 of padded slab)."""
    M, K = x.shape
    N1, N2, N3, N4 = (p["w1"].shape[1], p["w2"].shape[1],
                      p["w3"].shape[1], p["w4"].shape[1])
    Mp = _round_up(M, 16)
    if Mp != M:
        x = jnp.pad(x, ((0, Mp - M), (0, 0)))
    tm = _pick_tile(Mp)
    out = pl.pallas_call(
        _fusion_decoder_kernel,
        out_shape=jax.ShapeDtypeStruct((Mp, N4), jnp.float32),
        grid_spec=pltpu.PrefetchScalarGridSpec(
            num_scalar_prefetch=0,
            grid=(Mp // tm,),
            in_specs=[
                pl.BlockSpec((tm, K), lambda i: (i, 0)),
                pl.BlockSpec((K, N1), lambda i: (0, 0)), pl.BlockSpec((1, N1), lambda i: (0, 0)),
                pl.BlockSpec((N1, N2), lambda i: (0, 0)), pl.BlockSpec((1, N2), lambda i: (0, 0)),
                pl.BlockSpec((N2, N3), lambda i: (0, 0)), pl.BlockSpec((1, N3), lambda i: (0, 0)),
                pl.BlockSpec((N3, N4), lambda i: (0, 0)), pl.BlockSpec((1, N4), lambda i: (0, 0)),
            ],
            out_specs=pl.BlockSpec((tm, N4), lambda i: (i, 0)),
        ),
        compiler_params=pltpu.CompilerParams(dimension_semantics=("parallel",)),
    )(x, p["w1"], p["b1"], p["w2"], p["b2"], p["w3"], p["b3"], p["w4"], p["b4"])
    return out[:M, 0]


# --------------------------------------------------------------------------
# Conv glue: 3x3, stride 2, pad 1 im2col on NHWC, batched over encoders.
# Column order is (kh, kw, c), matching the (E, 9*Cin, Cout) weight layout.
# --------------------------------------------------------------------------
def _im2col_s2(x):
    """x: (E, B, H, W, C) -> (E, B*Ho*Wo, 9*C), Ho, Wo."""
    E, B, H, W, C = x.shape
    xp = jnp.pad(x, ((0, 0), (0, 0), (1, 1), (1, 1), (0, 0)))
    Ho = (H + 2 - 3) // 2 + 1
    Wo = (W + 2 - 3) // 2 + 1
    taps = []
    for kh in range(3):
        for kw in range(3):
            taps.append(xp[:, :, kh:kh + 2 * Ho:2, kw:kw + 2 * Wo:2, :])
    col = jnp.stack(taps, axis=4)                  # (E, B, Ho, Wo, 9, C)
    return col.reshape(E, B * Ho * Wo, 9 * C), Ho, Wo


def image_encoders(imgs, enc_params):
    """imgs: (E=3, B, H, W, 3) bf16 NHWC -> (E, B, hidden) bf16."""
    x = imgs
    E, B = x.shape[0], x.shape[1]
    for lvl in enc_params["convs"]:
        col, Ho, Wo = _im2col_s2(x)
        y = batched_linear_leaky(col, lvl["w"], lvl["b"])       # conv + LeakyReLU
        x = y.reshape(E, B, Ho, Wo, -1)
    flat = x.reshape(E, B, -1)                                   # NHWC flatten order
    return batched_linear_leaky(flat, enc_params["lin"]["w"], enc_params["lin"]["b"])


# --------------------------------------------------------------------------
# Parameter init (PyTorch-style uniform(-1/sqrt(fan_in), +1/sqrt(fan_in))).
# All weights are pre-laid-out for the kernels (bf16, (K,N) / (E,K,N)) at init.
# --------------------------------------------------------------------------
def _uniform(key, shape, lim):
    return jax.random.uniform(key, shape, jnp.float32, -lim, lim)


def init_params(key, feature_dim, img_size, hidden_dim):
    keys = iter(jax.random.split(key, 64))

    def lin(fan_in, fan_out, pad_out=None):
        lim = 1.0 / float(fan_in) ** 0.5
        w = _uniform(next(keys), (fan_in, fan_out), lim)
        b = _uniform(next(keys), (fan_out,), lim)
        if pad_out is not None and pad_out > fan_out:
            w = jnp.pad(w, ((0, 0), (0, pad_out - fan_out)))
            b = jnp.pad(b, ((0, pad_out - fan_out),))
        return w.astype(jnp.bfloat16), b.reshape(1, -1).astype(jnp.float32)

    # feature encoder (fused 2-layer MLP)
    f1w, f1b = lin(feature_dim, hidden_dim)
    f2w, f2b = lin(hidden_dim, hidden_dim)
    feat = {"w1": f1w, "b1": f1b, "w2": f2w, "b2": f2b}

    # image encoders: arrow (Cin=3), depth (Cin=1, zero-padded to 3), normal (Cin=3)
    cins0 = [3, 1, 3]
    chans = [3, 16, 32, 64, 128, 256]
    convs = []
    for lvl in range(5):
        cin_pad, cout = chans[lvl], chans[lvl + 1]
        ws, bs = [], []
        for e in range(3):
            cin_real = cins0[e] if lvl == 0 else cin_pad
            lim = 1.0 / float(cin_real * 9) ** 0.5
            w = _uniform(next(keys), (3, 3, cin_real, cout), lim)   # (kh, kw, cin, cout)
            if cin_real != cin_pad:
                w = jnp.pad(w, ((0, 0), (0, 0), (0, cin_pad - cin_real), (0, 0)))
            ws.append(w.reshape(9 * cin_pad, cout))
            bs.append(_uniform(next(keys), (cout,), lim))
        convs.append({
            "w": jnp.stack(ws, 0).astype(jnp.bfloat16),             # (3, 9*Cin, Cout)
            "b": jnp.stack(bs, 0).reshape(3, 1, cout).astype(jnp.float32),
        })

    flat_dim = 256 * (img_size // 32) ** 2
    lim = 1.0 / float(flat_dim) ** 0.5
    lin_w = jnp.stack([_uniform(next(keys), (flat_dim, hidden_dim), lim)
                       for _ in range(3)], 0).astype(jnp.bfloat16)
    lin_b = jnp.stack([_uniform(next(keys), (hidden_dim,), lim)
                       for _ in range(3)], 0).reshape(3, 1, hidden_dim).astype(jnp.float32)
    enc = {"convs": convs, "lin": {"w": lin_w, "b": lin_b}}

    # fusion + decoder (fused 4-layer head); last Linear padded to 128 lanes
    h1w, h1b = lin(hidden_dim * 4, hidden_dim * 2)
    h2w, h2b = lin(hidden_dim * 2, hidden_dim)
    h3w, h3b = lin(hidden_dim, hidden_dim)
    h4w, h4b = lin(hidden_dim, 1, pad_out=DEC_PAD)
    head = {"w1": h1w, "b1": h1b, "w2": h2w, "b2": h2b,
            "w3": h3w, "b3": h3b, "w4": h4w, "b4": h4b}

    return {"feat": feat, "enc": enc, "head": head}


# --------------------------------------------------------------------------
# Forward pass (matches MultiImageFieldMLP.forward semantics)
# --------------------------------------------------------------------------
def forward(params, feats, arrow, depth, normal):
    b, n, fd = feats.shape
    hidden = params["feat"]["w2"].shape[1]

    # feature_encoder on (b*n, fd) -- one fused kernel
    feat_e = feature_encoder(feats.reshape(b * n, fd).astype(jnp.bfloat16),
                             params["feat"]).reshape(b, n, hidden)

    # stack the 3 image streams (depth zero-padded to 3 channels), NCHW -> NHWC
    depth3 = jnp.pad(depth, ((0, 0), (0, 3 - depth.shape[1]), (0, 0), (0, 0)))
    imgs = jnp.stack([arrow, depth3, normal], axis=0)            # (3, B, 3, H, W)
    imgs = imgs.transpose(0, 1, 3, 4, 2).astype(jnp.bfloat16)    # (3, B, H, W, 3)

    img_e = image_encoders(imgs, params["enc"])                  # (3, B, hidden) bf16
    arr_e, dep_e, nor_e = img_e[0], img_e[1], img_e[2]

    # unsqueeze(1).expand(-1, n, -1)
    arr_e = jnp.broadcast_to(arr_e[:, None, :], (b, n, hidden))
    dep_e = jnp.broadcast_to(dep_e[:, None, :], (b, n, hidden))
    nor_e = jnp.broadcast_to(nor_e[:, None, :], (b, n, hidden))

    fused_in = jnp.concatenate([feat_e, arr_e, dep_e, nor_e], axis=-1)
    fused_in = fused_in.reshape(b * n, 4 * hidden)

    out = fusion_decoder(fused_in, params["head"])               # (b*n,) f32
    return out.reshape(b, n)                                     # .squeeze(-1)


# --------------------------------------------------------------------------
if __name__ == "__main__":
    b, n = 2, 8
    feature_dim, img_size, hidden_dim = 16, 32, 32   # img_size multiple of 32

    params = init_params(jax.random.PRNGKey(42), feature_dim, img_size, hidden_dim)

    key = jax.random.PRNGKey(0)
    k1, k2, k3, k4 = jax.random.split(key, 4)
    feats = jax.random.normal(k1, (b, n, feature_dim), jnp.float32)
    arrow = jax.random.normal(k2, (b, 3, img_size, img_size), jnp.float32)
    depth = jax.random.normal(k3, (b, 1, img_size, img_size), jnp.float32)
    normal = jax.random.normal(k4, (b, 3, img_size, img_size), jnp.float32)

    fwd = jax.jit(forward)
    out = jax.block_until_ready(fwd(params, feats, arrow, depth, normal))
    assert out.shape == (b, n), out.shape
    assert bool(jnp.all(jnp.isfinite(out)))
    print("KERNEL_OK")
</pallas_src>

<mosaic_0001>
module attributes {stable_mosaic.version = 11 : i64} {
  func.func @_bgemm_kernel(%arg0: i32, %arg1: i32, %arg2: memref<1x512x27xbf16, #tpu.memory_space<vmem>>, %arg3: memref<1x27x16xbf16, #tpu.memory_space<vmem>>, %arg4: memref<1x1x16xf32, #tpu.memory_space<vmem>>, %arg5: memref<1x512x16xbf16, #tpu.memory_space<vmem>>) attributes {dimension_semantics = [#tpu.dimension_semantics<parallel>, #tpu.dimension_semantics<parallel>], iteration_bounds = array<i64: 3, 1>, scalar_prefetch = 0 : i64, scratch_operands = 0 : i64, tpu.core_type = #tpu.core_type<tc>, window_params = [{transform_indices = @transform_0, window_bounds = array<i64: 1, 512, 27>}, {transform_indices = @transform_1, window_bounds = array<i64: 1, 27, 16>}, {transform_indices = @transform_2, window_bounds = array<i64: 1, 1, 16>}, {transform_indices = @transform_3, window_bounds = array<i64: 1, 512, 16>}]} {
    %c0 = arith.constant 0 : index
    %c0_0 = arith.constant 0 : index
    %c0_1 = arith.constant 0 : index
    %0 = vector.load %arg2[%c0, %c0_0, %c0_1] : memref<1x512x27xbf16, #tpu.memory_space<vmem>>, vector<1x512x27xbf16>
    %1 = vector.shape_cast %0 : vector<1x512x27xbf16> to vector<512x27xbf16>
    %c0_2 = arith.constant 0 : index
    %c0_3 = arith.constant 0 : index
    %c0_4 = arith.constant 0 : index
    %2 = vector.load %arg3[%c0_2, %c0_3, %c0_4] : memref<1x27x16xbf16, #tpu.memory_space<vmem>>, vector<1x27x16xbf16>
    %3 = vector.shape_cast %2 : vector<1x27x16xbf16> to vector<27x16xbf16>
    %cst = arith.constant dense<0.000000e+00> : vector<512x16xf32>
    %4 = tpu.matmul %1, %3, %cst {dimension_numbers = #tpu.dot_dimension_numbers<[1], [0], [0], [1], [0, 0, 1, 1], [], []>} : vector<512x27xbf16>, vector<27x16xbf16>, vector<512x16xf32> -> vector<512x16xf32>
    %c0_5 = arith.constant 0 : index
    %c0_6 = arith.constant 0 : index
    %c0_7 = arith.constant 0 : index
    %5 = vector.load %arg4[%c0_5, %c0_6, %c0_7] : memref<1x1x16xf32, #tpu.memory_space<vmem>>, vector<1x1x16xf32>
    %6 = vector.shape_cast %5 : vector<1x1x16xf32> to vector<1x16xf32>
    %7 = vector.broadcast %6 : vector<1x16xf32> to vector<512x16xf32>
    %8 = arith.addf %4, %7 : vector<512x16xf32>
    %cst_8 = arith.constant 0.000000e+00 : f32
    %9 = vector.broadcast %cst_8 : f32 to vector<512x16xf32>
    %10 = arith.cmpf oge, %8, %9 : vector<512x16xf32>
    %cst_9 = arith.constant 2.000000e-01 : f32
    %11 = vector.broadcast %cst_9 : f32 to vector<512x16xf32>
    %12 = arith.mulf %11, %8 : vector<512x16xf32>
    %13 = arith.select %10, %8, %12 : vector<512x16xi1>, vector<512x16xf32>
    %14 = arith.truncf %13 : vector<512x16xf32> to vector<512x16xbf16>
    %c0_10 = arith.constant 0 : index
    %c0_11 = arith.constant 0 : index
    %c0_12 = arith.constant 0 : index
    %15 = vector.load %arg5[%c0_10, %c0_11, %c0_12] : memref<1x512x16xbf16, #tpu.memory_space<vmem>>, vector<1x512x16xbf16>
    %16 = vector.shape_cast %15 : vector<1x512x16xbf16> to vector<512x16xbf16>
    %17 = vector.shape_cast %14 : vector<512x16xbf16> to vector<1x512x16xbf16>
    tpu.vector_store %arg5[%c0_10, %c0_11, %c0_12], %17 {strides = array<i32>} : memref<1x512x16xbf16, #tpu.memory_space<vmem>>, vector<1x512x16xbf16>,
    return
  }
  func.func @transform_0(%arg0: i32, %arg1: i32) -> (i32, i32, i32) {
    %c0_i32 = arith.constant 0 : i32
    %c0_i32_0 = arith.constant 0 : i32
    return %arg0, %arg1, %c0_i32 : i32, i32, i32
  }
  func.func @transform_1(%arg0: i32, %arg1: i32) -> (i32, i32, i32) {
    %c0_i32 = arith.constant 0 : i32
    %c0_i32_0 = arith.constant 0 : i32
    %c0_i32_1 = arith.constant 0 : i32
    return %arg0, %c0_i32, %c0_i32_0 : i32, i32, i32
  }
  func.func @transform_2(%arg0: i32, %arg1: i32) -> (i32, i32, i32) {
    %c0_i32 = arith.constant 0 : i32
    %c0_i32_0 = arith.constant 0 : i32
    %c0_i32_1 = arith.constant 0 : i32
    return %arg0, %c0_i32, %c0_i32_0 : i32, i32, i32
  }
  func.func @transform_3(%arg0: i32, %arg1: i32) -> (i32, i32, i32) {
    %c0_i32 = arith.constant 0 : i32
    %c0_i32_0 = arith.constant 0 : i32
    return %arg0, %arg1, %c0_i32 : i32, i32, i32
  }
}

module attributes {stable_mosaic.version = 11 : i64} {
  func.func @_bgemm_kernel(%arg0: i32, %arg1: i32, %arg2: memref<1x128x144xbf16, #tpu.memory_space<vmem>>, %arg3: memref<1x144x32xbf16, #tpu.memory_space<vmem>>, %arg4: memref<1x1x32xf32, #tpu.memory_space<vmem>>, %arg5: memref<1x128x32xbf16, #tpu.memory_space<vmem>>) attributes {dimension_semantics = [#tpu.dimension_semantics<parallel>, #tpu.dimension_semantics<parallel>], iteration_bounds = array<i64: 3, 1>, scalar_prefetch = 0 : i64, scratch_operands = 0 : i64, tpu.core_type = #tpu.core_type<tc>, window_params = [{transform_indices = @transform_0, window_bounds = array<i64: 1, 128, 144>}, {transform_indices = @transform_1, window_bounds = array<i64: 1, 144, 32>}, {transform_indices = @transform_2, window_bounds = array<i64: 1, 1, 32>}, {transform_indices = @transform_3, window_bounds = array<i64: 1, 128, 32>}]} {
    %c0 = arith.constant 0 : index
    %c0_0 = arith.constant 0 : index
    %c0_1 = arith.constant 0 : index
    %0 = vector.load %arg2[%c0, %c0_0, %c0_1] : memref<1x128x144xbf16, #tpu.memory_space<vmem>>, vector<1x128x144xbf16>
    %1 = vector.shape_cast %0 : vector<1x128x144xbf16> to vector<128x144xbf16>
    %c0_2 = arith.constant 0 : index
    %c0_3 = arith.constant 0 : index
    %c0_4 = arith.constant 0 : index
    %2 = vector.load %arg3[%c0_2, %c0_3, %c0_4] : memref<1x144x32xbf16, #tpu.memory_space<vmem>>, vector<1x144x32xbf16>
    %3 = vector.shape_cast %2 : vector<1x144x32xbf16> to vector<144x32xbf16>
    %cst = arith.constant dense<0.000000e+00> : vector<128x32xf32>
    %4 = tpu.matmul %1, %3, %cst {dimension_numbers = #tpu.dot_dimension_numbers<[1], [0], [0], [1], [0, 0, 1, 1], [], []>} : vector<128x144xbf16>, vector<144x32xbf16>, vector<128x32xf32> -> vector<128x32xf32>
    %c0_5 = arith.constant 0 : index
    %c0_6 = arith.constant 0 : index
    %c0_7 = arith.constant 0 : index
    %5 = vector.load %arg4[%c0_5, %c0_6, %c0_7] : memref<1x1x32xf32, #tpu.memory_space<vmem>>, vector<1x1x32xf32>
    %6 = vector.shape_cast %5 : vector<1x1x32xf32> to vector<1x32xf32>
    %7 = vector.broadcast %6 : vector<1x32xf32> to vector<128x32xf32>
    %8 = arith.addf %4, %7 : vector<128x32xf32>
    %cst_8 = arith.constant 0.000000e+00 : f32
    %9 = vector.broadcast %cst_8 : f32 to vector<128x32xf32>
    %10 = arith.cmpf oge, %8, %9 : vector<128x32xf32>
    %cst_9 = arith.constant 2.000000e-01 : f32
    %11 = vector.broadcast %cst_9 : f32 to vector<128x32xf32>
    %12 = arith.mulf %11, %8 : vector<128x32xf32>
    %13 = arith.select %10, %8, %12 : vector<128x32xi1>, vector<128x32xf32>
    %14 = arith.truncf %13 : vector<128x32xf32> to vector<128x32xbf16>
    %c0_10 = arith.constant 0 : index
    %c0_11 = arith.constant 0 : index
    %c0_12 = arith.constant 0 : index
    %15 = vector.load %arg5[%c0_10, %c0_11, %c0_12] : memref<1x128x32xbf16, #tpu.memory_space<vmem>>, vector<1x128x32xbf16>
    %16 = vector.shape_cast %15 : vector<1x128x32xbf16> to vector<128x32xbf16>
    %17 = vector.shape_cast %14 : vector<128x32xbf16> to vector<1x128x32xbf16>
    tpu.vector_store %arg5[%c0_10, %c0_11, %c0_12], %17 {strides = array<i32>} : memref<1x128x32xbf16, #tpu.memory_space<vmem>>, vector<1x128x32xbf16>,
    return
  }
  func.func @transform_0(%arg0: i32, %arg1: i32) -> (i32, i32, i32) {
    %c0_i32 = arith.constant 0 : i32
    %c0_i32_0 = arith.constant 0 : i32
    return %arg0, %arg1, %c0_i32 : i32, i32, i32
  }
  func.func @transform_1(%arg0: i32, %arg1: i32) -> (i32, i32, i32) {
    %c0_i32 = arith.constant 0 : i32
    %c0_i32_0 = arith.constant 0 : i32
    %c0_i32_1 = arith.constant 0 : i32
    return %arg0, %c0_i32, %c0_i32_0 : i32, i32, i32
  }
  func.func @transform_2(%arg0: i32, %arg1: i32) -> (i32, i32, i32) {
    %c0_i32 = arith.constant 0 : i32
    %c0_i32_0 = arith.constant 0 : i32
    %c0_i32_1 = arith.constant 0 : i32
    return %arg0, %c0_i32, %c0_i32_0 : i32, i32, i32
  }
  func.func @transform_3(%arg0: i32, %arg1: i32) -> (i32, i32, i32) {
    %c0_i32 = arith.constant 0 : i32
    %c0_i32_0 = arith.constant 0 : i32
    return %arg0, %arg1, %c0_i32 : i32, i32, i32
  }
}

module attributes {stable_mosaic.version = 11 : i64} {
  func.func @_bgemm_kernel(%arg0: i32, %arg1: i32, %arg2: memref<1x32x288xbf16, #tpu.memory_space<vmem>>, %arg3: memref<1x288x64xbf16, #tpu.memory_space<vmem>>, %arg4: memref<1x1x64xf32, #tpu.memory_space<vmem>>, %arg5: memref<1x32x64xbf16, #tpu.memory_space<vmem>>) attributes {dimension_semantics = [#tpu.dimension_semantics<parallel>, #tpu.dimension_semantics<parallel>], iteration_bounds = array<i64: 3, 1>, scalar_prefetch = 0 : i64, scratch_operands = 0 : i64, tpu.core_type = #tpu.core_type<tc>, window_params = [{transform_indices = @transform_0, window_bounds = array<i64: 1, 32, 288>}, {transform_indices = @transform_1, window_bounds = array<i64: 1, 288, 64>}, {transform_indices = @transform_2, window_bounds = array<i64: 1, 1, 64>}, {transform_indices = @transform_3, window_bounds = array<i64: 1, 32, 64>}]} {
    %c0 = arith.constant 0 : index
    %c0_0 = arith.constant 0 : index
    %c0_1 = arith.constant 0 : index
    %0 = vector.load %arg2[%c0, %c0_0, %c0_1] : memref<1x32x288xbf16, #tpu.memory_space<vmem>>, vector<1x32x288xbf16>
    %1 = vector.shape_cast %0 : vector<1x32x288xbf16> to vector<32x288xbf16>
    %c0_2 = arith.constant 0 : index
    %c0_3 = arith.constant 0 : index
    %c0_4 = arith.constant 0 : index
    %2 = vector.load %arg3[%c0_2, %c0_3, %c0_4] : memref<1x288x64xbf16, #tpu.memory_space<vmem>>, vector<1x288x64xbf16>
    %3 = vector.shape_cast %2 : vector<1x288x64xbf16> to vector<288x64xbf16>
    %cst = arith.constant dense<0.000000e+00> : vector<32x64xf32>
    %4 = tpu.matmul %1, %3, %cst {dimension_numbers = #tpu.dot_dimension_numbers<[1], [0], [0], [1], [0, 0, 1, 1], [], []>} : vector<32x288xbf16>, vector<288x64xbf16>, vector<32x64xf32> -> vector<32x64xf32>
    %c0_5 = arith.constant 0 : index
    %c0_6 = arith.constant 0 : index
    %c0_7 = arith.constant 0 : index
    %5 = vector.load %arg4[%c0_5, %c0_6, %c0_7] : memref<1x1x64xf32, #tpu.memory_space<vmem>>, vector<1x1x64xf32>
    %6 = vector.shape_cast %5 : vector<1x1x64xf32> to vector<1x64xf32>
    %7 = vector.broadcast %6 : vector<1x64xf32> to vector<32x64xf32>
    %8 = arith.addf %4, %7 : vector<32x64xf32>
    %cst_8 = arith.constant 0.000000e+00 : f32
    %9 = vector.broadcast %cst_8 : f32 to vector<32x64xf32>
    %10 = arith.cmpf oge, %8, %9 : vector<32x64xf32>
    %cst_9 = arith.constant 2.000000e-01 : f32
    %11 = vector.broadcast %cst_9 : f32 to vector<32x64xf32>
    %12 = arith.mulf %11, %8 : vector<32x64xf32>
    %13 = arith.select %10, %8, %12 : vector<32x64xi1>, vector<32x64xf32>
    %14 = arith.truncf %13 : vector<32x64xf32> to vector<32x64xbf16>
    %c0_10 = arith.constant 0 : index
    %c0_11 = arith.constant 0 : index
    %c0_12 = arith.constant 0 : index
    %15 = vector.load %arg5[%c0_10, %c0_11, %c0_12] : memref<1x32x64xbf16, #tpu.memory_space<vmem>>, vector<1x32x64xbf16>
    %16 = vector.shape_cast %15 : vector<1x32x64xbf16> to vector<32x64xbf16>
    %17 = vector.shape_cast %14 : vector<32x64xbf16> to vector<1x32x64xbf16>
    tpu.vector_store %arg5[%c0_10, %c0_11, %c0_12], %17 {strides = array<i32>} : memref<1x32x64xbf16, #tpu.memory_space<vmem>>, vector<1x32x64xbf16>,
    return
  }
  func.func @transform_0(%arg0: i32, %arg1: i32) -> (i32, i32, i32) {
    %c0_i32 = arith.constant 0 : i32
    %c0_i32_0 = arith.constant 0 : i32
    return %arg0, %arg1, %c0_i32 : i32, i32, i32
  }
  func.func @transform_1(%arg0: i32, %arg1: i32) -> (i32, i32, i32) {
    %c0_i32 = arith.constant 0 : i32
    %c0_i32_0 = arith.constant 0 : i32
    %c0_i32_1 = arith.constant 0 : i32
    return %arg0, %c0_i32, %c0_i32_0 : i32, i32, i32
  }
  func.func @transform_2(%arg0: i32, %arg1: i32) -> (i32, i32, i32) {
    %c0_i32 = arith.constant 0 : i32
    %c0_i32_0 = arith.constant 0 : i32
    %c0_i32_1 = arith.constant 0 : i32
    return %arg0, %c0_i32, %c0_i32_0 : i32, i32, i32
  }
  func.func @transform_3(%arg0: i32, %arg1: i32) -> (i32, i32, i32) {
    %c0_i32 = arith.constant 0 : i32
    %c0_i32_0 = arith.constant 0 : i32
    return %arg0, %arg1, %c0_i32 : i32, i32, i32
  }
}

module attributes {stable_mosaic.version = 11 : i64} {
  func.func @_bgemm_kernel(%arg0: i32, %arg1: i32, %arg2: memref<1x16x576xbf16, #tpu.memory_space<vmem>>, %arg3: memref<1x576x128xbf16, #tpu.memory_space<vmem>>, %arg4: memref<1x1x128xf32, #tpu.memory_space<vmem>>, %arg5: memref<1x16x128xbf16, #tpu.memory_space<vmem>>) attributes {dimension_semantics = [#tpu.dimension_semantics<parallel>, #tpu.dimension_semantics<parallel>], iteration_bounds = array<i64: 3, 1>, scalar_prefetch = 0 : i64, scratch_operands = 0 : i64, tpu.core_type = #tpu.core_type<tc>, window_params = [{transform_indices = @transform_0, window_bounds = array<i64: 1, 16, 576>}, {transform_indices = @transform_1, window_bounds = array<i64: 1, 576, 128>}, {transform_indices = @transform_2, window_bounds = array<i64: 1, 1, 128>}, {transform_indices = @transform_3, window_bounds = array<i64: 1, 16, 128>}]} {
    %c0 = arith.constant 0 : index
    %c0_0 = arith.constant 0 : index
    %c0_1 = arith.constant 0 : index
    %0 = vector.load %arg2[%c0, %c0_0, %c0_1] : memref<1x16x576xbf16, #tpu.memory_space<vmem>>, vector<1x16x576xbf16>
    %1 = vector.shape_cast %0 : vector<1x16x576xbf16> to vector<16x576xbf16>
    %c0_2 = arith.constant 0 : index
    %c0_3 = arith.constant 0 : index
    %c0_4 = arith.constant 0 : index
    %2 = vector.load %arg3[%c0_2, %c0_3, %c0_4] : memref<1x576x128xbf16, #tpu.memory_space<vmem>>, vector<1x576x128xbf16>
    %3 = vector.shape_cast %2 : vector<1x576x128xbf16> to vector<576x128xbf16>
    %cst = arith.constant dense<0.000000e+00> : vector<16x128xf32>
    %4 = tpu.matmul %1, %3, %cst {dimension_numbers = #tpu.dot_dimension_numbers<[1], [0], [0], [1], [0, 0, 1, 1], [], []>} : vector<16x576xbf16>, vector<576x128xbf16>, vector<16x128xf32> -> vector<16x128xf32>
    %c0_5 = arith.constant 0 : index
    %c0_6 = arith.constant 0 : index
    %c0_7 = arith.constant 0 : index
    %5 = vector.load %arg4[%c0_5, %c0_6, %c0_7] : memref<1x1x128xf32, #tpu.memory_space<vmem>>, vector<1x1x128xf32>
    %6 = vector.shape_cast %5 : vector<1x1x128xf32> to vector<1x128xf32>
    %7 = vector.broadcast %6 : vector<1x128xf32> to vector<16x128xf32>
    %8 = arith.addf %4, %7 : vector<16x128xf32>
    %cst_8 = arith.constant 0.000000e+00 : f32
    %9 = vector.broadcast %cst_8 : f32 to vector<16x128xf32>
    %10 = arith.cmpf oge, %8, %9 : vector<16x128xf32>
    %cst_9 = arith.constant 2.000000e-01 : f32
    %11 = vector.broadcast %cst_9 : f32 to vector<16x128xf32>
    %12 = arith.mulf %11, %8 : vector<16x128xf32>
    %13 = arith.select %10, %8, %12 : vector<16x128xi1>, vector<16x128xf32>
    %14 = arith.truncf %13 : vector<16x128xf32> to vector<16x128xbf16>
    %c0_10 = arith.constant 0 : index
    %c0_11 = arith.constant 0 : index
    %c0_12 = arith.constant 0 : index
    %15 = vector.load %arg5[%c0_10, %c0_11, %c0_12] : memref<1x16x128xbf16, #tpu.memory_space<vmem>>, vector<1x16x128xbf16>
    %16 = vector.shape_cast %15 : vector<1x16x128xbf16> to vector<16x128xbf16>
    %17 = vector.shape_cast %14 : vector<16x128xbf16> to vector<1x16x128xbf16>
    tpu.vector_store %arg5[%c0_10, %c0_11, %c0_12], %17 {strides = array<i32>} : memref<1x16x128xbf16, #tpu.memory_space<vmem>>, vector<1x16x128xbf16>,
    return
  }
  func.func @transform_0(%arg0: i32, %arg1: i32) -> (i32, i32, i32) {
    %c0_i32 = arith.constant 0 : i32
    %c0_i32_0 = arith.constant 0 : i32
    return %arg0, %arg1, %c0_i32 : i32, i32, i32
  }
  func.func @transform_1(%arg0: i32, %arg1: i32) -> (i32, i32, i32) {
    %c0_i32 = arith.constant 0 : i32
    %c0_i32_0 = arith.constant 0 : i32
    %c0_i32_1 = arith.constant 0 : i32
    return %arg0, %c0_i32, %c0_i32_0 : i32, i32, i32
  }
  func.func @transform_2(%arg0: i32, %arg1: i32) -> (i32, i32, i32) {
    %c0_i32 = arith.constant 0 : i32
    %c0_i32_0 = arith.constant 0 : i32
    %c0_i32_1 = arith.constant 0 : i32
    return %arg0, %c0_i32, %c0_i32_0 : i32, i32, i32
  }
  func.func @transform_3(%arg0: i32, %arg1: i32) -> (i32, i32, i32) {
    %c0_i32 = arith.constant 0 : i32
    %c0_i32_0 = arith.constant 0 : i32
    return %arg0, %arg1, %c0_i32 : i32, i32, i32
  }
}

module attributes {stable_mosaic.version = 11 : i64} {
  func.func @_bgemm_kernel(%arg0: i32, %arg1: i32, %arg2: memref<1x16x1152xbf16, #tpu.memory_space<vmem>>, %arg3: memref<1x1152x256xbf16, #tpu.memory_space<vmem>>, %arg4: memref<1x1x256xf32, #tpu.memory_space<vmem>>, %arg5: memref<1x16x256xbf16, #tpu.memory_space<vmem>>) attributes {dimension_semantics = [#tpu.dimension_semantics<parallel>, #tpu.dimension_semantics<parallel>], iteration_bounds = array<i64: 3, 1>, scalar_prefetch = 0 : i64, scratch_operands = 0 : i64, tpu.core_type = #tpu.core_type<tc>, window_params = [{transform_indices = @transform_0, window_bounds = array<i64: 1, 16, 1152>}, {transform_indices = @transform_1, window_bounds = array<i64: 1, 1152, 256>}, {transform_indices = @transform_2, window_bounds = array<i64: 1, 1, 256>}, {transform_indices = @transform_3, window_bounds = array<i64: 1, 16, 256>}]} {
    %c0 = arith.constant 0 : index
    %c0_0 = arith.constant 0 : index
    %c0_1 = arith.constant 0 : index
    %0 = vector.load %arg2[%c0, %c0_0, %c0_1] : memref<1x16x1152xbf16, #tpu.memory_space<vmem>>, vector<1x16x1152xbf16>
    %1 = vector.shape_cast %0 : vector<1x16x1152xbf16> to vector<16x1152xbf16>
    %c0_2 = arith.constant 0 : index
    %c0_3 = arith.constant 0 : index
    %c0_4 = arith.constant 0 : index
    %2 = vector.load %arg3[%c0_2, %c0_3, %c0_4] : memref<1x1152x256xbf16, #tpu.memory_space<vmem>>, vector<1x1152x256xbf16>
    %3 = vector.shape_cast %2 : vector<1x1152x256xbf16> to vector<1152x256xbf16>
    %cst = arith.constant dense<0.000000e+00> : vector<16x256xf32>
    %4 = tpu.matmul %1, %3, %cst {dimension_numbers = #tpu.dot_dimension_numbers<[1], [0], [0], [1], [0, 0, 1, 1], [], []>} : vector<16x1152xbf16>, vector<1152x256xbf16>, vector<16x256xf32> -> vector<16x256xf32>
    %c0_5 = arith.constant 0 : index
    %c0_6 = arith.constant 0 : index
    %c0_7 = arith.constant 0 : index
    %5 = vector.load %arg4[%c0_5, %c0_6, %c0_7] : memref<1x1x256xf32, #tpu.memory_space<vmem>>, vector<1x1x256xf32>
    %6 = vector.shape_cast %5 : vector<1x1x256xf32> to vector<1x256xf32>
    %7 = vector.broadcast %6 : vector<1x256xf32> to vector<16x256xf32>
    %8 = arith.addf %4, %7 : vector<16x256xf32>
    %cst_8 = arith.constant 0.000000e+00 : f32
    %9 = vector.broadcast %cst_8 : f32 to vector<16x256xf32>
    %10 = arith.cmpf oge, %8, %9 : vector<16x256xf32>
    %cst_9 = arith.constant 2.000000e-01 : f32
    %11 = vector.broadcast %cst_9 : f32 to vector<16x256xf32>
    %12 = arith.mulf %11, %8 : vector<16x256xf32>
    %13 = arith.select %10, %8, %12 : vector<16x256xi1>, vector<16x256xf32>
    %14 = arith.truncf %13 : vector<16x256xf32> to vector<16x256xbf16>
    %c0_10 = arith.constant 0 : index
    %c0_11 = arith.constant 0 : index
    %c0_12 = arith.constant 0 : index
    %15 = vector.load %arg5[%c0_10, %c0_11, %c0_12] : memref<1x16x256xbf16, #tpu.memory_space<vmem>>, vector<1x16x256xbf16>
    %16 = vector.shape_cast %15 : vector<1x16x256xbf16> to vector<16x256xbf16>
    %17 = vector.shape_cast %14 : vector<16x256xbf16> to vector<1x16x256xbf16>
    tpu.vector_store %arg5[%c0_10, %c0_11, %c0_12], %17 {strides = array<i32>} : memref<1x16x256xbf16, #tpu.memory_space<vmem>>, vector<1x16x256xbf16>,
    return
  }
  func.func @transform_0(%arg0: i32, %arg1: i32) -> (i32, i32, i32) {
    %c0_i32 = arith.constant 0 : i32
    %c0_i32_0 = arith.constant 0 : i32
    return %arg0, %arg1, %c0_i32 : i32, i32, i32
  }
  func.func @transform_1(%arg0: i32, %arg1: i32) -> (i32, i32, i32) {
    %c0_i32 = arith.constant 0 : i32
    %c0_i32_0 = arith.constant 0 : i32
    %c0_i32_1 = arith.constant 0 : i32
    return %arg0, %c0_i32, %c0_i32_0 : i32, i32, i32
  }
  func.func @transform_2(%arg0: i32, %arg1: i32) -> (i32, i32, i32) {
    %c0_i32 = arith.constant 0 : i32
    %c0_i32_0 = arith.constant 0 : i32
    %c0_i32_1 = arith.constant 0 : i32
    return %arg0, %c0_i32, %c0_i32_0 : i32, i32, i32
  }
  func.func @transform_3(%arg0: i32, %arg1: i32) -> (i32, i32, i32) {
    %c0_i32 = arith.constant 0 : i32
    %c0_i32_0 = arith.constant 0 : i32
    return %arg0, %arg1, %c0_i32 : i32, i32, i32
  }
}

module attributes {stable_mosaic.version = 11 : i64} {
  func.func @_bgemm_kernel(%arg0: i32, %arg1: i32, %arg2: memref<1x16x256xbf16, #tpu.memory_space<vmem>>, %arg3: memref<1x256x32xbf16, #tpu.memory_space<vmem>>, %arg4: memref<1x1x32xf32, #tpu.memory_space<vmem>>, %arg5: memref<1x16x32xbf16, #tpu.memory_space<vmem>>) attributes {dimension_semantics = [#tpu.dimension_semantics<parallel>, #tpu.dimension_semantics<parallel>], iteration_bounds = array<i64: 3, 1>, scalar_prefetch = 0 : i64, scratch_operands = 0 : i64, tpu.core_type = #tpu.core_type<tc>, window_params = [{transform_indices = @transform_0, window_bounds = array<i64: 1, 16, 256>}, {transform_indices = @transform_1, window_bounds = array<i64: 1, 256, 32>}, {transform_indices = @transform_2, window_bounds = array<i64: 1, 1, 32>}, {transform_indices = @transform_3, window_bounds = array<i64: 1, 16, 32>}]} {
    %c0 = arith.constant 0 : index
    %c0_0 = arith.constant 0 : index
    %c0_1 = arith.constant 0 : index
    %0 = vector.load %arg2[%c0, %c0_0, %c0_1] : memref<1x16x256xbf16, #tpu.memory_space<vmem>>, vector<1x16x256xbf16>
    %1 = vector.shape_cast %0 : vector<1x16x256xbf16> to vector<16x256xbf16>
    %c0_2 = arith.constant 0 : index
    %c0_3 = arith.constant 0 : index
    %c0_4 = arith.constant 0 : index
    %2 = vector.load %arg3[%c0_2, %c0_3, %c0_4] : memref<1x256x32xbf16, #tpu.memory_space<vmem>>, vector<1x256x32xbf16>
    %3 = vector.shape_cast %2 : vector<1x256x32xbf16> to vector<256x32xbf16>
    %cst = arith.constant dense<0.000000e+00> : vector<16x32xf32>
    %4 = tpu.matmul %1, %3, %cst {dimension_numbers = #tpu.dot_dimension_numbers<[1], [0], [0], [1], [0, 0, 1, 1], [], []>} : vector<16x256xbf16>, vector<256x32xbf16>, vector<16x32xf32> -> vector<16x32xf32>
    %c0_5 = arith.constant 0 : index
    %c0_6 = arith.constant 0 : index
    %c0_7 = arith.constant 0 : index
    %5 = vector.load %arg4[%c0_5, %c0_6, %c0_7] : memref<1x1x32xf32, #tpu.memory_space<vmem>>, vector<1x1x32xf32>
    %6 = vector.shape_cast %5 : vector<1x1x32xf32> to vector<1x32xf32>
    %7 = vector.broadcast %6 : vector<1x32xf32> to vector<16x32xf32>
    %8 = arith.addf %4, %7 : vector<16x32xf32>
    %cst_8 = arith.constant 0.000000e+00 : f32
    %9 = vector.broadcast %cst_8 : f32 to vector<16x32xf32>
    %10 = arith.cmpf oge, %8, %9 : vector<16x32xf32>
    %cst_9 = arith.constant 2.000000e-01 : f32
    %11 = vector.broadcast %cst_9 : f32 to vector<16x32xf32>
    %12 = arith.mulf %11, %8 : vector<16x32xf32>
    %13 = arith.select %10, %8, %12 : vector<16x32xi1>, vector<16x32xf32>
    %14 = arith.truncf %13 : vector<16x32xf32> to vector<16x32xbf16>
    %c0_10 = arith.constant 0 : index
    %c0_11 = arith.constant 0 : index
    %c0_12 = arith.constant 0 : index
    %15 = vector.load %arg5[%c0_10, %c0_11, %c0_12] : memref<1x16x32xbf16, #tpu.memory_space<vmem>>, vector<1x16x32xbf16>
    %16 = vector.shape_cast %15 : vector<1x16x32xbf16> to vector<16x32xbf16>
    %17 = vector.shape_cast %14 : vector<16x32xbf16> to vector<1x16x32xbf16>
    tpu.vector_store %arg5[%c0_10, %c0_11, %c0_12], %17 {strides = array<i32>} : memref<1x16x32xbf16, #tpu.memory_space<vmem>>, vector<1x16x32xbf16>,
    return
  }
  func.func @transform_0(%arg0: i32, %arg1: i32) -> (i32, i32, i32) {
    %c0_i32 = arith.constant 0 : i32
    %c0_i32_0 = arith.constant 0 : i32
    return %arg0, %arg1, %c0_i32 : i32, i32, i32
  }
  func.func @transform_1(%arg0: i32, %arg1: i32) -> (i32, i32, i32) {
    %c0_i32 = arith.constant 0 : i32
    %c0_i32_0 = arith.constant 0 : i32
    %c0_i32_1 = arith.constant 0 : i32
    return %arg0, %c0_i32, %c0_i32_0 : i32, i32, i32
  }
  func.func @transform_2(%arg0: i32, %arg1: i32) -> (i32, i32, i32) {
    %c0_i32 = arith.constant 0 : i32
    %c0_i32_0 = arith.constant 0 : i32
    %c0_i32_1 = arith.constant 0 : i32
    return %arg0, %c0_i32, %c0_i32_0 : i32, i32, i32
  }
  func.func @transform_3(%arg0: i32, %arg1: i32) -> (i32, i32, i32) {
    %c0_i32 = arith.constant 0 : i32
    %c0_i32_0 = arith.constant 0 : i32
    return %arg0, %arg1, %c0_i32 : i32, i32, i32
  }
}

module attributes {stable_mosaic.version = 11 : i64} {
  func.func @_mlp2_kernel(%arg0: i32, %arg1: memref<16x16xbf16, #tpu.memory_space<vmem>>, %arg2: memref<16x32xbf16, #tpu.memory_space<vmem>>, %arg3: memref<1x32xf32, #tpu.memory_space<vmem>>, %arg4: memref<32x32xbf16, #tpu.memory_space<vmem>>, %arg5: memref<1x32xf32, #tpu.memory_space<vmem>>, %arg6: memref<16x32xbf16, #tpu.memory_space<vmem>>) attributes {dimension_semantics = [#tpu.dimension_semantics<parallel>], iteration_bounds = array<i64: 1>, scalar_prefetch = 0 : i64, scratch_operands = 0 : i64, tpu.core_type = #tpu.core_type<tc>, window_params = [{transform_indices = @transform_0, window_bounds = array<i64: 16, 16>}, {pipeline_mode = #tpu.pipeline_mode<synchronous>, transform_indices = @transform_1, window_bounds = array<i64: 16, 32>}, {pipeline_mode = #tpu.pipeline_mode<synchronous>, transform_indices = @transform_2, window_bounds = array<i64: 1, 32>}, {pipeline_mode = #tpu.pipeline_mode<synchronous>, transform_indices = @transform_3, window_bounds = array<i64: 32, 32>}, {pipeline_mode = #tpu.pipeline_mode<synchronous>, transform_indices = @transform_4, window_bounds = array<i64: 1, 32>}, {transform_indices = @transform_5, window_bounds = array<i64: 16, 32>}]} {
    %c0 = arith.constant 0 : index
    %c0_0 = arith.constant 0 : index
    %0 = vector.load %arg1[%c0, %c0_0] : memref<16x16xbf16, #tpu.memory_space<vmem>>, vector<16x16xbf16>
    %c0_1 = arith.constant 0 : index
    %c0_2 = arith.constant 0 : index
    %1 = vector.load %arg2[%c0_1, %c0_2] : memref<16x32xbf16, #tpu.memory_space<vmem>>, vector<16x32xbf16>
    %cst = arith.constant dense<0.000000e+00> : vector<16x32xf32>
    %2 = tpu.matmul %0, %1, %cst {dimension_numbers = #tpu.dot_dimension_numbers<[1], [0], [0], [1], [0, 0, 1, 1], [], []>} : vector<16x16xbf16>, vector<16x32xbf16>, vector<16x32xf32> -> vector<16x32xf32>
    %c0_3 = arith.constant 0 : index
    %c0_4 = arith.constant 0 : index
    %3 = vector.load %arg3[%c0_3, %c0_4] : memref<1x32xf32, #tpu.memory_space<vmem>>, vector<1x32xf32>
    %4 = vector.broadcast %3 : vector<1x32xf32> to vector<16x32xf32>
    %5 = arith.addf %2, %4 : vector<16x32xf32>
    %cst_5 = arith.constant 0.000000e+00 : f32
    %6 = vector.broadcast %cst_5 : f32 to vector<16x32xf32>
    %7 = arith.cmpf oge, %5, %6 : vector<16x32xf32>
    %cst_6 = arith.constant 2.000000e-01 : f32
    %8 = vector.broadcast %cst_6 : f32 to vector<16x32xf32>
    %9 = arith.mulf %8, %5 : vector<16x32xf32>
    %10 = arith.select %7, %5, %9 : vector<16x32xi1>, vector<16x32xf32>
    %11 = arith.truncf %10 : vector<16x32xf32> to vector<16x32xbf16>
    %c0_7 = arith.constant 0 : index
    %c0_8 = arith.constant 0 : index
    %12 = vector.load %arg4[%c0_7, %c0_8] : memref<32x32xbf16, #tpu.memory_space<vmem>>, vector<32x32xbf16>
    %cst_9 = arith.constant dense<0.000000e+00> : vector<16x32xf32>
    %13 = tpu.matmul %11, %12, %cst_9 {dimension_numbers = #tpu.dot_dimension_numbers<[1], [0], [0], [1], [0, 0, 1, 1], [], []>} : vector<16x32xbf16>, vector<32x32xbf16>, vector<16x32xf32> -> vector<16x32xf32>
    %c0_10 = arith.constant 0 : index
    %c0_11 = arith.constant 0 : index
    %14 = vector.load %arg5[%c0_10, %c0_11] : memref<1x32xf32, #tpu.memory_space<vmem>>, vector<1x32xf32>
    %15 = vector.broadcast %14 : vector<1x32xf32> to vector<16x32xf32>
    %16 = arith.addf %13, %15 : vector<16x32xf32>
    %cst_12 = arith.constant 0.000000e+00 : f32
    %17 = vector.broadcast %cst_12 : f32 to vector<16x32xf32>
    %18 = arith.cmpf oge, %16, %17 : vector<16x32xf32>
    %cst_13 = arith.constant 2.000000e-01 : f32
    %19 = vector.broadcast %cst_13 : f32 to vector<16x32xf32>
    %20 = arith.mulf %19, %16 : vector<16x32xf32>
    %21 = arith.select %18, %16, %20 : vector<16x32xi1>, vector<16x32xf32>
    %22 = arith.truncf %21 : vector<16x32xf32> to vector<16x32xbf16>
    %c0_14 = arith.constant 0 : index
    %c0_15 = arith.constant 0 : index
    %23 = vector.load %arg6[%c0_14, %c0_15] : memref<16x32xbf16, #tpu.memory_space<vmem>>, vector<16x32xbf16>
    tpu.vector_store %arg6[%c0_14, %c0_15], %22 {strides = array<i32>} : memref<16x32xbf16, #tpu.memory_space<vmem>>, vector<16x32xbf16>,
    return
  }
  func.func @transform_0(%arg0: i32) -> (i32, i32) {
    %c0_i32 = arith.constant 0 : i32
    %c0_i32_0 = arith.constant 0 : i32
    return %arg0, %c0_i32 : i32, i32
  }
  func.func @transform_1(%arg0: i32) -> (i32, i32) {
    %c0_i32 = arith.constant 0 : i32
    %c0_i32_0 = arith.constant 0 : i32
    %c0_i32_1 = arith.constant 0 : i32
    return %c0_i32, %c0_i32_0 : i32, i32
  }
  func.func @transform_2(%arg0: i32) -> (i32, i32) {
    %c0_i32 = arith.constant 0 : i32
    %c0_i32_0 = arith.constant 0 : i32
    %c0_i32_1 = arith.constant 0 : i32
    return %c0_i32, %c0_i32_0 : i32, i32
  }
  func.func @transform_3(%arg0: i32) -> (i32, i32) {
    %c0_i32 = arith.constant 0 : i32
    %c0_i32_0 = arith.constant 0 : i32
    %c0_i32_1 = arith.constant 0 : i32
    return %c0_i32, %c0_i32_0 : i32, i32
  }
  func.func @transform_4(%arg0: i32) -> (i32, i32) {
    %c0_i32 = arith.constant 0 : i32
    %c0_i32_0 = arith.constant 0 : i32
    %c0_i32_1 = arith.constant 0 : i32
    return %c0_i32, %c0_i32_0 : i32, i32
  }
  func.func @transform_5(%arg0: i32) -> (i32, i32) {
    %c0_i32 = arith.constant 0 : i32
    %c0_i32_0 = arith.constant 0 : i32
    return %arg0, %c0_i32 : i32, i32
  }
}

module attributes {stable_mosaic.version = 11 : i64} {
  func.func @_fusion_decoder_kernel(%arg0: i32, %arg1: memref<16x128xbf16, #tpu.memory_space<vmem>>, %arg2: memref<128x64xbf16, #tpu.memory_space<vmem>>, %arg3: memref<1x64xf32, #tpu.memory_space<vmem>>, %arg4: memref<64x32xbf16, #tpu.memory_space<vmem>>, %arg5: memref<1x32xf32, #tpu.memory_space<vmem>>, %arg6: memref<32x32xbf16, #tpu.memory_space<vmem>>, %arg7: memref<1x32xf32, #tpu.memory_space<vmem>>, %arg8: memref<32x128xbf16, #tpu.memory_space<vmem>>, %arg9: memref<1x128xf32, #tpu.memory_space<vmem>>, %arg10: memref<16x128xf32, #tpu.memory_space<vmem>>) attributes {dimension_semantics = [#tpu.dimension_semantics<parallel>], iteration_bounds = array<i64: 1>, scalar_prefetch = 0 : i64, scratch_operands = 0 : i64, tpu.core_type = #tpu.core_type<tc>, window_params = [{transform_indices = @transform_0, window_bounds = array<i64: 16, 128>}, {pipeline_mode = #tpu.pipeline_mode<synchronous>, transform_indices = @transform_1, window_bounds = array<i64: 128, 64>}, {pipeline_mode = #tpu.pipeline_mode<synchronous>, transform_indices = @transform_2, window_bounds = array<i64: 1, 64>}, {pipeline_mode = #tpu.pipeline_mode<synchronous>, transform_indices = @transform_3, window_bounds = array<i64: 64, 32>}, {pipeline_mode = #tpu.pipeline_mode<synchronous>, transform_indices = @transform_4, window_bounds = array<i64: 1, 32>}, {pipeline_mode = #tpu.pipeline_mode<synchronous>, transform_indices = @transform_5, window_bounds = array<i64: 32, 32>}, {pipeline_mode = #tpu.pipeline_mode<synchronous>, transform_indices = @transform_6, window_bounds = array<i64: 1, 32>}, {pipeline_mode = #tpu.pipeline_mode<synchronous>, transform_indices = @transform_7, window_bounds = array<i64: 32, 128>}, {pipeline_mode = #tpu.pipeline_mode<synchronous>, transform_indices = @transform_8, window_bounds = array<i64: 1, 128>}, {transform_indices = @transform_9, window_bounds = array<i64: 16, 128>}]} {
    %c0 = arith.constant 0 : index
    %c0_0 = arith.constant 0 : index
    %0 = vector.load %arg1[%c0, %c0_0] : memref<16x128xbf16, #tpu.memory_space<vmem>>, vector<16x128xbf16>
    %c0_1 = arith.constant 0 : index
    %c0_2 = arith.constant 0 : index
    %1 = vector.load %arg2[%c0_1, %c0_2] : memref<128x64xbf16, #tpu.memory_space<vmem>>, vector<128x64xbf16>
    %cst = arith.constant dense<0.000000e+00> : vector<16x64xf32>
    %2 = tpu.matmul %0, %1, %cst {dimension_numbers = #tpu.dot_dimension_numbers<[1], [0], [0], [1], [0, 0, 1, 1], [], []>} : vector<16x128xbf16>, vector<128x64xbf16>, vector<16x64xf32> -> vector<16x64xf32>
    %c0_3 = arith.constant 0 : index
    %c0_4 = arith.constant 0 : index
    %3 = vector.load %arg3[%c0_3, %c0_4] : memref<1x64xf32, #tpu.memory_space<vmem>>, vector<1x64xf32>
    %4 = vector.broadcast %3 : vector<1x64xf32> to vector<16x64xf32>
    %5 = arith.addf %2, %4 : vector<16x64xf32>
    %cst_5 = arith.constant 0.000000e+00 : f32
    %6 = vector.broadcast %cst_5 : f32 to vector<16x64xf32>
    %7 = arith.cmpf oge, %5, %6 : vector<16x64xf32>
    %cst_6 = arith.constant 2.000000e-01 : f32
    %8 = vector.broadcast %cst_6 : f32 to vector<16x64xf32>
    %9 = arith.mulf %8, %5 : vector<16x64xf32>
    %10 = arith.select %7, %5, %9 : vector<16x64xi1>, vector<16x64xf32>
    %11 = arith.truncf %10 : vector<16x64xf32> to vector<16x64xbf16>
    %c0_7 = arith.constant 0 : index
    %c0_8 = arith.constant 0 : index
    %12 = vector.load %arg4[%c0_7, %c0_8] : memref<64x32xbf16, #tpu.memory_space<vmem>>, vector<64x32xbf16>
    %cst_9 = arith.constant dense<0.000000e+00> : vector<16x32xf32>
    %13 = tpu.matmul %11, %12, %cst_9 {dimension_numbers = #tpu.dot_dimension_numbers<[1], [0], [0], [1], [0, 0, 1, 1], [], []>} : vector<16x64xbf16>, vector<64x32xbf16>, vector<16x32xf32> -> vector<16x32xf32>
    %c0_10 = arith.constant 0 : index
    %c0_11 = arith.constant 0 : index
    %14 = vector.load %arg5[%c0_10, %c0_11] : memref<1x32xf32, #tpu.memory_space<vmem>>, vector<1x32xf32>
    %15 = vector.broadcast %14 : vector<1x32xf32> to vector<16x32xf32>
    %16 = arith.addf %13, %15 : vector<16x32xf32>
    %cst_12 = arith.constant 0.000000e+00 : f32
    %17 = vector.broadcast %cst_12 : f32 to vector<16x32xf32>
    %18 = arith.cmpf oge, %16, %17 : vector<16x32xf32>
    %cst_13 = arith.constant 2.000000e-01 : f32
    %19 = vector.broadcast %cst_13 : f32 to vector<16x32xf32>
    %20 = arith.mulf %19, %16 : vector<16x32xf32>
    %21 = arith.select %18, %16, %20 : vector<16x32xi1>, vector<16x32xf32>
    %22 = arith.truncf %21 : vector<16x32xf32> to vector<16x32xbf16>
    %c0_14 = arith.constant 0 : index
    %c0_15 = arith.constant 0 : index
    %23 = vector.load %arg6[%c0_14, %c0_15] : memref<32x32xbf16, #tpu.memory_space<vmem>>, vector<32x32xbf16>
    %cst_16 = arith.constant dense<0.000000e+00> : vector<16x32xf32>
    %24 = tpu.matmul %22, %23, %cst_16 {dimension_numbers = #tpu.dot_dimension_numbers<[1], [0], [0], [1], [0, 0, 1, 1], [], []>} : vector<16x32xbf16>, vector<32x32xbf16>, vector<16x32xf32> -> vector<16x32xf32>
    %c0_17 = arith.constant 0 : index
    %c0_18 = arith.constant 0 : index
    %25 = vector.load %arg7[%c0_17, %c0_18] : memref<1x32xf32, #tpu.memory_space<vmem>>, vector<1x32xf32>
    %26 = vector.broadcast %25 : vector<1x32xf32> to vector<16x32xf32>
    %27 = arith.addf %24, %26 : vector<16x32xf32>
    %cst_19 = arith.constant 0.000000e+00 : f32
    %28 = vector.broadcast %cst_19 : f32 to vector<16x32xf32>
    %29 = arith.cmpf oge, %27, %28 : vector<16x32xf32>
    %cst_20 = arith.constant 2.000000e-01 : f32
    %30 = vector.broadcast %cst_20 : f32 to vector<16x32xf32>
    %31 = arith.mulf %30, %27 : vector<16x32xf32>
    %32 = arith.select %29, %27, %31 : vector<16x32xi1>, vector<16x32xf32>
    %33 = arith.truncf %32 : vector<16x32xf32> to vector<16x32xbf16>
    %c0_21 = arith.constant 0 : index
    %c0_22 = arith.constant 0 : index
    %34 = vector.load %arg8[%c0_21, %c0_22] : memref<32x128xbf16, #tpu.memory_space<vmem>>, vector<32x128xbf16>
    %cst_23 = arith.constant dense<0.000000e+00> : vector<16x128xf32>
    %35 = tpu.matmul %33, %34, %cst_23 {dimension_numbers = #tpu.dot_dimension_numbers<[1], [0], [0], [1], [0, 0, 1, 1], [], []>} : vector<16x32xbf16>, vector<32x128xbf16>, vector<16x128xf32> -> vector<16x128xf32>
    %c0_24 = arith.constant 0 : index
    %c0_25 = arith.constant 0 : index
    %36 = vector.load %arg9[%c0_24, %c0_25] : memref<1x128xf32, #tpu.memory_space<vmem>>, vector<1x128xf32>
    %37 = vector.broadcast %36 : vector<1x128xf32> to vector<16x128xf32>
    %38 = arith.addf %35, %37 : vector<16x128xf32>
    %c0_26 = arith.constant 0 : index
    %c0_27 = arith.constant 0 : index
    %39 = vector.load %arg10[%c0_26, %c0_27] : memref<16x128xf32, #tpu.memory_space<vmem>>, vector<16x128xf32>
    tpu.vector_store %arg10[%c0_26, %c0_27], %38 {strides = array<i32>} : memref<16x128xf32, #tpu.memory_space<vmem>>, vector<16x128xf32>,
    return
  }
  func.func @transform_0(%arg0: i32) -> (i32, i32) {
    %c0_i32 = arith.constant 0 : i32
    %c0_i32_0 = arith.constant 0 : i32
    return %arg0, %c0_i32 : i32, i32
  }
  func.func @transform_1(%arg0: i32) -> (i32, i32) {
    %c0_i32 = arith.constant 0 : i32
    %c0_i32_0 = arith.constant 0 : i32
    %c0_i32_1 = arith.constant 0 : i32
    return %c0_i32, %c0_i32_0 : i32, i32
  }
  func.func @transform_2(%arg0: i32) -> (i32, i32) {
    %c0_i32 = arith.constant 0 : i32
    %c0_i32_0 = arith.constant 0 : i32
    %c0_i32_1 = arith.constant 0 : i32
    return %c0_i32, %c0_i32_0 : i32, i32
  }
  func.func @transform_3(%arg0: i32) -> (i32, i32) {
    %c0_i32 = arith.constant 0 : i32
    %c0_i32_0 = arith.constant 0 : i32
    %c0_i32_1 = arith.constant 0 : i32
    return %c0_i32, %c0_i32_0 : i32, i32
  }
  func.func @transform_4(%arg0: i32) -> (i32, i32) {
    %c0_i32 = arith.constant 0 : i32
    %c0_i32_0 = arith.constant 0 : i32
    %c0_i32_1 = arith.constant 0 : i32
    return %c0_i32, %c0_i32_0 : i32, i32
  }
  func.func @transform_5(%arg0: i32) -> (i32, i32) {
    %c0_i32 = arith.constant 0 : i32
    %c0_i32_0 = arith.constant 0 : i32
    %c0_i32_1 = arith.constant 0 : i32
    return %c0_i32, %c0_i32_0 : i32, i32
  }
  func.func @transform_6(%arg0: i32) -> (i32, i32) {
    %c0_i32 = arith.constant 0 : i32
    %c0_i32_0 = arith.constant 0 : i32
    %c0_i32_1 = arith.constant 0 : i32
    return %c0_i32, %c0_i32_0 : i32, i32
  }
  func.func @transform_7(%arg0: i32) -> (i32, i32) {
    %c0_i32 = arith.constant 0 : i32
    %c0_i32_0 = arith.constant 0 : i32
    %c0_i32_1 = arith.constant 0 : i32
    return %c0_i32, %c0_i32_0 : i32, i32
  }
  func.func @transform_8(%arg0: i32) -> (i32, i32) {
    %c0_i32 = arith.constant 0 : i32
    %c0_i32_0 = arith.constant 0 : i32
    %c0_i32_1 = arith.constant 0 : i32
    return %c0_i32, %c0_i32_0 : i32, i32
  }
  func.func @transform_9(%arg0: i32) -> (i32, i32) {
    %c0_i32 = arith.constant 0 : i32
    %c0_i32_0 = arith.constant 0 : i32
    return %arg0, %c0_i32 : i32, i32
  }
}

</mosaic_0001>

<llo_original>
// kernel: forward.9
$region0: #{forward.9}
  #allocation0 [shape = 'u32[]', space=smem, size = 0x4, offset = 0x4, fixed_abs, tag = 'smem constant byte address 0x4 - core index']
  #allocation1 [shape = 'u32[144,128]{1,0:T(1,128)}', space=vmem, size = 0x12000, scoped, tag = 'internal scratch']
  %s0 = inlined_call_operand.vmem [shape: bf16[3,512,27], index: 0, kind: input, shape index: {}]
  %s1 = inlined_call_operand.vmem [shape: bf16[3,27,16], index: 1, kind: input, shape index: {}]
  %s2 = inlined_call_operand.vmem [shape: f32[3,1,16], index: 2, kind: input, shape index: {}]
  %s3 = inlined_call_operand.vmem [shape: bf16[3,512,16], index: 3, kind: output, shape index: {}]
  %s4 = sld [smem:[#allocation0]]
  $region45: #{forward.9} parent=0
    _
  %s6 = ssub.s32 1, %s4
  %s7 = scalar_select 0, %s6, %s4
  loop: start=0, step=1, limit=5
  $region2: #{forward.9} parent=0 // loop_pre_header
    _
  $region3: #{forward.9} parent=0 // loop_header
    %s9 = sphi 0, %s13
    %p10 = scmp.ge.s32.totalorder %s9, 5
    %s16 = sphi 0, %s28
    %s17 = sphi 0, %s24
    %s18 = sphi 0, %s16
    %s19 = sphi 0, %s17
    %s20 = sphi 0, %s18
    %s21 = sphi 0, %s19
    %s33 = sphi 0, %s35
    %s36 = sphi 0, %s33
    %s37 = sphi 0, %s36
    %s53 = sphi 0, %s37
    %s59 = sphi 0, %s61
    %s62 = sphi 0, %s59
    %s63 = sphi 0, %s62
    %s79 = sphi 0, %s63
    %s85 = sphi 0, %s87
    %s88 = sphi 0, %s85
    %s89 = sphi 0, %s88
    %s105 = sphi 0, %s89
    %s113 = sphi 0, %s115
    %s116 = sphi 0, %s113
    %s117 = sphi 0, %s116
    %s133 = sphi 0, %s117
  $region4: #{forward.9} parent=0 // loop_header_branch
    %12 = sbr.rel (%p10) target = $region8
  $region5: #{forward.9} parent=0 // loop_body
    %s14 = ssub.s32 %s9, 1
    %s15 = ssub.s32 %s9, 2
    %s22 = sadd.s32 1, %s17
    %p23 = scmp.ge.s32.totalorder %s22, 1
    %s24 = scalar_select %p23, 0, %s22
    %s25 = sadd.s32 1, %s16
    %s26 = scalar_select %p23, %s25, %s16
    %p27 = scmp.ge.s32.totalorder %s26, 3
    %s28 = scalar_select %p27, 0, %s26
    %s29 = ssub.s32 %s16, %s28
    %s30 = ssub.s32 %s17, %s24
    %s31 = sor.u32 %s29, %s30
    %p32 = scmp.eq.s32.totalorder %s31, 0
    %s34 = sadd.s32 %s33, 1
    %s35 = scalar_select %p32, %s33, %s34
    %p38 = pneg %p32
    %p39 = scmp.eq.s32.totalorder %s9, 2
    %p40 = por %p38, %p39
    %p41 = scmp.ne.s32.totalorder %s33, %s36
    %p42 = scmp.eq.s32.totalorder %s9, 0
    %p43 = por %p41, %p42
    %p44 = scmp.ne.s32.totalorder %s33, %s36
    %p45 = scmp.eq.s32.totalorder %s14, 2
    %p46 = por %p44, %p45
    %p47 = scmp.ne.s32.totalorder %s36, %s37
    %p48 = scmp.eq.s32.totalorder %s14, 0
    %p49 = por %p47, %p48
    %p50 = scmp.ne.s32.totalorder %s36, %s37
    %p51 = scmp.eq.s32.totalorder %s15, 2
    %p52 = por %p50, %p51
    %p54 = scmp.ne.s32.totalorder %s37, %s53
    %p55 = scmp.eq.s32.totalorder %s15, 0
    %p56 = por %p54, %p55
    %s57 = ssub.s32 %s16, %s28
    %p58 = scmp.eq.s32.totalorder %s57, 0
    %s60 = sadd.s32 %s59, 1
    %s61 = scalar_select %p58, %s59, %s60
    %p64 = pneg %p58
    %p65 = scmp.eq.s32.totalorder %s9, 2
    %p66 = por %p64, %p65
    %p67 = scmp.ne.s32.totalorder %s59, %s62
    %p68 = scmp.eq.s32.totalorder %s9, 0
    %p69 = por %p67, %p68
    %p70 = scmp.ne.s32.totalorder %s59, %s62
    %p71 = scmp.eq.s32.totalorder %s14, 2
    %p72 = por %p70, %p71
    %p73 = scmp.ne.s32.totalorder %s62, %s63
    %p74 = scmp.eq.s32.totalorder %s14, 0
    %p75 = por %p73, %p74
    %p76 = scmp.ne.s32.totalorder %s62, %s63
    %p77 = scmp.eq.s32.totalorder %s15, 2
    %p78 = por %p76, %p77
    %p80 = scmp.ne.s32.totalorder %s63, %s79
    %p81 = scmp.eq.s32.totalorder %s15, 0
    %p82 = por %p80, %p81
    %s83 = ssub.s32 %s16, %s28
    %p84 = scmp.eq.s32.totalorder %s83, 0
    %s86 = sadd.s32 %s85, 1
    %s87 = scalar_select %p84, %s85, %s86
    %p90 = pneg %p84
    %p91 = scmp.eq.s32.totalorder %s9, 2
    %p92 = por %p90, %p91
    %p93 = scmp.ne.s32.totalorder %s85, %s88
    %p94 = scmp.eq.s32.totalorder %s9, 0
    %p95 = por %p93, %p94
    %p96 = scmp.ne.s32.totalorder %s85, %s88
    %p97 = scmp.eq.s32.totalorder %s14, 2
    %p98 = por %p96, %p97
    %p99 = scmp.ne.s32.totalorder %s88, %s89
    %p100 = scmp.eq.s32.totalorder %s14, 0
    %p101 = por %p99, %p100
    %p102 = scmp.ne.s32.totalorder %s88, %s89
    %p103 = scmp.eq.s32.totalorder %s15, 2
    %p104 = por %p102, %p103
    %p106 = scmp.ne.s32.totalorder %s89, %s105
    %p107 = scmp.eq.s32.totalorder %s15, 0
    %p108 = por %p106, %p107
    %s109 = ssub.s32 %s16, %s28
    %s110 = ssub.s32 %s17, %s24
    %s111 = sor.u32 %s109, %s110
    %p112 = scmp.eq.s32.totalorder %s111, 0
    %s114 = sadd.s32 %s113, 1
    %s115 = scalar_select %p112, %s113, %s114
    %p118 = pneg %p112
    %p119 = scmp.eq.s32.totalorder %s9, 2
    %p120 = por %p118, %p119
    %p121 = scmp.ne.s32.totalorder %s113, %s116
    %p122 = scmp.eq.s32.totalorder %s9, 0
    %p123 = por %p121, %p122
    %p124 = scmp.ne.s32.totalorder %s113, %s116
    %p125 = scmp.eq.s32.totalorder %s14, 2
    %p126 = por %p124, %p125
    %p127 = scmp.ne.s32.totalorder %s116, %s117
    %p128 = scmp.eq.s32.totalorder %s14, 0
    %p129 = por %p127, %p128
    %p130 = scmp.ne.s32.totalorder %s116, %s117
    %p131 = scmp.eq.s32.totalorder %s15, 2
    %p132 = por %p130, %p131
    %p134 = scmp.ne.s32.totalorder %s117, %s133
    %p135 = scmp.eq.s32.totalorder %s15, 0
    %p136 = por %p134, %p135
    %p137 = scmp.le.s32.totalorder 1, %s9
    %p138 = scmp.lt.s32.totalorder %s9, 4
    %p139 = pnand %p137, %p138
    %p140 = pneg %p139
    // Predicated region
    $region9: #{forward.9} parent=5 // pred_check
      _
    $region10: #{forward.9} parent=5 // pred_check_branch
      %142 = sbr.rel (%p139) target = $region12
    $region11: #{forward.9} parent=5 // pred_region
      %s143 = ssub.s32 %s9, 1
    $region12: #{forward.9} parent=5 // pred_fallthru
      _
    %p144 = scmp.lt.s32.totalorder %s9, 3
    // Predicated region
    $region13: #{forward.9} parent=5 // pred_check
      %p145 = pneg %p144
    $region14: #{forward.9} parent=5 // pred_check_branch
      %147 = sbr.rel (%p145) target = $region16
    $region15: #{forward.9} parent=5 // pred_region
      // Predicated region
      $region17: #{forward.9} parent=15 // pred_check
        %p148 = pneg %p43
      $region18: #{forward.9} parent=15 // pred_check_branch
        %150 = sbr.rel (%p148) target = $region20
      $region19: #{forward.9} parent=15 // pred_region
        %s151 = smul.u32 64, %s17
        %p152 = scmp.lt.s32.totalorder %s16, 2
        %s153 = scalar_select %p152, %s16, 2
        %p154 = scmp.lt.s32.totalorder %s151, 63
        %s155 = scalar_select %p154, %s151, 63
        %s156 = smul.addr %s153, 64
        %s157 = sadd.s32 %s155, %s156
        %s158 = smul.addr %s157, 4
        %s159 = scalar_lea.vmem %s0, %s158
        %s160 = smul.u32 64, %s17
      $region20: #{forward.9} parent=15 // pred_fallthru
        _
      // Predicated region
      $region21: #{forward.9} parent=15 // pred_check
        %p161 = pneg %p69
      $region22: #{forward.9} parent=15 // pred_check_branch
        %163 = sbr.rel (%p161) target = $region24
      $region23: #{forward.9} parent=15 // pred_region
        %p164 = scmp.lt.s32.totalorder %s16, 2
        %s165 = scalar_select %p164, %s16, 2
        %s166 = smul.addr %s165, 4
        %s167 = smul.addr %s166, 4
        %s168 = scalar_lea.vmem %s1, %s167
      $region24: #{forward.9} parent=15 // pred_fallthru
        _
      // Predicated region
      $region25: #{forward.9} parent=15 // pred_check
        %p169 = pneg %p95
      $region26: #{forward.9} parent=15 // pred_check_branch
        %171 = sbr.rel (%p169) target = $region28
      $region27: #{forward.9} parent=15 // pred_region
        %p172 = scmp.lt.s32.totalorder %s16, 2
        %s173 = scalar_select %p172, %s16, 2
        %s174 = scalar_lea.vmem %s2, %s173
      $region28: #{forward.9} parent=15 // pred_fallthru
        _
    $region16: #{forward.9} parent=5 // pred_fallthru
      _
    %p175 = scmp.le.s32.totalorder 1, %s9
    %p176 = scmp.lt.s32.totalorder %s9, 4
    %p177 = pnand %p175, %p176
    %p178 = pneg %p177
    // Predicated region
    $region29: #{forward.9} parent=5 // pred_check
      _
    $region30: #{forward.9} parent=5 // pred_check_branch
      %180 = sbr.rel (%p177) target = $region32
    $region31: #{forward.9} parent=5 // pred_region
      %s181 = ssub.s32 %s9, 1
      %s182 = smul.u32 64, %s19
      %p183 = scmp.lt.s32.totalorder %s18, 2
      %s184 = scalar_select %p183, %s18, 2
      %p185 = scmp.lt.s32.totalorder %s182, 63
      %s186 = scalar_select %p185, %s182, 63
      %s187 = smul.addr %s184, 64
      %s188 = sadd.s32 %s186, %s187
      %s189 = smul.addr %s188, 4
      %s190 = scalar_lea.vmem %s0, %s189
      %p191 = pneg %p49
      %p192 = pneg %p46
      %p193 = scmp.lt.s32.totalorder %s18, 2
      %s194 = scalar_select %p193, %s18, 2
      %s195 = smul.addr %s194, 4
      %s196 = smul.addr %s195, 4
      %s197 = scalar_lea.vmem %s1, %s196
      %p198 = pneg %p75
      %p199 = pneg %p72
      %p200 = scmp.lt.s32.totalorder %s18, 2
      %s201 = scalar_select %p200, %s18, 2
      %s202 = scalar_lea.vmem %s2, %s201
      %p203 = pneg %p101
      %p204 = pneg %p98
      %p205 = pneg %p129
      %p206 = pneg %p126
      %s207 = smul.u32 64, %s19
      %p208 = scmp.lt.s32.totalorder %s18, 2
      %s209 = scalar_select %p208, %s18, 2
      %p210 = scmp.lt.s32.totalorder %s207, 63
      %s211 = scalar_select %p210, %s207, 63
      %s212 = smul.addr %s209, 64
      %s213 = sadd.s32 %s211, %s212
      %s214 = smul.addr %s213, 4
      %s215 = scalar_lea.vmem %s3, %s214
      %s216 = smul.u32 64, %s19
      %p217 = scmp.lt.s32.totalorder %s18, 2
      %s218 = scalar_select %p217, %s18, 2
      %p219 = scmp.lt.s32.totalorder %s216, 63
      %s220 = scalar_select %p219, %s216, 63
      %s221 = smul.addr %s218, 64
      %s222 = sadd.s32 %s220, %s221
      %s223 = smul.addr %s222, 4
      %s224 = scalar_lea.vmem %s0, %s223
      %s225 = smul.u32 64, %s19
      %p226 = scmp.lt.s32.totalorder %s18, 2
      %s227 = scalar_select %p226, %s18, 2
      %s228 = smul.addr %s227, 4
      %s229 = smul.addr %s228, 4
      %s230 = scalar_lea.vmem %s1, %s229
      %p231 = scmp.lt.s32.totalorder %s18, 2
      %s232 = scalar_select %p231, %s18, 2
      %s233 = scalar_lea.vmem %s2, %s232
      %s234 = smul.u32 64, %s19
      %p235 = scmp.lt.s32.totalorder %s18, 2
      %s236 = scalar_select %p235, %s18, 2
      %p237 = scmp.lt.s32.totalorder %s234, 63
      %s238 = scalar_select %p237, %s234, 63
      %s239 = smul.addr %s236, 64
      %s240 = sadd.s32 %s238, %s239
      %s241 = smul.addr %s240, 4
      %s242 = scalar_lea.vmem %s3, %s241
      %s243 = smul.u32 64, %s19
      %v245 = vld [vmem:[%s224] sm:$0xf]
      %v246 = vld [vmem:[%s224 + $0x4] sm:$0xf]
      %v247 = vld [vmem:[%s224 + $0x8] sm:$0xf]
      %v248 = vld [vmem:[%s224 + $0xc] sm:$0xf]
      %v249 = vld [vmem:[%s224 + $0x10] sm:$0xf]
      %v250 = vld [vmem:[%s224 + $0x14] sm:$0xf]
      %v251 = vld [vmem:[%s224 + $0x18] sm:$0xf]
      %v252 = vld [vmem:[%s224 + $0x1c] sm:$0xf]
      %v253 = vld [vmem:[%s224 + $0x20] sm:$0xf]
      %v254 = vld [vmem:[%s224 + $0x24] sm:$0xf]
      %v255 = vld [vmem:[%s224 + $0x28] sm:$0xf]
      %v256 = vld [vmem:[%s224 + $0x2c] sm:$0xf]
      %v257 = vld [vmem:[%s224 + $0x30] sm:$0xf]
      %v258 = vld [vmem:[%s224 + $0x34] sm:$0xf]
      %v259 = vld [vmem:[%s224 + $0x38] sm:$0xf]
      %v260 = vld [vmem:[%s224 + $0x3c] sm:$0xf]
      %v261 = vld [vmem:[%s224 + $0x40] sm:$0xf]
      %v262 = vld [vmem:[%s224 + $0x44] sm:$0xf]
      %v263 = vld [vmem:[%s224 + $0x48] sm:$0xf]
      %v264 = vld [vmem:[%s224 + $0x4c] sm:$0xf]
      %v265 = vld [vmem:[%s224 + $0x50] sm:$0xf]
      %v266 = vld [vmem:[%s224 + $0x54] sm:$0xf]
      %v267 = vld [vmem:[%s224 + $0x58] sm:$0xf]
      %v268 = vld [vmem:[%s224 + $0x5c] sm:$0xf]
      %v269 = vld [vmem:[%s224 + $0x60] sm:$0xf]
      %v270 = vld [vmem:[%s224 + $0x64] sm:$0xf]
      %v271 = vld [vmem:[%s224 + $0x68] sm:$0xf]
      %v272 = vld [vmem:[%s224 + $0x6c] sm:$0xf]
      %v273 = vld [vmem:[%s224 + $0x70] sm:$0xf]
      %v274 = vld [vmem:[%s224 + $0x74] sm:$0xf]
      %v275 = vld [vmem:[%s224 + $0x78] sm:$0xf]
      %v276 = vld [vmem:[%s224 + $0x7c] sm:$0xf]
      %v277 = vld [vmem:[%s224 + $0x80] sm:$0xf]
      %v278 = vld [vmem:[%s224 + $0x84] sm:$0xf]
      %v279 = vld [vmem:[%s224 + $0x88] sm:$0xf]
      %v280 = vld [vmem:[%s224 + $0x8c] sm:$0xf]
      %v281 = vld [vmem:[%s224 + $0x90] sm:$0xf]
      %v282 = vld [vmem:[%s224 + $0x94] sm:$0xf]
      %v283 = vld [vmem:[%s224 + $0x98] sm:$0xf]
      %v284 = vld [vmem:[%s224 + $0x9c] sm:$0xf]
      %v285 = vld [vmem:[%s224 + $0xa0] sm:$0xf]
      %v286 = vld [vmem:[%s224 + $0xa4] sm:$0xf]
      %v287 = vld [vmem:[%s224 + $0xa8] sm:$0xf]
      %v288 = vld [vmem:[%s224 + $0xac] sm:$0xf]
      %v289 = vld [vmem:[%s224 + $0xb0] sm:$0xf]
      %v290 = vld [vmem:[%s224 + $0xb4] sm:$0xf]
      %v291 = vld [vmem:[%s224 + $0xb8] sm:$0xf]
      %v292 = vld [vmem:[%s224 + $0xbc] sm:$0xf]
      %v293 = vld [vmem:[%s224 + $0xc0] sm:$0xf]
      %v294 = vld [vmem:[%s224 + $0xc4] sm:$0xf]
      %v295 = vld [vmem:[%s224 + $0xc8] sm:$0xf]
      %v296 = vld [vmem:[%s224 + $0xcc] sm:$0xf]
      %v297 = vld [vmem:[%s224 + $0xd0] sm:$0xf]
      %v298 = vld [vmem:[%s224 + $0xd4] sm:$0xf]
      %v299 = vld [vmem:[%s224 + $0xd8] sm:$0xf]
      %v300 = vld [vmem:[%s224 + $0xdc] sm:$0xf]
      %v301 = vld [vmem:[%s224 + $0xe0] sm:$0xf]
      %v302 = vld [vmem:[%s224 + $0xe4] sm:$0xf]
      %v303 = vld [vmem:[%s224 + $0xe8] sm:$0xf]
      %v304 = vld [vmem:[%s224 + $0xec] sm:$0xf]
      %v305 = vld [vmem:[%s224 + $0xf0] sm:$0xf]
      %v306 = vld [vmem:[%s224 + $0xf4] sm:$0xf]
      %v307 = vld [vmem:[%s224 + $0xf8] sm:$0xf]
      %v308 = vld [vmem:[%s224 + $0xfc] sm:$0xf]
      %v309 = vld [vmem:[%s230] sm:$0xf]
      %v310 = vld [vmem:[%s230 + $0x4] sm:$0xf]
      %v311 = vld [vmem:[%s230 + $0x8] sm:$0xf]
      %v312 = vld [vmem:[%s230 + $0xc] sm:$0x3]
      %v313 = vld [vmem:[%s233] sm:$0x1]
      %v315 = vlaneseq
      %v316 = vshrl.u32 %v315, 7
      %v317 = vsub.s32 0, %v316
      %v318 = vrot.slane %v313, %v317
      %v384 = vunpack.c.l.b16 %v245
      %v385 = vunpack.c.l.b16 %v246
      %v386 = vunpack.c.l.b16 %v247
      %v387 = vunpack.c.l.b16 %v248
      %v388 = vunpack.c.l.b16 %v249
      %v389 = vunpack.c.l.b16 %v250
      %v390 = vunpack.c.l.b16 %v251
      %v391 = vunpack.c.l.b16 %v252
      %v392 = vunpack.c.l.b16 %v253
      %v393 = vunpack.c.l.b16 %v254
      %v394 = vunpack.c.l.b16 %v255
      %v395 = vunpack.c.l.b16 %v256
      %v396 = vunpack.c.l.b16 %v257
      %v397 = vunpack.c.l.b16 %v258
      %v398 = vunpack.c.l.b16 %v259
      %v399 = vunpack.c.l.b16 %v260
      %v400 = vunpack.c.l.b16 %v261
      %v401 = vunpack.c.l.b16 %v262
      %v402 = vunpack.c.l.b16 %v263
      %v403 = vunpack.c.l.b16 %v264
      %v404 = vunpack.c.l.b16 %v265
      %v405 = vunpack.c.l.b16 %v266
      %v406 = vunpack.c.l.b16 %v267
      %v407 = vunpack.c.l.b16 %v268
      %v408 = vunpack.c.l.b16 %v269
      %v409 = vunpack.c.l.b16 %v270
      %v410 = vunpack.c.l.b16 %v271
      %v411 = vunpack.c.l.b16 %v272
      %v412 = vunpack.c.l.b16 %v273
      %v413 = vunpack.c.l.b16 %v274
      %v414 = vunpack.c.l.b16 %v275
      %v415 = vunpack.c.l.b16 %v276
      %v416 = vunpack.c.l.b16 %v277
      %v417 = vunpack.c.l.b16 %v278
      %v418 = vunpack.c.l.b16 %v279
      %v419 = vunpack.c.l.b16 %v280
      %v420 = vunpack.c.l.b16 %v281
      %v421 = vunpack.c.l.b16 %v282
      %v422 = vunpack.c.l.b16 %v283
      %v423 = vunpack.c.l.b16 %v284
      %v424 = vunpack.c.l.b16 %v285
      %v425 = vunpack.c.l.b16 %v286
      %v426 = vunpack.c.l.b16 %v287
      %v427 = vunpack.c.l.b16 %v288
      %v428 = vunpack.c.l.b16 %v289
      %v429 = vunpack.c.l.b16 %v290
      %v430 = vunpack.c.l.b16 %v291
      %v431 = vunpack.c.l.b16 %v292
      %v432 = vunpack.c.l.b16 %v293
      %v433 = vunpack.c.l.b16 %v294
      %v434 = vunpack.c.l.b16 %v295
      %v435 = vunpack.c.l.b16 %v296
      %v436 = vunpack.c.l.b16 %v297
      %v437 = vunpack.c.l.b16 %v298
      %v438 = vunpack.c.l.b16 %v299
      %v439 = vunpack.c.l.b16 %v300
      %v440 = vunpack.c.l.b16 %v301
      %v441 = vunpack.c.l.b16 %v302
      %v442 = vunpack.c.l.b16 %v303
      %v443 = vunpack.c.l.b16 %v304
      %v444 = vunpack.c.l.b16 %v305
      %v445 = vunpack.c.l.b16 %v306
      %v446 = vunpack.c.l.b16 %v307
      %v447 = vunpack.c.l.b16 %v308
      %v448 = vpack.c.b16 %v385, %v384
      %v449 = vpack.c.b16 %v387, %v386
      %v450 = vpack.c.b16 %v389, %v388
      %v451 = vpack.c.b16 %v391, %v390
      %v452 = vpack.c.b16 %v393, %v392
      %v453 = vpack.c.b16 %v395, %v394
      %v454 = vpack.c.b16 %v397, %v396
      %v455 = vpack.c.b16 %v399, %v398
      %v456 = vpack.c.b16 %v401, %v400
      %v457 = vpack.c.b16 %v403, %v402
      %v458 = vpack.c.b16 %v405, %v404
      %v459 = vpack.c.b16 %v407, %v406
      %v460 = vpack.c.b16 %v409, %v408
      %v461 = vpack.c.b16 %v411, %v410
      %v462 = vpack.c.b16 %v413, %v412
      %v463 = vpack.c.b16 %v415, %v414
      %v464 = vpack.c.b16 %v417, %v416
      %v465 = vpack.c.b16 %v419, %v418
      %v466 = vpack.c.b16 %v421, %v420
      %v467 = vpack.c.b16 %v423, %v422
      %v468 = vpack.c.b16 %v425, %v424
      %v469 = vpack.c.b16 %v427, %v426
      %v470 = vpack.c.b16 %v429, %v428
      %v471 = vpack.c.b16 %v431, %v430
      %v472 = vpack.c.b16 %v433, %v432
      %v473 = vpack.c.b16 %v435, %v434
      %v474 = vpack.c.b16 %v437, %v436
      %v475 = vpack.c.b16 %v439, %v438
      %v476 = vpack.c.b16 %v441, %v440
      %v477 = vpack.c.b16 %v443, %v442
      %v478 = vpack.c.b16 %v445, %v444
      %v479 = vpack.c.b16 %v447, %v446
      %v484 = vunpack.c.l.b16 %v309
      %v485 = vunpack.c.l.b16 %v310
      %v486 = vunpack.c.l.b16 %v311
      %v487 = vunpack.c.l.b16 %v312
      %v488 = vpack.c.b16 %v485, %v484
      %v489 = vpack.c.b16 %v487, %v486
      %vm491 = vcmask 220160
      %v493 = vsel %vm491, %v448, 0
      %v496 = vsel %vm491, %v449, 0
      %v499 = vsel %vm491, %v450, 0
      %v502 = vsel %vm491, %v451, 0
      %v505 = vsel %vm491, %v452, 0
      %v508 = vsel %vm491, %v453, 0
      %v511 = vsel %vm491, %v454, 0
      %v514 = vsel %vm491, %v455, 0
      %v517 = vsel %vm491, %v456, 0
      %v520 = vsel %vm491, %v457, 0
      %v523 = vsel %vm491, %v458, 0
      %v526 = vsel %vm491, %v459, 0
      %v529 = vsel %vm491, %v460, 0
      %v532 = vsel %vm491, %v461, 0
      %v535 = vsel %vm491, %v462, 0
      %v538 = vsel %vm491, %v463, 0
      %v541 = vsel %vm491, %v464, 0
      %v544 = vsel %vm491, %v465, 0
      %v547 = vsel %vm491, %v466, 0
      %v550 = vsel %vm491, %v467, 0
      %v553 = vsel %vm491, %v468, 0
      %v556 = vsel %vm491, %v469, 0
      %v559 = vsel %vm491, %v470, 0
      %v562 = vsel %vm491, %v471, 0
      %v565 = vsel %vm491, %v472, 0
      %v568 = vsel %vm491, %v473, 0
      %v571 = vsel %vm491, %v474, 0
      %v574 = vsel %vm491, %v475, 0
      %v577 = vsel %vm491, %v476, 0
      %v580 = vsel %vm491, %v477, 0
      %v583 = vsel %vm491, %v478, 0
      %v586 = vsel %vm491, %v479, 0
      %vm588 = vcmask 1044480
      %vm589 = vcmask 1045504
      %v590 = vsel %vm588, 4294967295, 65535
      %v591 = vsel %vm589, %v590, 0
      %v593 = vand.u32 %v489, %v591
      %595 = vmatprep.subr.bf16.mxu0 0
      %596 = vmatpush1.bf16.msra.mxu0 %v488
      %597 = vmatprep.subr.bf16.mxu0 0
      %598 = vmatpush1.bf16.msra.mxu0 %v593
      %599 = vmatprep.subr.bf16.mxu0 0
      %600 = vmatpush1.bf16.msra.mxu0 0
      %601 = vmatprep.subr.bf16.mxu0 0
      %602 = vmatpush1.bf16.msra.mxu0 0
      %603 = vmatprep.subr.bf16.mxu0 0
      %604 = vmatpush1.bf16.msra.mxu0 0
      %605 = vmatprep.subr.bf16.mxu0 0
      %606 = vmatpush1.bf16.msra.mxu0 0
      %607 = vmatprep.subr.bf16.mxu0 0
      %608 = vmatpush1.bf16.msra.mxu0 0
      %609 = vmatprep.subr.bf16.mxu0 0
      %610 = vmatpush1.bf16.msra.mxu0 0
      %611 = vmatprep.subr.bf16.mxu0 0
      %612 = vmatpush1.bf16.msra.mxu0 0
      %613 = vmatprep.subr.bf16.mxu0 0
      %614 = vmatpush1.bf16.msra.mxu0 0
      %615 = vmatprep.subr.bf16.mxu0 0
      %616 = vmatpush1.bf16.msra.mxu0 0
      %617 = vmatprep.subr.bf16.mxu0 0
      %618 = vmatpush1.bf16.msra.mxu0 0
      %619 = vmatprep.subr.bf16.mxu0 0
      %620 = vmatpush1.bf16.msra.mxu0 0
      %621 = vmatprep.subr.bf16.mxu0 0
      %622 = vmatpush1.bf16.msra.mxu0 0
      %623 = vmatprep.subr.bf16.mxu0 0
      %624 = vmatpush1.bf16.msra.mxu0 0
      %625 = vmatprep.subr.bf16.mxu0 0
      %626 = vmatpush1.bf16.msra.mxu0 0
      %627 = vmatprep.mubr.bf16.mxu0 0
      %628 = vmatmul.mubr.bf16.gmra.mrb[0].mxu0 %v493
      %v629 = vpop.f32.mrb[0].mxu0
      %v630 = vadd.f32 %v318, %v629
      %v631 = vpop.f32.mrb[0].mxu0
      %v632 = vpop.f32.mrb[0].mxu0
      %v633 = vadd.f32 %v318, %v632
      %v634 = vpop.f32.mrb[0].mxu0
      %635 = vmatprep.mubr.bf16.mxu0 0
      %636 = vmatmul.mubr.bf16.gmra.mrb[0].mxu0 %v496
      %v637 = vpop.f32.mrb[0].mxu0
      %v638 = vadd.f32 %v318, %v637
      %v639 = vpop.f32.mrb[0].mxu0
      %v640 = vpop.f32.mrb[0].mxu0
      %v641 = vadd.f32 %v318, %v640
      %v642 = vpop.f32.mrb[0].mxu0
      %643 = vmatprep.mubr.bf16.mxu0 0
      %644 = vmatmul.mubr.bf16.gmra.mrb[0].mxu0 %v499
      %v645 = vpop.f32.mrb[0].mxu0
      %v646 = vadd.f32 %v318, %v645
      %v647 = vpop.f32.mrb[0].mxu0
      %v648 = vpop.f32.mrb[0].mxu0
      %v649 = vadd.f32 %v318, %v648
      %v650 = vpop.f32.mrb[0].mxu0
      %651 = vmatprep.mubr.bf16.mxu0 0
      %652 = vmatmul.mubr.bf16.gmra.mrb[0].mxu0 %v502
      %v653 = vpop.f32.mrb[0].mxu0
      %v654 = vadd.f32 %v318, %v653
      %v655 = vpop.f32.mrb[0].mxu0
      %v656 = vpop.f32.mrb[0].mxu0
      %v657 = vadd.f32 %v318, %v656
      %v658 = vpop.f32.mrb[0].mxu0
      %659 = vmatprep.mubr.bf16.mxu0 0
      %660 = vmatmul.mubr.bf16.gmra.mrb[0].mxu0 %v505
      %v661 = vpop.f32.mrb[0].mxu0
      %v662 = vadd.f32 %v318, %v661
      %v663 = vpop.f32.mrb[0].mxu0
      %v664 = vpop.f32.mrb[0].mxu0
      %v665 = vadd.f32 %v318, %v664
      %v666 = vpop.f32.mrb[0].mxu0
      %667 = vmatprep.mubr.bf16.mxu0 0
      %668 = vmatmul.mubr.bf16.gmra.mrb[0].mxu0 %v508
      %v669 = vpop.f32.mrb[0].mxu0
      %v670 = vadd.f32 %v318, %v669
      %v671 = vpop.f32.mrb[0].mxu0
      %v672 = vpop.f32.mrb[0].mxu0
      %v673 = vadd.f32 %v318, %v672
      %v674 = vpop.f32.mrb[0].mxu0
      %675 = vmatprep.mubr.bf16.mxu0 0
      %676 = vmatmul.mubr.bf16.gmra.mrb[0].mxu0 %v511
      %v677 = vpop.f32.mrb[0].mxu0
      %v678 = vadd.f32 %v318, %v677
      %v679 = vpop.f32.mrb[0].mxu0
      %v680 = vpop.f32.mrb[0].mxu0
      %v681 = vadd.f32 %v318, %v680
      %v682 = vpop.f32.mrb[0].mxu0
      %683 = vmatprep.mubr.bf16.mxu0 0
      %684 = vmatmul.mubr.bf16.gmra.mrb[0].mxu0 %v514
      %v685 = vpop.f32.mrb[0].mxu0
      %v686 = vadd.f32 %v318, %v685
      %v687 = vpop.f32.mrb[0].mxu0
      %v688 = vpop.f32.mrb[0].mxu0
      %v689 = vadd.f32 %v318, %v688
      %v690 = vpop.f32.mrb[0].mxu0
      %691 = vmatprep.mubr.bf16.mxu0 0
      %692 = vmatmul.mubr.bf16.gmra.mrb[0].mxu0 %v517
      %v693 = vpop.f32.mrb[0].mxu0
      %v694 = vadd.f32 %v318, %v693
      %v695 = vpop.f32.mrb[0].mxu0
      %v696 = vpop.f32.mrb[0].mxu0
      %v697 = vadd.f32 %v318, %v696
      %v698 = vpop.f32.mrb[0].mxu0
      %699 = vmatprep.mubr.bf16.mxu0 0
      %700 = vmatmul.mubr.bf16.gmra.mrb[0].mxu0 %v520
      %v701 = vpop.f32.mrb[0].mxu0
      %v702 = vadd.f32 %v318, %v701
      %v703 = vpop.f32.mrb[0].mxu0
      %v704 = vpop.f32.mrb[0].mxu0
      %v705 = vadd.f32 %v318, %v704
      %v706 = vpop.f32.mrb[0].mxu0
      %707 = vmatprep.mubr.bf16.mxu0 0
      %708 = vmatmul.mubr.bf16.gmra.mrb[0].mxu0 %v523
      %v709 = vpop.f32.mrb[0].mxu0
      %v710 = vadd.f32 %v318, %v709
      %v711 = vpop.f32.mrb[0].mxu0
      %v712 = vpop.f32.mrb[0].mxu0
      %v713 = vadd.f32 %v318, %v712
      %v714 = vpop.f32.mrb[0].mxu0
      %715 = vmatprep.mubr.bf16.mxu0 0
      %716 = vmatmul.mubr.bf16.gmra.mrb[0].mxu0 %v526
      %v717 = vpop.f32.mrb[0].mxu0
      %v718 = vadd.f32 %v318, %v717
      %v719 = vpop.f32.mrb[0].mxu0
      %v720 = vpop.f32.mrb[0].mxu0
      %v721 = vadd.f32 %v318, %v720
      %v722 = vpop.f32.mrb[0].mxu0
      %723 = vmatprep.mubr.bf16.mxu0 0
      %724 = vmatmul.mubr.bf16.gmra.mrb[0].mxu0 %v529
      %v725 = vpop.f32.mrb[0].mxu0
      %v726 = vadd.f32 %v318, %v725
      %v727 = vpop.f32.mrb[0].mxu0
      %v728 = vpop.f32.mrb[0].mxu0
      %v729 = vadd.f32 %v318, %v728
      %v730 = vpop.f32.mrb[0].mxu0
      %731 = vmatprep.mubr.bf16.mxu0 0
      %732 = vmatmul.mubr.bf16.gmra.mrb[0].mxu0 %v532
      %v733 = vpop.f32.mrb[0].mxu0
      %v734 = vadd.f32 %v318, %v733
      %v735 = vpop.f32.mrb[0].mxu0
      %v736 = vpop.f32.mrb[0].mxu0
      %v737 = vadd.f32 %v318, %v736
      %v738 = vpop.f32.mrb[0].mxu0
      %739 = vmatprep.mubr.bf16.mxu0 0
      %740 = vmatmul.mubr.bf16.gmra.mrb[0].mxu0 %v535
      %v741 = vpop.f32.mrb[0].mxu0
      %v742 = vadd.f32 %v318, %v741
      %v743 = vpop.f32.mrb[0].mxu0
      %v744 = vpop.f32.mrb[0].mxu0
      %v745 = vadd.f32 %v318, %v744
      %v746 = vpop.f32.mrb[0].mxu0
      %747 = vmatprep.mubr.bf16.mxu0 0
      %748 = vmatmul.mubr.bf16.gmra.mrb[0].mxu0 %v538
      %v749 = vpop.f32.mrb[0].mxu0
      %v750 = vadd.f32 %v318, %v749
      %v751 = vpop.f32.mrb[0].mxu0
      %v752 = vpop.f32.mrb[0].mxu0
      %v753 = vadd.f32 %v318, %v752
      %v754 = vpop.f32.mrb[0].mxu0
      %755 = vmatprep.mubr.bf16.mxu0 0
      %756 = vmatmul.mubr.bf16.gmra.mrb[0].mxu0 %v541
      %v757 = vpop.f32.mrb[0].mxu0
      %v758 = vadd.f32 %v318, %v757
      %v759 = vpop.f32.mrb[0].mxu0
      %v760 = vpop.f32.mrb[0].mxu0
      %v761 = vadd.f32 %v318, %v760
      %v762 = vpop.f32.mrb[0].mxu0
      %763 = vmatprep.mubr.bf16.mxu0 0
      %764 = vmatmul.mubr.bf16.gmra.mrb[0].mxu0 %v544
      %v765 = vpop.f32.mrb[0].mxu0
      %v766 = vadd.f32 %v318, %v765
      %v767 = vpop.f32.mrb[0].mxu0
      %v768 = vpop.f32.mrb[0].mxu0
      %v769 = vadd.f32 %v318, %v768
      %v770 = vpop.f32.mrb[0].mxu0
      %771 = vmatprep.mubr.bf16.mxu0 0
      %772 = vmatmul.mubr.bf16.gmra.mrb[0].mxu0 %v547
      %v773 = vpop.f32.mrb[0].mxu0
      %v774 = vadd.f32 %v318, %v773
      %v775 = vpop.f32.mrb[0].mxu0
      %v776 = vpop.f32.mrb[0].mxu0
      %v777 = vadd.f32 %v318, %v776
      %v778 = vpop.f32.mrb[0].mxu0
      %779 = vmatprep.mubr.bf16.mxu0 0
      %780 = vmatmul.mubr.bf16.gmra.mrb[0].mxu0 %v550
      %v781 = vpop.f32.mrb[0].mxu0
      %v782 = vadd.f32 %v318, %v781
      %v783 = vpop.f32.mrb[0].mxu0
      %v784 = vpop.f32.mrb[0].mxu0
      %v785 = vadd.f32 %v318, %v784
      %v786 = vpop.f32.mrb[0].mxu0
      %787 = vmatprep.mubr.bf16.mxu0 0
      %788 = vmatmul.mubr.bf16.gmra.mrb[0].mxu0 %v553
      %v789 = vpop.f32.mrb[0].mxu0
      %v790 = vadd.f32 %v318, %v789
      %v791 = vpop.f32.mrb[0].mxu0
      %v792 = vpop.f32.mrb[0].mxu0
      %v793 = vadd.f32 %v318, %v792
      %v794 = vpop.f32.mrb[0].mxu0
      %795 = vmatprep.mubr.bf16.mxu0 0
      %796 = vmatmul.mubr.bf16.gmra.mrb[0].mxu0 %v556
      %v797 = vpop.f32.mrb[0].mxu0
      %v798 = vadd.f32 %v318, %v797
      %v799 = vpop.f32.mrb[0].mxu0
      %v800 = vpop.f32.mrb[0].mxu0
      %v801 = vadd.f32 %v318, %v800
      %v802 = vpop.f32.mrb[0].mxu0
      %803 = vmatprep.mubr.bf16.mxu0 0
      %804 = vmatmul.mubr.bf16.gmra.mrb[0].mxu0 %v559
      %v805 = vpop.f32.mrb[0].mxu0
      %v806 = vadd.f32 %v318, %v805
      %v807 = vpop.f32.mrb[0].mxu0
      %v808 = vpop.f32.mrb[0].mxu0
      %v809 = vadd.f32 %v318, %v808
      %v810 = vpop.f32.mrb[0].mxu0
      %811 = vmatprep.mubr.bf16.mxu0 0
      %812 = vmatmul.mubr.bf16.gmra.mrb[0].mxu0 %v562
      %v813 = vpop.f32.mrb[0].mxu0
      %v814 = vadd.f32 %v318, %v813
      %v815 = vpop.f32.mrb[0].mxu0
      %v816 = vpop.f32.mrb[0].mxu0
      %v817 = vadd.f32 %v318, %v816
      %v818 = vpop.f32.mrb[0].mxu0
      %819 = vmatprep.mubr.bf16.mxu0 0
      %820 = vmatmul.mubr.bf16.gmra.mrb[0].mxu0 %v565
      %v821 = vpop.f32.mrb[0].mxu0
      %v822 = vadd.f32 %v318, %v821
      %v823 = vpop.f32.mrb[0].mxu0
      %v824 = vpop.f32.mrb[0].mxu0
      %v825 = vadd.f32 %v318, %v824
      %v826 = vpop.f32.mrb[0].mxu0
      %827 = vmatprep.mubr.bf16.mxu0 0
      %828 = vmatmul.mubr.bf16.gmra.mrb[0].mxu0 %v568
      %v829 = vpop.f32.mrb[0].mxu0
      %v830 = vadd.f32 %v318, %v829
      %v831 = vpop.f32.mrb[0].mxu0
      %v832 = vpop.f32.mrb[0].mxu0
      %v833 = vadd.f32 %v318, %v832
      %v834 = vpop.f32.mrb[0].mxu0
      %835 = vmatprep.mubr.bf16.mxu0 0
      %836 = vmatmul.mubr.bf16.gmra.mrb[0].mxu0 %v571
      %v837 = vpop.f32.mrb[0].mxu0
      %v838 = vadd.f32 %v318, %v837
      %v839 = vpop.f32.mrb[0].mxu0
      %v840 = vpop.f32.mrb[0].mxu0
      %v841 = vadd.f32 %v318, %v840
      %v842 = vpop.f32.mrb[0].mxu0
      %843 = vmatprep.mubr.bf16.mxu0 0
      %844 = vmatmul.mubr.bf16.gmra.mrb[0].mxu0 %v574
      %v845 = vpop.f32.mrb[0].mxu0
      %v846 = vadd.f32 %v318, %v845
      %v847 = vpop.f32.mrb[0].mxu0
      %v848 = vpop.f32.mrb[0].mxu0
      %v849 = vadd.f32 %v318, %v848
      %v850 = vpop.f32.mrb[0].mxu0
      %851 = vmatprep.mubr.bf16.mxu0 0
      %852 = vmatmul.mubr.bf16.gmra.mrb[0].mxu0 %v577
      %v853 = vpop.f32.mrb[0].mxu0
      %v854 = vadd.f32 %v318, %v853
      %v855 = vpop.f32.mrb[0].mxu0
      %v856 = vpop.f32.mrb[0].mxu0
      %v857 = vadd.f32 %v318, %v856
      %v858 = vpop.f32.mrb[0].mxu0
      %859 = vmatprep.mubr.bf16.mxu0 0
      %860 = vmatmul.mubr.bf16.gmra.mrb[0].mxu0 %v580
      %v861 = vpop.f32.mrb[0].mxu0
      %v862 = vadd.f32 %v318, %v861
      %v863 = vpop.f32.mrb[0].mxu0
      %v864 = vpop.f32.mrb[0].mxu0
      %v865 = vadd.f32 %v318, %v864
      %v866 = vpop.f32.mrb[0].mxu0
      %867 = vmatprep.mubr.bf16.mxu0 0
      %868 = vmatmul.mubr.bf16.gmra.mrb[0].mxu0 %v583
      %v869 = vpop.f32.mrb[0].mxu0
      %v870 = vadd.f32 %v318, %v869
      %v871 = vpop.f32.mrb[0].mxu0
      %v872 = vpop.f32.mrb[0].mxu0
      %v873 = vadd.f32 %v318, %v872
      %v874 = vpop.f32.mrb[0].mxu0
      %875 = vmatprep.mubr.bf16.mxu0 0
      %876 = vmatmul.mubr.bf16.gmra.mrb[0].mxu0 %v586
      %v877 = vpop.f32.mrb[0].mxu0
      %v878 = vadd.f32 %v318, %v877
      %v879 = vpop.f32.mrb[0].mxu0
      %v880 = vpop.f32.mrb[0].mxu0
      %v881 = vadd.f32 %v318, %v880
      %v882 = vpop.f32.mrb[0].mxu0
      %883 = vdwg.mxu0
      %vm884 = vcmp.ge.f32.partialorder %v630, 0.0
      %vm885 = vcmp.ge.f32.partialorder %v633, 0.0
      %vm886 = vcmp.ge.f32.partialorder %v638, 0.0
      %vm887 = vcmp.ge.f32.partialorder %v641, 0.0
      %vm888 = vcmp.ge.f32.partialorder %v646, 0.0
      %vm889 = vcmp.ge.f32.partialorder %v649, 0.0
      %vm890 = vcmp.ge.f32.partialorder %v654, 0.0
      %vm891 = vcmp.ge.f32.partialorder %v657, 0.0
      %vm892 = vcmp.ge.f32.partialorder %v662, 0.0
      %vm893 = vcmp.ge.f32.partialorder %v665, 0.0
      %vm894 = vcmp.ge.f32.partialorder %v670, 0.0
      %vm895 = vcmp.ge.f32.partialorder %v673, 0.0
      %vm896 = vcmp.ge.f32.partialorder %v678, 0.0
      %vm897 = vcmp.ge.f32.partialorder %v681, 0.0
      %vm898 = vcmp.ge.f32.partialorder %v686, 0.0
      %vm899 = vcmp.ge.f32.partialorder %v689, 0.0
      %vm900 = vcmp.ge.f32.partialorder %v694, 0.0
      %vm901 = vcmp.ge.f32.partialorder %v697, 0.0
      %vm902 = vcmp.ge.f32.partialorder %v702, 0.0
      %vm903 = vcmp.ge.f32.partialorder %v705, 0.0
      %vm904 = vcmp.ge.f32.partialorder %v710, 0.0
      %vm905 = vcmp.ge.f32.partialorder %v713, 0.0
      %vm906 = vcmp.ge.f32.partialorder %v718, 0.0
      %vm907 = vcmp.ge.f32.partialorder %v721, 0.0
      %vm908 = vcmp.ge.f32.partialorder %v726, 0.0
      %vm909 = vcmp.ge.f32.partialorder %v729, 0.0
      %vm910 = vcmp.ge.f32.partialorder %v734, 0.0
      %vm911 = vcmp.ge.f32.partialorder %v737, 0.0
      %vm912 = vcmp.ge.f32.partialorder %v742, 0.0
      %vm913 = vcmp.ge.f32.partialorder %v745, 0.0
      %vm914 = vcmp.ge.f32.partialorder %v750, 0.0
      %vm915 = vcmp.ge.f32.partialorder %v753, 0.0
      %vm916 = vcmp.ge.f32.partialorder %v758, 0.0
      %vm917 = vcmp.ge.f32.partialorder %v761, 0.0
      %vm918 = vcmp.ge.f32.partialorder %v766, 0.0
      %vm919 = vcmp.ge.f32.partialorder %v769, 0.0
      %vm920 = vcmp.ge.f32.partialorder %v774, 0.0
      %vm921 = vcmp.ge.f32.partialorder %v777, 0.0
      %vm922 = vcmp.ge.f32.partialorder %v782, 0.0
      %vm923 = vcmp.ge.f32.partialorder %v785, 0.0
      %vm924 = vcmp.ge.f32.partialorder %v790, 0.0
      %vm925 = vcmp.ge.f32.partialorder %v793, 0.0
      %vm926 = vcmp.ge.f32.partialorder %v798, 0.0
      %vm927 = vcmp.ge.f32.partialorder %v801, 0.0
      %vm928 = vcmp.ge.f32.partialorder %v806, 0.0
      %vm929 = vcmp.ge.f32.partialorder %v809, 0.0
      %vm930 = vcmp.ge.f32.partialorder %v814, 0.0
      %vm931 = vcmp.ge.f32.partialorder %v817, 0.0
      %vm932 = vcmp.ge.f32.partialorder %v822, 0.0
      %vm933 = vcmp.ge.f32.partialorder %v825, 0.0
      %vm934 = vcmp.ge.f32.partialorder %v830, 0.0
      %vm935 = vcmp.ge.f32.partialorder %v833, 0.0
      %vm936 = vcmp.ge.f32.partialorder %v838, 0.0
      %vm937 = vcmp.ge.f32.partialorder %v841, 0.0
      %vm938 = vcmp.ge.f32.partialorder %v846, 0.0
      %vm939 = vcmp.ge.f32.partialorder %v849, 0.0
      %vm940 = vcmp.ge.f32.partialorder %v854, 0.0
      %vm941 = vcmp.ge.f32.partialorder %v857, 0.0
      %vm942 = vcmp.ge.f32.partialorder %v862, 0.0
      %vm943 = vcmp.ge.f32.partialorder %v865, 0.0
      %vm944 = vcmp.ge.f32.partialorder %v870, 0.0
      %vm945 = vcmp.ge.f32.partialorder %v873, 0.0
      %vm946 = vcmp.ge.f32.partialorder %v878, 0.0
      %vm947 = vcmp.ge.f32.partialorder %v881, 0.0
      %v948 = vmul.f32 %v630, 0.2
      %v949 = vmul.f32 %v633, 0.2
      %v950 = vmul.f32 %v638, 0.2
      %v951 = vmul.f32 %v641, 0.2
      %v952 = vmul.f32 %v646, 0.2
      %v953 = vmul.f32 %v649, 0.2
      %v954 = vmul.f32 %v654, 0.2
      %v955 = vmul.f32 %v657, 0.2
      %v956 = vmul.f32 %v662, 0.2
      %v957 = vmul.f32 %v665, 0.2
      %v958 = vmul.f32 %v670, 0.2
      %v959 = vmul.f32 %v673, 0.2
      %v960 = vmul.f32 %v678, 0.2
      %v961 = vmul.f32 %v681, 0.2
      %v962 = vmul.f32 %v686, 0.2
      %v963 = vmul.f32 %v689, 0.2
      %v964 = vmul.f32 %v694, 0.2
      %v965 = vmul.f32 %v697, 0.2
      %v966 = vmul.f32 %v702, 0.2
      %v967 = vmul.f32 %v705, 0.2
      %v968 = vmul.f32 %v710, 0.2
      %v969 = vmul.f32 %v713, 0.2
      %v970 = vmul.f32 %v718, 0.2
      %v971 = vmul.f32 %v721, 0.2
      %v972 = vmul.f32 %v726, 0.2
      %v973 = vmul.f32 %v729, 0.2
      %v974 = vmul.f32 %v734, 0.2
      %v975 = vmul.f32 %v737, 0.2
      %v976 = vmul.f32 %v742, 0.2
      %v977 = vmul.f32 %v745, 0.2
      %v978 = vmul.f32 %v750, 0.2
      %v979 = vmul.f32 %v753, 0.2
      %v980 = vmul.f32 %v758, 0.2
      %v981 = vmul.f32 %v761, 0.2
      %v982 = vmul.f32 %v766, 0.2
      %v983 = vmul.f32 %v769, 0.2
      %v984 = vmul.f32 %v774, 0.2
      %v985 = vmul.f32 %v777, 0.2
      %v986 = vmul.f32 %v782, 0.2
      %v987 = vmul.f32 %v785, 0.2
      %v988 = vmul.f32 %v790, 0.2
      %v989 = vmul.f32 %v793, 0.2
      %v990 = vmul.f32 %v798, 0.2
      %v991 = vmul.f32 %v801, 0.2
      %v992 = vmul.f32 %v806, 0.2
      %v993 = vmul.f32 %v809, 0.2
      %v994 = vmul.f32 %v814, 0.2
      %v995 = vmul.f32 %v817, 0.2
      %v996 = vmul.f32 %v822, 0.2
      %v997 = vmul.f32 %v825, 0.2
      %v998 = vmul.f32 %v830, 0.2
      %v999 = vmul.f32 %v833, 0.2
      %v1000 = vmul.f32 %v838, 0.2
      %v1001 = vmul.f32 %v841, 0.2
      %v1002 = vmul.f32 %v846, 0.2
      %v1003 = vmul.f32 %v849, 0.2
      %v1004 = vmul.f32 %v854, 0.2
      %v1005 = vmul.f32 %v857, 0.2
      %v1006 = vmul.f32 %v862, 0.2
      %v1007 = vmul.f32 %v865, 0.2
      %v1008 = vmul.f32 %v870, 0.2
      %v1009 = vmul.f32 %v873, 0.2
      %v1010 = vmul.f32 %v878, 0.2
      %v1011 = vmul.f32 %v881, 0.2
      %v1012 = vsel %vm884, %v630, %v948
      %v1013 = vsel %vm885, %v633, %v949
      %v1014 = vsel %vm886, %v638, %v950
      %v1015 = vsel %vm887, %v641, %v951
      %v1016 = vsel %vm888, %v646, %v952
      %v1017 = vsel %vm889, %v649, %v953
      %v1018 = vsel %vm890, %v654, %v954
      %v1019 = vsel %vm891, %v657, %v955
      %v1020 = vsel %vm892, %v662, %v956
      %v1021 = vsel %vm893, %v665, %v957
      %v1022 = vsel %vm894, %v670, %v958
      %v1023 = vsel %vm895, %v673, %v959
      %v1024 = vsel %vm896, %v678, %v960
      %v1025 = vsel %vm897, %v681, %v961
      %v1026 = vsel %vm898, %v686, %v962
      %v1027 = vsel %vm899, %v689, %v963
      %v1028 = vsel %vm900, %v694, %v964
      %v1029 = vsel %vm901, %v697, %v965
      %v1030 = vsel %vm902, %v702, %v966
      %v1031 = vsel %vm903, %v705, %v967
      %v1032 = vsel %vm904, %v710, %v968
      %v1033 = vsel %vm905, %v713, %v969
      %v1034 = vsel %vm906, %v718, %v970
      %v1035 = vsel %vm907, %v721, %v971
      %v1036 = vsel %vm908, %v726, %v972
      %v1037 = vsel %vm909, %v729, %v973
      %v1038 = vsel %vm910, %v734, %v974
      %v1039 = vsel %vm911, %v737, %v975
      %v1040 = vsel %vm912, %v742, %v976
      %v1041 = vsel %vm913, %v745, %v977
      %v1042 = vsel %vm914, %v750, %v978
      %v1043 = vsel %vm915, %v753, %v979
      %v1044 = vsel %vm916, %v758, %v980
      %v1045 = vsel %vm917, %v761, %v981
      %v1046 = vsel %vm918, %v766, %v982
      %v1047 = vsel %vm919, %v769, %v983
      %v1048 = vsel %vm920, %v774, %v984
      %v1049 = vsel %vm921, %v777, %v985
      %v1050 = vsel %vm922, %v782, %v986
      %v1051 = vsel %vm923, %v785, %v987
      %v1052 = vsel %vm924, %v790, %v988
      %v1053 = vsel %vm925, %v793, %v989
      %v1054 = vsel %vm926, %v798, %v990
      %v1055 = vsel %vm927, %v801, %v991
      %v1056 = vsel %vm928, %v806, %v992
      %v1057 = vsel %vm929, %v809, %v993
      %v1058 = vsel %vm930, %v814, %v994
      %v1059 = vsel %vm931, %v817, %v995
      %v1060 = vsel %vm932, %v822, %v996
      %v1061 = vsel %vm933, %v825, %v997
      %v1062 = vsel %vm934, %v830, %v998
      %v1063 = vsel %vm935, %v833, %v999
      %v1064 = vsel %vm936, %v838, %v1000
      %v1065 = vsel %vm937, %v841, %v1001
      %v1066 = vsel %vm938, %v846, %v1002
      %v1067 = vsel %vm939, %v849, %v1003
      %v1068 = vsel %vm940, %v854, %v1004
      %v1069 = vsel %vm941, %v857, %v1005
      %v1070 = vsel %vm942, %v862, %v1006
      %v1071 = vsel %vm943, %v865, %v1007
      %v1072 = vsel %vm944, %v870, %v1008
      %v1073 = vsel %vm945, %v873, %v1009
      %v1074 = vsel %vm946, %v878, %v1010
      %v1075 = vsel %vm947, %v881, %v1011
      %v1076 = vpack.c.bf16 %v1013, %v1012
      %v1077 = vpack.c.bf16 %v1015, %v1014
      %v1078 = vpack.c.bf16 %v1017, %v1016
      %v1079 = vpack.c.bf16 %v1019, %v1018
      %v1080 = vpack.c.bf16 %v1021, %v1020
      %v1081 = vpack.c.bf16 %v1023, %v1022
      %v1082 = vpack.c.bf16 %v1025, %v1024
      %v1083 = vpack.c.bf16 %v1027, %v1026
      %v1084 = vpack.c.bf16 %v1029, %v1028
      %v1085 = vpack.c.bf16 %v1031, %v1030
      %v1086 = vpack.c.bf16 %v1033, %v1032
      %v1087 = vpack.c.bf16 %v1035, %v1034
      %v1088 = vpack.c.bf16 %v1037, %v1036
      %v1089 = vpack.c.bf16 %v1039, %v1038
      %v1090 = vpack.c.bf16 %v1041, %v1040
      %v1091 = vpack.c.bf16 %v1043, %v1042
      %v1092 = vpack.c.bf16 %v1045, %v1044
      %v1093 = vpack.c.bf16 %v1047, %v1046
      %v1094 = vpack.c.bf16 %v1049, %v1048
      %v1095 = vpack.c.bf16 %v1051, %v1050
      %v1096 = vpack.c.bf16 %v1053, %v1052
      %v1097 = vpack.c.bf16 %v1055, %v1054
      %v1098 = vpack.c.bf16 %v1057, %v1056
      %v1099 = vpack.c.bf16 %v1059, %v1058
      %v1100 = vpack.c.bf16 %v1061, %v1060
      %v1101 = vpack.c.bf16 %v1063, %v1062
      %v1102 = vpack.c.bf16 %v1065, %v1064
      %v1103 = vpack.c.bf16 %v1067, %v1066
      %v1104 = vpack.c.bf16 %v1069, %v1068
      %v1105 = vpack.c.bf16 %v1071, %v1070
      %v1106 = vpack.c.bf16 %v1073, %v1072
      %v1107 = vpack.c.bf16 %v1075, %v1074
      %v1140 = vunpack.c.l.b16 %v1076
      %v1141 = vunpack.c.h.b16 %v1076
      %v1142 = vunpack.c.l.b16 %v1077
      %v1143 = vunpack.c.h.b16 %v1077
      %v1144 = vunpack.c.l.b16 %v1078
      %v1145 = vunpack.c.h.b16 %v1078
      %v1146 = vunpack.c.l.b16 %v1079
      %v1147 = vunpack.c.h.b16 %v1079
      %v1148 = vunpack.c.l.b16 %v1080
      %v1149 = vunpack.c.h.b16 %v1080
      %v1150 = vunpack.c.l.b16 %v1081
      %v1151 = vunpack.c.h.b16 %v1081
      %v1152 = vunpack.c.l.b16 %v1082
      %v1153 = vunpack.c.h.b16 %v1082
      %v1154 = vunpack.c.l.b16 %v1083
      %v1155 = vunpack.c.h.b16 %v1083
      %v1156 = vunpack.c.l.b16 %v1084
      %v1157 = vunpack.c.h.b16 %v1084
      %v1158 = vunpack.c.l.b16 %v1085
      %v1159 = vunpack.c.h.b16 %v1085
      %v1160 = vunpack.c.l.b16 %v1086
      %v1161 = vunpack.c.h.b16 %v1086
      %v1162 = vunpack.c.l.b16 %v1087
      %v1163 = vunpack.c.h.b16 %v1087
      %v1164 = vunpack.c.l.b16 %v1088
      %v1165 = vunpack.c.h.b16 %v1088
      %v1166 = vunpack.c.l.b16 %v1089
      %v1167 = vunpack.c.h.b16 %v1089
      %v1168 = vunpack.c.l.b16 %v1090
      %v1169 = vunpack.c.h.b16 %v1090
      %v1170 = vunpack.c.l.b16 %v1091
      %v1171 = vunpack.c.h.b16 %v1091
      %v1172 = vunpack.c.l.b16 %v1092
      %v1173 = vunpack.c.h.b16 %v1092
      %v1174 = vunpack.c.l.b16 %v1093
      %v1175 = vunpack.c.h.b16 %v1093
      %v1176 = vunpack.c.l.b16 %v1094
      %v1177 = vunpack.c.h.b16 %v1094
      %v1178 = vunpack.c.l.b16 %v1095
      %v1179 = vunpack.c.h.b16 %v1095
      %v1180 = vunpack.c.l.b16 %v1096
      %v1181 = vunpack.c.h.b16 %v1096
      %v1182 = vunpack.c.l.b16 %v1097
      %v1183 = vunpack.c.h.b16 %v1097
      %v1184 = vunpack.c.l.b16 %v1098
      %v1185 = vunpack.c.h.b16 %v1098
      %v1186 = vunpack.c.l.b16 %v1099
      %v1187 = vunpack.c.h.b16 %v1099
      %v1188 = vunpack.c.l.b16 %v1100
      %v1189 = vunpack.c.h.b16 %v1100
      %v1190 = vunpack.c.l.b16 %v1101
      %v1191 = vunpack.c.h.b16 %v1101
      %v1192 = vunpack.c.l.b16 %v1102
      %v1193 = vunpack.c.h.b16 %v1102
      %v1194 = vunpack.c.l.b16 %v1103
      %v1195 = vunpack.c.h.b16 %v1103
      %v1196 = vunpack.c.l.b16 %v1104
      %v1197 = vunpack.c.h.b16 %v1104
      %v1198 = vunpack.c.l.b16 %v1105
      %v1199 = vunpack.c.h.b16 %v1105
      %v1200 = vunpack.c.l.b16 %v1106
      %v1201 = vunpack.c.h.b16 %v1106
      %v1202 = vunpack.c.l.b16 %v1107
      %v1203 = vunpack.c.h.b16 %v1107
      %v1204 = vpack.c.b16 %v1140, %v1140
      %v1205 = vpack.c.b16 %v1141, %v1141
      %v1206 = vpack.c.b16 %v1142, %v1142
      %v1207 = vpack.c.b16 %v1143, %v1143
      %v1208 = vpack.c.b16 %v1144, %v1144
      %v1209 = vpack.c.b16 %v1145, %v1145
      %v1210 = vpack.c.b16 %v1146, %v1146
      %v1211 = vpack.c.b16 %v1147, %v1147
      %v1212 = vpack.c.b16 %v1148, %v1148
      %v1213 = vpack.c.b16 %v1149, %v1149
      %v1214 = vpack.c.b16 %v1150, %v1150
      %v1215 = vpack.c.b16 %v1151, %v1151
      %v1216 = vpack.c.b16 %v1152, %v1152
      %v1217 = vpack.c.b16 %v1153, %v1153
      %v1218 = vpack.c.b16 %v1154, %v1154
      %v1219 = vpack.c.b16 %v1155, %v1155
      %v1220 = vpack.c.b16 %v1156, %v1156
      %v1221 = vpack.c.b16 %v1157, %v1157
      %v1222 = vpack.c.b16 %v1158, %v1158
      %v1223 = vpack.c.b16 %v1159, %v1159
      %v1224 = vpack.c.b16 %v1160, %v1160
      %v1225 = vpack.c.b16 %v1161, %v1161
      %v1226 = vpack.c.b16 %v1162, %v1162
      %v1227 = vpack.c.b16 %v1163, %v1163
      %v1228 = vpack.c.b16 %v1164, %v1164
      %v1229 = vpack.c.b16 %v1165, %v1165
      %v1230 = vpack.c.b16 %v1166, %v1166
      %v1231 = vpack.c.b16 %v1167, %v1167
      %v1232 = vpack.c.b16 %v1168, %v1168
      %v1233 = vpack.c.b16 %v1169, %v1169
      %v1234 = vpack.c.b16 %v1170, %v1170
      %v1235 = vpack.c.b16 %v1171, %v1171
      %v1236 = vpack.c.b16 %v1172, %v1172
      %v1237 = vpack.c.b16 %v1173, %v1173
      %v1238 = vpack.c.b16 %v1174, %v1174
      %v1239 = vpack.c.b16 %v1175, %v1175
      %v1240 = vpack.c.b16 %v1176, %v1176
      %v1241 = vpack.c.b16 %v1177, %v1177
      %v1242 = vpack.c.b16 %v1178, %v1178
      %v1243 = vpack.c.b16 %v1179, %v1179
      %v1244 = vpack.c.b16 %v1180, %v1180
      %v1245 = vpack.c.b16 %v1181, %v1181
      %v1246 = vpack.c.b16 %v1182, %v1182
      %v1247 = vpack.c.b16 %v1183, %v1183
      %v1248 = vpack.c.b16 %v1184, %v1184
      %v1249 = vpack.c.b16 %v1185, %v1185
      %v1250 = vpack.c.b16 %v1186, %v1186
      %v1251 = vpack.c.b16 %v1187, %v1187
      %v1252 = vpack.c.b16 %v1188, %v1188
      %v1253 = vpack.c.b16 %v1189, %v1189
      %v1254 = vpack.c.b16 %v1190, %v1190
      %v1255 = vpack.c.b16 %v1191, %v1191
      %v1256 = vpack.c.b16 %v1192, %v1192
      %v1257 = vpack.c.b16 %v1193, %v1193
      %v1258 = vpack.c.b16 %v1194, %v1194
      %v1259 = vpack.c.b16 %v1195, %v1195
      %v1260 = vpack.c.b16 %v1196, %v1196
      %v1261 = vpack.c.b16 %v1197, %v1197
      %v1262 = vpack.c.b16 %v1198, %v1198
      %v1263 = vpack.c.b16 %v1199, %v1199
      %v1264 = vpack.c.b16 %v1200, %v1200
      %v1265 = vpack.c.b16 %v1201, %v1201
      %v1266 = vpack.c.b16 %v1202, %v1202
      %v1267 = vpack.c.b16 %v1203, %v1203
      %vm1332 = vcmask 125952
      %1333 = vst.msk [vmem:[%s242] sm:$0xf] %vm1332, %v1204
      %1334 = vst.msk [vmem:[%s242 + $0x4] sm:$0xf] %vm1332, %v1205
      %1335 = vst.msk [vmem:[%s242 + $0x8] sm:$0xf] %vm1332, %v1206
      %1336 = vst.msk [vmem:[%s242 + $0xc] sm:$0xf] %vm1332, %v1207
      %1337 = vst.msk [vmem:[%s242 + $0x10] sm:$0xf] %vm1332, %v1208
      %1338 = vst.msk [vmem:[%s242 + $0x14] sm:$0xf] %vm1332, %v1209
      %1339 = vst.msk [vmem:[%s242 + $0x18] sm:$0xf] %vm1332, %v1210
      %1340 = vst.msk [vmem:[%s242 + $0x1c] sm:$0xf] %vm1332, %v1211
      %1341 = vst.msk [vmem:[%s242 + $0x20] sm:$0xf] %vm1332, %v1212
      %1342 = vst.msk [vmem:[%s242 + $0x24] sm:$0xf] %vm1332, %v1213
      %1343 = vst.msk [vmem:[%s242 + $0x28] sm:$0xf] %vm1332, %v1214
      %1344 = vst.msk [vmem:[%s242 + $0x2c] sm:$0xf] %vm1332, %v1215
      %1345 = vst.msk [vmem:[%s242 + $0x30] sm:$0xf] %vm1332, %v1216
      %1346 = vst.msk [vmem:[%s242 + $0x34] sm:$0xf] %vm1332, %v1217
      %1347 = vst.msk [vmem:[%s242 + $0x38] sm:$0xf] %vm1332, %v1218
      %1348 = vst.msk [vmem:[%s242 + $0x3c] sm:$0xf] %vm1332, %v1219
      %1349 = vst.msk [vmem:[%s242 + $0x40] sm:$0xf] %vm1332, %v1220
      %1350 = vst.msk [vmem:[%s242 + $0x44] sm:$0xf] %vm1332, %v1221
      %1351 = vst.msk [vmem:[%s242 + $0x48] sm:$0xf] %vm1332, %v1222
      %1352 = vst.msk [vmem:[%s242 + $0x4c] sm:$0xf] %vm1332, %v1223
      %1353 = vst.msk [vmem:[%s242 + $0x50] sm:$0xf] %vm1332, %v1224
      %1354 = vst.msk [vmem:[%s242 + $0x54] sm:$0xf] %vm1332, %v1225
      %1355 = vst.msk [vmem:[%s242 + $0x58] sm:$0xf] %vm1332, %v1226
      %1356 = vst.msk [vmem:[%s242 + $0x5c] sm:$0xf] %vm1332, %v1227
      %1357 = vst.msk [vmem:[%s242 + $0x60] sm:$0xf] %vm1332, %v1228
      %1358 = vst.msk [vmem:[%s242 + $0x64] sm:$0xf] %vm1332, %v1229
      %1359 = vst.msk [vmem:[%s242 + $0x68] sm:$0xf] %vm1332, %v1230
      %1360 = vst.msk [vmem:[%s242 + $0x6c] sm:$0xf] %vm1332, %v1231
      %1361 = vst.msk [vmem:[%s242 + $0x70] sm:$0xf] %vm1332, %v1232
      %1362 = vst.msk [vmem:[%s242 + $0x74] sm:$0xf] %vm1332, %v1233
      %1363 = vst.msk [vmem:[%s242 + $0x78] sm:$0xf] %vm1332, %v1234
      %1364 = vst.msk [vmem:[%s242 + $0x7c] sm:$0xf] %vm1332, %v1235
      %1365 = vst.msk [vmem:[%s242 + $0x80] sm:$0xf] %vm1332, %v1236
      %1366 = vst.msk [vmem:[%s242 + $0x84] sm:$0xf] %vm1332, %v1237
      %1367 = vst.msk [vmem:[%s242 + $0x88] sm:$0xf] %vm1332, %v1238
      %1368 = vst.msk [vmem:[%s242 + $0x8c] sm:$0xf] %vm1332, %v1239
      %1369 = vst.msk [vmem:[%s242 + $0x90] sm:$0xf] %vm1332, %v1240
      %1370 = vst.msk [vmem:[%s242 + $0x94] sm:$0xf] %vm1332, %v1241
      %1371 = vst.msk [vmem:[%s242 + $0x98] sm:$0xf] %vm1332, %v1242
      %1372 = vst.msk [vmem:[%s242 + $0x9c] sm:$0xf] %vm1332, %v1243
      %1373 = vst.msk [vmem:[%s242 + $0xa0] sm:$0xf] %vm1332, %v1244
      %1374 = vst.msk [vmem:[%s242 + $0xa4] sm:$0xf] %vm1332, %v1245
      %1375 = vst.msk [vmem:[%s242 + $0xa8] sm:$0xf] %vm1332, %v1246
      %1376 = vst.msk [vmem:[%s242 + $0xac] sm:$0xf] %vm1332, %v1247
      %1377 = vst.msk [vmem:[%s242 + $0xb0] sm:$0xf] %vm1332, %v1248
      %1378 = vst.msk [vmem:[%s242 + $0xb4] sm:$0xf] %vm1332, %v1249
      %1379 = vst.msk [vmem:[%s242 + $0xb8] sm:$0xf] %vm1332, %v1250
      %1380 = vst.msk [vmem:[%s242 + $0xbc] sm:$0xf] %vm1332, %v1251
      %1381 = vst.msk [vmem:[%s242 + $0xc0] sm:$0xf] %vm1332, %v1252
      %1382 = vst.msk [vmem:[%s242 + $0xc4] sm:$0xf] %vm1332, %v1253
      %1383 = vst.msk [vmem:[%s242 + $0xc8] sm:$0xf] %vm1332, %v1254
      %1384 = vst.msk [vmem:[%s242 + $0xcc] sm:$0xf] %vm1332, %v1255
      %1385 = vst.msk [vmem:[%s242 + $0xd0] sm:$0xf] %vm1332, %v1256
      %1386 = vst.msk [vmem:[%s242 + $0xd4] sm:$0xf] %vm1332, %v1257
      %1387 = vst.msk [vmem:[%s242 + $0xd8] sm:$0xf] %vm1332, %v1258
      %1388 = vst.msk [vmem:[%s242 + $0xdc] sm:$0xf] %vm1332, %v1259
      %1389 = vst.msk [vmem:[%s242 + $0xe0] sm:$0xf] %vm1332, %v1260
      %1390 = vst.msk [vmem:[%s242 + $0xe4] sm:$0xf] %vm1332, %v1261
      %1391 = vst.msk [vmem:[%s242 + $0xe8] sm:$0xf] %vm1332, %v1262
      %1392 = vst.msk [vmem:[%s242 + $0xec] sm:$0xf] %vm1332, %v1263
      %1393 = vst.msk [vmem:[%s242 + $0xf0] sm:$0xf] %vm1332, %v1264
      %1394 = vst.msk [vmem:[%s242 + $0xf4] sm:$0xf] %vm1332, %v1265
      %1395 = vst.msk [vmem:[%s242 + $0xf8] sm:$0xf] %vm1332, %v1266
      %1396 = vst.msk [vmem:[%s242 + $0xfc] sm:$0xf] %vm1332, %v1267
      %s1397 = smul.u32 64, %s19
      %p1398 = scmp.lt.s32.totalorder %s18, 2
      %s1399 = scalar_select %p1398, %s18, 2
      %p1400 = scmp.lt.s32.totalorder %s1397, 63
      %s1401 = scalar_select %p1400, %s1397, 63
      %s1402 = smul.addr %s1399, 64
      %s1403 = sadd.s32 %s1401, %s1402
      %s1404 = smul.addr %s1403, 4
      %s1405 = scalar_lea.vmem %s3, %s1404
      // Predicated region
      $region33: #{forward.9} parent=31 // pred_check
        %p1406 = pneg %p126
      $region34: #{forward.9} parent=31 // pred_check_branch
        %1408 = sbr.rel (%p1406) target = $region36
      $region35: #{forward.9} parent=31 // pred_region
        %s1409 = smul.u32 64, %s19
      $region36: #{forward.9} parent=31 // pred_fallthru
        _
    $region32: #{forward.9} parent=5 // pred_fallthru
      _
    %p1410 = scmp.le.s32.totalorder 2, %s9
    // Predicated region
    $region37: #{forward.9} parent=5 // pred_check
      %p1411 = pneg %p1410
    $region38: #{forward.9} parent=5 // pred_check_branch
      %1413 = sbr.rel (%p1411) target = $region40
    $region39: #{forward.9} parent=5 // pred_region
      %s1414 = ssub.s32 %s9, 2
      // Predicated region
      $region41: #{forward.9} parent=39 // pred_check
        %p1415 = pneg %p132
      $region42: #{forward.9} parent=39 // pred_check_branch
        %1417 = sbr.rel (%p1415) target = $region44
      $region43: #{forward.9} parent=39 // pred_region
        %s1418 = smul.u32 64, %s21
        %p1419 = scmp.lt.s32.totalorder %s20, 2
        %s1420 = scalar_select %p1419, %s20, 2
        %p1421 = scmp.lt.s32.totalorder %s1418, 63
        %s1422 = scalar_select %p1421, %s1418, 63
        %s1423 = smul.addr %s1420, 64
        %s1424 = sadd.s32 %s1422, %s1423
        %s1425 = smul.addr %s1424, 4
        %s1426 = scalar_lea.vmem %s3, %s1425
      $region44: #{forward.9} parent=39 // pred_fallthru
        _
    $region40: #{forward.9} parent=5 // pred_fallthru
      _
  $region6: #{forward.9} parent=0 // loop_footer
    %s13 = sadd.s32 1, %s9
  $region7: #{forward.9} parent=0 // loop_footer_branch
    %8 = sbr.rel target = $region3
  $region8: #{forward.9} parent=0 // loop_exit
    _

// kernel: forward.10
$region0: #{forward.10}
  #allocation0 [shape = 'u32[]', space=smem, size = 0x4, offset = 0x4, fixed_abs, tag = 'smem constant byte address 0x4 - core index']
  #allocation1 [shape = 'u32[144,128]{1,0:T(1,128)}', space=vmem, size = 0x12000, scoped, tag = 'internal scratch']
  %s0 = inlined_call_operand.vmem [shape: bf16[3,128,144], index: 0, kind: input, shape index: {}]
  %s1 = inlined_call_operand.vmem [shape: bf16[3,144,32], index: 1, kind: input, shape index: {}]
  %s2 = inlined_call_operand.vmem [shape: f32[3,1,32], index: 2, kind: input, shape index: {}]
  %s3 = inlined_call_operand.vmem [shape: bf16[3,128,32], index: 3, kind: output, shape index: {}]
  %s4 = sld [smem:[#allocation0]]
  $region45: #{forward.10} parent=0
    _
  %s6 = ssub.s32 1, %s4
  %s7 = scalar_select 0, %s6, %s4
  loop: start=0, step=1, limit=5
  $region2: #{forward.10} parent=0 // loop_pre_header
    _
  $region3: #{forward.10} parent=0 // loop_header
    %s9 = sphi 0, %s13
    %p10 = scmp.ge.s32.totalorder %s9, 5
    %s16 = sphi 0, %s28
    %s17 = sphi 0, %s24
    %s18 = sphi 0, %s16
    %s19 = sphi 0, %s17
    %s20 = sphi 0, %s18
    %s21 = sphi 0, %s19
    %s33 = sphi 0, %s35
    %s36 = sphi 0, %s33
    %s37 = sphi 0, %s36
    %s53 = sphi 0, %s37
    %s59 = sphi 0, %s61
    %s62 = sphi 0, %s59
    %s63 = sphi 0, %s62
    %s79 = sphi 0, %s63
    %s85 = sphi 0, %s87
    %s88 = sphi 0, %s85
    %s89 = sphi 0, %s88
    %s105 = sphi 0, %s89
    %s113 = sphi 0, %s115
    %s116 = sphi 0, %s113
    %s117 = sphi 0, %s116
    %s133 = sphi 0, %s117
  $region4: #{forward.10} parent=0 // loop_header_branch
    %12 = sbr.rel (%p10) target = $region8
  $region5: #{forward.10} parent=0 // loop_body
    %s14 = ssub.s32 %s9, 1
    %s15 = ssub.s32 %s9, 2
    %s22 = sadd.s32 1, %s17
    %p23 = scmp.ge.s32.totalorder %s22, 1
    %s24 = scalar_select %p23, 0, %s22
    %s25 = sadd.s32 1, %s16
    %s26 = scalar_select %p23, %s25, %s16
    %p27 = scmp.ge.s32.totalorder %s26, 3
    %s28 = scalar_select %p27, 0, %s26
    %s29 = ssub.s32 %s16, %s28
    %s30 = ssub.s32 %s17, %s24
    %s31 = sor.u32 %s29, %s30
    %p32 = scmp.eq.s32.totalorder %s31, 0
    %s34 = sadd.s32 %s33, 1
    %s35 = scalar_select %p32, %s33, %s34
    %p38 = pneg %p32
    %p39 = scmp.eq.s32.totalorder %s9, 2
    %p40 = por %p38, %p39
    %p41 = scmp.ne.s32.totalorder %s33, %s36
    %p42 = scmp.eq.s32.totalorder %s9, 0
    %p43 = por %p41, %p42
    %p44 = scmp.ne.s32.totalorder %s33, %s36
    %p45 = scmp.eq.s32.totalorder %s14, 2
    %p46 = por %p44, %p45
    %p47 = scmp.ne.s32.totalorder %s36, %s37
    %p48 = scmp.eq.s32.totalorder %s14, 0
    %p49 = por %p47, %p48
    %p50 = scmp.ne.s32.totalorder %s36, %s37
    %p51 = scmp.eq.s32.totalorder %s15, 2
    %p52 = por %p50, %p51
    %p54 = scmp.ne.s32.totalorder %s37, %s53
    %p55 = scmp.eq.s32.totalorder %s15, 0
    %p56 = por %p54, %p55
    %s57 = ssub.s32 %s16, %s28
    %p58 = scmp.eq.s32.totalorder %s57, 0
    %s60 = sadd.s32 %s59, 1
    %s61 = scalar_select %p58, %s59, %s60
    %p64 = pneg %p58
    %p65 = scmp.eq.s32.totalorder %s9, 2
    %p66 = por %p64, %p65
    %p67 = scmp.ne.s32.totalorder %s59, %s62
    %p68 = scmp.eq.s32.totalorder %s9, 0
    %p69 = por %p67, %p68
    %p70 = scmp.ne.s32.totalorder %s59, %s62
    %p71 = scmp.eq.s32.totalorder %s14, 2
    %p72 = por %p70, %p71
    %p73 = scmp.ne.s32.totalorder %s62, %s63
    %p74 = scmp.eq.s32.totalorder %s14, 0
    %p75 = por %p73, %p74
    %p76 = scmp.ne.s32.totalorder %s62, %s63
    %p77 = scmp.eq.s32.totalorder %s15, 2
    %p78 = por %p76, %p77
    %p80 = scmp.ne.s32.totalorder %s63, %s79
    %p81 = scmp.eq.s32.totalorder %s15, 0
    %p82 = por %p80, %p81
    %s83 = ssub.s32 %s16, %s28
    %p84 = scmp.eq.s32.totalorder %s83, 0
    %s86 = sadd.s32 %s85, 1
    %s87 = scalar_select %p84, %s85, %s86
    %p90 = pneg %p84
    %p91 = scmp.eq.s32.totalorder %s9, 2
    %p92 = por %p90, %p91
    %p93 = scmp.ne.s32.totalorder %s85, %s88
    %p94 = scmp.eq.s32.totalorder %s9, 0
    %p95 = por %p93, %p94
    %p96 = scmp.ne.s32.totalorder %s85, %s88
    %p97 = scmp.eq.s32.totalorder %s14, 2
    %p98 = por %p96, %p97
    %p99 = scmp.ne.s32.totalorder %s88, %s89
    %p100 = scmp.eq.s32.totalorder %s14, 0
    %p101 = por %p99, %p100
    %p102 = scmp.ne.s32.totalorder %s88, %s89
    %p103 = scmp.eq.s32.totalorder %s15, 2
    %p104 = por %p102, %p103
    %p106 = scmp.ne.s32.totalorder %s89, %s105
    %p107 = scmp.eq.s32.totalorder %s15, 0
    %p108 = por %p106, %p107
    %s109 = ssub.s32 %s16, %s28
    %s110 = ssub.s32 %s17, %s24
    %s111 = sor.u32 %s109, %s110
    %p112 = scmp.eq.s32.totalorder %s111, 0
    %s114 = sadd.s32 %s113, 1
    %s115 = scalar_select %p112, %s113, %s114
    %p118 = pneg %p112
    %p119 = scmp.eq.s32.totalorder %s9, 2
    %p120 = por %p118, %p119
    %p121 = scmp.ne.s32.totalorder %s113, %s116
    %p122 = scmp.eq.s32.totalorder %s9, 0
    %p123 = por %p121, %p122
    %p124 = scmp.ne.s32.totalorder %s113, %s116
    %p125 = scmp.eq.s32.totalorder %s14, 2
    %p126 = por %p124, %p125
    %p127 = scmp.ne.s32.totalorder %s116, %s117
    %p128 = scmp.eq.s32.totalorder %s14, 0
    %p129 = por %p127, %p128
    %p130 = scmp.ne.s32.totalorder %s116, %s117
    %p131 = scmp.eq.s32.totalorder %s15, 2
    %p132 = por %p130, %p131
    %p134 = scmp.ne.s32.totalorder %s117, %s133
    %p135 = scmp.eq.s32.totalorder %s15, 0
    %p136 = por %p134, %p135
    %p137 = scmp.le.s32.totalorder 1, %s9
    %p138 = scmp.lt.s32.totalorder %s9, 4
    %p139 = pnand %p137, %p138
    %p140 = pneg %p139
    // Predicated region
    $region9: #{forward.10} parent=5 // pred_check
      _
    $region10: #{forward.10} parent=5 // pred_check_branch
      %142 = sbr.rel (%p139) target = $region12
    $region11: #{forward.10} parent=5 // pred_region
      %s143 = ssub.s32 %s9, 1
    $region12: #{forward.10} parent=5 // pred_fallthru
      _
    %p144 = scmp.lt.s32.totalorder %s9, 3
    // Predicated region
    $region13: #{forward.10} parent=5 // pred_check
      %p145 = pneg %p144
    $region14: #{forward.10} parent=5 // pred_check_branch
      %147 = sbr.rel (%p145) target = $region16
    $region15: #{forward.10} parent=5 // pred_region
      // Predicated region
      $region17: #{forward.10} parent=15 // pred_check
        %p148 = pneg %p43
      $region18: #{forward.10} parent=15 // pred_check_branch
        %150 = sbr.rel (%p148) target = $region20
      $region19: #{forward.10} parent=15 // pred_region
        %s151 = smul.u32 16, %s17
        %p152 = scmp.lt.s32.totalorder %s16, 2
        %s153 = scalar_select %p152, %s16, 2
        %p154 = scmp.lt.s32.totalorder %s151, 15
        %s155 = scalar_select %p154, %s151, 15
        %s156 = smul.addr %s155, 2
        %s157 = smul.addr %s153, 32
        %s158 = sadd.s32 %s156, %s157
        %s159 = smul.addr %s158, 4
        %s160 = scalar_lea.vmem %s0, %s159
        %s161 = smul.u32 16, %s17
      $region20: #{forward.10} parent=15 // pred_fallthru
        _
      // Predicated region
      $region21: #{forward.10} parent=15 // pred_check
        %p162 = pneg %p69
      $region22: #{forward.10} parent=15 // pred_check_branch
        %164 = sbr.rel (%p162) target = $region24
      $region23: #{forward.10} parent=15 // pred_region
        %p165 = scmp.lt.s32.totalorder %s16, 2
        %s166 = scalar_select %p165, %s16, 2
        %s167 = smul.addr %s166, 18
        %s168 = smul.addr %s167, 4
        %s169 = scalar_lea.vmem %s1, %s168
      $region24: #{forward.10} parent=15 // pred_fallthru
        _
      // Predicated region
      $region25: #{forward.10} parent=15 // pred_check
        %p170 = pneg %p95
      $region26: #{forward.10} parent=15 // pred_check_branch
        %172 = sbr.rel (%p170) target = $region28
      $region27: #{forward.10} parent=15 // pred_region
        %p173 = scmp.lt.s32.totalorder %s16, 2
        %s174 = scalar_select %p173, %s16, 2
        %s175 = scalar_lea.vmem %s2, %s174
      $region28: #{forward.10} parent=15 // pred_fallthru
        _
    $region16: #{forward.10} parent=5 // pred_fallthru
      _
    %p176 = scmp.le.s32.totalorder 1, %s9
    %p177 = scmp.lt.s32.totalorder %s9, 4
    %p178 = pnand %p176, %p177
    %p179 = pneg %p178
    // Predicated region
    $region29: #{forward.10} parent=5 // pred_check
      _
    $region30: #{forward.10} parent=5 // pred_check_branch
      %181 = sbr.rel (%p178) target = $region32
    $region31: #{forward.10} parent=5 // pred_region
      %s182 = ssub.s32 %s9, 1
      %s183 = smul.u32 16, %s19
      %p184 = scmp.lt.s32.totalorder %s18, 2
      %s185 = scalar_select %p184, %s18, 2
      %p186 = scmp.lt.s32.totalorder %s183, 15
      %s187 = scalar_select %p186, %s183, 15
      %s188 = smul.addr %s187, 2
      %s189 = smul.addr %s185, 32
      %s190 = sadd.s32 %s188, %s189
      %s191 = smul.addr %s190, 4
      %s192 = scalar_lea.vmem %s0, %s191
      %p193 = pneg %p49
      %p194 = pneg %p46
      %p195 = scmp.lt.s32.totalorder %s18, 2
      %s196 = scalar_select %p195, %s18, 2
      %s197 = smul.addr %s196, 18
      %s198 = smul.addr %s197, 4
      %s199 = scalar_lea.vmem %s1, %s198
      %p200 = pneg %p75
      %p201 = pneg %p72
      %p202 = scmp.lt.s32.totalorder %s18, 2
      %s203 = scalar_select %p202, %s18, 2
      %s204 = scalar_lea.vmem %s2, %s203
      %p205 = pneg %p101
      %p206 = pneg %p98
      %p207 = pneg %p129
      %p208 = pneg %p126
      %s209 = smul.u32 16, %s19
      %p210 = scmp.lt.s32.totalorder %s18, 2
      %s211 = scalar_select %p210, %s18, 2
      %p212 = scmp.lt.s32.totalorder %s209, 15
      %s213 = scalar_select %p212, %s209, 15
      %s214 = smul.addr %s211, 16
      %s215 = sadd.s32 %s213, %s214
      %s216 = smul.addr %s215, 4
      %s217 = scalar_lea.vmem %s3, %s216
      %s218 = smul.u32 16, %s19
      %p219 = scmp.lt.s32.totalorder %s18, 2
      %s220 = scalar_select %p219, %s18, 2
      %p221 = scmp.lt.s32.totalorder %s218, 15
      %s222 = scalar_select %p221, %s218, 15
      %s223 = smul.addr %s222, 2
      %s224 = smul.addr %s220, 32
      %s225 = sadd.s32 %s223, %s224
      %s226 = smul.addr %s225, 4
      %s227 = scalar_lea.vmem %s0, %s226
      %s228 = smul.u32 16, %s19
      %p229 = scmp.lt.s32.totalorder %s18, 2
      %s230 = scalar_select %p229, %s18, 2
      %s231 = smul.addr %s230, 18
      %s232 = smul.addr %s231, 4
      %s233 = scalar_lea.vmem %s1, %s232
      %p234 = scmp.lt.s32.totalorder %s18, 2
      %s235 = scalar_select %p234, %s18, 2
      %s236 = scalar_lea.vmem %s2, %s235
      %s237 = smul.u32 16, %s19
      %p238 = scmp.lt.s32.totalorder %s18, 2
      %s239 = scalar_select %p238, %s18, 2
      %p240 = scmp.lt.s32.totalorder %s237, 15
      %s241 = scalar_select %p240, %s237, 15
      %s242 = smul.addr %s239, 16
      %s243 = sadd.s32 %s241, %s242
      %s244 = smul.addr %s243, 4
      %s245 = scalar_lea.vmem %s3, %s244
      %s246 = smul.u32 16, %s19
      %v248 = vld [vmem:[%s227] sm:$0xff]
      %v249 = vld [vmem:[%s227 + $0x8] sm:$0xff]
      %v250 = vld [vmem:[%s227 + $0x10] sm:$0xff]
      %v251 = vld [vmem:[%s227 + $0x18] sm:$0xff]
      %v252 = vld [vmem:[%s227 + $0x20] sm:$0xff]
      %v253 = vld [vmem:[%s227 + $0x28] sm:$0xff]
      %v254 = vld [vmem:[%s227 + $0x30] sm:$0xff]
      %v255 = vld [vmem:[%s227 + $0x38] sm:$0xff]
      %v256 = vld [vmem:[%s227 + $0x40] sm:$0xff]
      %v257 = vld [vmem:[%s227 + $0x48] sm:$0xff]
      %v258 = vld [vmem:[%s227 + $0x50] sm:$0xff]
      %v259 = vld [vmem:[%s227 + $0x58] sm:$0xff]
      %v260 = vld [vmem:[%s227 + $0x60] sm:$0xff]
      %v261 = vld [vmem:[%s227 + $0x68] sm:$0xff]
      %v262 = vld [vmem:[%s227 + $0x70] sm:$0xff]
      %v263 = vld [vmem:[%s227 + $0x78] sm:$0xff]
      %v264 = vld [vmem:[%s233] sm:$0xf]
      %v265 = vld [vmem:[%s233 + $0x4] sm:$0xf]
      %v266 = vld [vmem:[%s233 + $0x8] sm:$0xf]
      %v267 = vld [vmem:[%s233 + $0xc] sm:$0xf]
      %v268 = vld [vmem:[%s233 + $0x10] sm:$0xf]
      %v269 = vld [vmem:[%s233 + $0x14] sm:$0xf]
      %v270 = vld [vmem:[%s233 + $0x18] sm:$0xf]
      %v271 = vld [vmem:[%s233 + $0x1c] sm:$0xf]
      %v272 = vld [vmem:[%s233 + $0x20] sm:$0xf]
      %v273 = vld [vmem:[%s233 + $0x24] sm:$0xf]
      %v274 = vld [vmem:[%s233 + $0x28] sm:$0xf]
      %v275 = vld [vmem:[%s233 + $0x2c] sm:$0xf]
      %v276 = vld [vmem:[%s233 + $0x30] sm:$0xf]
      %v277 = vld [vmem:[%s233 + $0x34] sm:$0xf]
      %v278 = vld [vmem:[%s233 + $0x38] sm:$0xf]
      %v279 = vld [vmem:[%s233 + $0x3c] sm:$0xf]
      %v280 = vld [vmem:[%s233 + $0x40] sm:$0xf]
      %v281 = vld [vmem:[%s233 + $0x44] sm:$0xf]
      %v282 = vld [vmem:[%s236] sm:$0x1]
      %v284 = vlaneseq
      %v285 = vshrl.u32 %v284, 7
      %v286 = vsub.s32 0, %v285
      %v287 = vrot.slane %v282, %v286
      %v305 = vunpack.c.l.b16 %v248
      %v306 = vunpack.c.h.b16 %v248
      %v307 = vunpack.c.l.b16 %v249
      %v308 = vunpack.c.h.b16 %v249
      %v309 = vunpack.c.l.b16 %v250
      %v310 = vunpack.c.h.b16 %v250
      %v311 = vunpack.c.l.b16 %v251
      %v312 = vunpack.c.h.b16 %v251
      %v313 = vunpack.c.l.b16 %v252
      %v314 = vunpack.c.h.b16 %v252
      %v315 = vunpack.c.l.b16 %v253
      %v316 = vunpack.c.h.b16 %v253
      %v317 = vunpack.c.l.b16 %v254
      %v318 = vunpack.c.h.b16 %v254
      %v319 = vunpack.c.l.b16 %v255
      %v320 = vunpack.c.h.b16 %v255
      %v321 = vunpack.c.l.b16 %v256
      %v322 = vunpack.c.h.b16 %v256
      %v323 = vunpack.c.l.b16 %v257
      %v324 = vunpack.c.h.b16 %v257
      %v325 = vunpack.c.l.b16 %v258
      %v326 = vunpack.c.h.b16 %v258
      %v327 = vunpack.c.l.b16 %v259
      %v328 = vunpack.c.h.b16 %v259
      %v329 = vunpack.c.l.b16 %v260
      %v330 = vunpack.c.h.b16 %v260
      %v331 = vunpack.c.l.b16 %v261
      %v332 = vunpack.c.h.b16 %v261
      %v333 = vunpack.c.l.b16 %v262
      %v334 = vunpack.c.h.b16 %v262
      %v335 = vunpack.c.l.b16 %v263
      %v336 = vunpack.c.h.b16 %v263
      %v337 = vpack.c.b16 %v307, %v305
      %v338 = vpack.c.b16 %v308, %v306
      %v339 = vpack.c.b16 %v311, %v309
      %v340 = vpack.c.b16 %v312, %v310
      %v341 = vpack.c.b16 %v315, %v313
      %v342 = vpack.c.b16 %v316, %v314
      %v343 = vpack.c.b16 %v319, %v317
      %v344 = vpack.c.b16 %v320, %v318
      %v345 = vpack.c.b16 %v323, %v321
      %v346 = vpack.c.b16 %v324, %v322
      %v347 = vpack.c.b16 %v327, %v325
      %v348 = vpack.c.b16 %v328, %v326
      %v349 = vpack.c.b16 %v331, %v329
      %v350 = vpack.c.b16 %v332, %v330
      %v351 = vpack.c.b16 %v335, %v333
      %v352 = vpack.c.b16 %v336, %v334
      %v379 = vunpack.c.l.b16 %v264
      %v380 = vunpack.c.l.b16 %v265
      %v381 = vunpack.c.l.b16 %v266
      %v382 = vunpack.c.l.b16 %v267
      %v383 = vunpack.c.l.b16 %v268
      %v384 = vunpack.c.l.b16 %v269
      %v385 = vunpack.c.l.b16 %v270
      %v386 = vunpack.c.l.b16 %v271
      %v387 = vunpack.c.l.b16 %v272
      %v388 = vunpack.c.l.b16 %v273
      %v389 = vunpack.c.l.b16 %v274
      %v390 = vunpack.c.l.b16 %v275
      %v391 = vunpack.c.l.b16 %v276
      %v392 = vunpack.c.l.b16 %v277
      %v393 = vunpack.c.l.b16 %v278
      %v394 = vunpack.c.l.b16 %v279
      %v395 = vunpack.c.l.b16 %v280
      %v396 = vunpack.c.l.b16 %v281
      %v397 = vpack.c.b16 %v380, %v379
      %v398 = vpack.c.b16 %v382, %v381
      %v399 = vpack.c.b16 %v384, %v383
      %v400 = vpack.c.b16 %v386, %v385
      %v401 = vpack.c.b16 %v388, %v387
      %v402 = vpack.c.b16 %v390, %v389
      %v403 = vpack.c.b16 %v392, %v391
      %v404 = vpack.c.b16 %v394, %v393
      %v405 = vpack.c.b16 %v396, %v395
      %vm415 = vcmask 130048
      %v417 = vsel %vm415, %v338, 0
      %v420 = vsel %vm415, %v340, 0
      %v423 = vsel %vm415, %v342, 0
      %v426 = vsel %vm415, %v344, 0
      %v429 = vsel %vm415, %v346, 0
      %v432 = vsel %vm415, %v348, 0
      %v435 = vsel %vm415, %v350, 0
      %v438 = vsel %vm415, %v352, 0
      %440 = vmatprep.subr.bf16.mxu0 0
      %441 = vmatpush1.bf16.msra.mxu0 %v397
      %442 = vmatprep.subr.bf16.mxu0 0
      %443 = vmatpush1.bf16.msra.mxu0 %v398
      %444 = vmatprep.subr.bf16.mxu0 0
      %445 = vmatpush1.bf16.msra.mxu0 %v399
      %446 = vmatprep.subr.bf16.mxu0 0
      %447 = vmatpush1.bf16.msra.mxu0 %v400
      %448 = vmatprep.subr.bf16.mxu0 0
      %449 = vmatpush1.bf16.msra.mxu0 %v401
      %450 = vmatprep.subr.bf16.mxu0 0
      %451 = vmatpush1.bf16.msra.mxu0 %v402
      %452 = vmatprep.subr.bf16.mxu0 0
      %453 = vmatpush1.bf16.msra.mxu0 %v403
      %454 = vmatprep.subr.bf16.mxu0 0
      %455 = vmatpush1.bf16.msra.mxu0 %v404
      %456 = vmatprep.subr.bf16.mxu0 0
      %457 = vmatpush1.bf16.msra.mxu0 %v405
      %458 = vmatprep.subr.bf16.mxu0 0
      %459 = vmatpush1.bf16.msra.mxu0 0
      %460 = vmatprep.subr.bf16.mxu0 0
      %461 = vmatpush1.bf16.msra.mxu0 0
      %462 = vmatprep.subr.bf16.mxu0 0
      %463 = vmatpush1.bf16.msra.mxu0 0
      %464 = vmatprep.subr.bf16.mxu0 0
      %465 = vmatpush1.bf16.msra.mxu0 0
      %466 = vmatprep.subr.bf16.mxu0 0
      %467 = vmatpush1.bf16.msra.mxu0 0
      %468 = vmatprep.subr.bf16.mxu0 0
      %469 = vmatpush1.bf16.msra.mxu0 0
      %470 = vmatprep.subr.bf16.mxu0 0
      %471 = vmatpush1.bf16.msra.mxu0 0
      %472 = vmatprep.mubr.bf16.mxu0 %v417
      %473 = vmatmul.mubr.bf16.gmra.mrb[0].mxu0 %v337
      %v474 = vpop.f32.mrb[0].mxu0
      %v475 = vadd.f32 %v287, %v474
      %v476 = vpop.f32.mrb[0].mxu0
      %v477 = vpop.f32.mrb[0].mxu0
      %v478 = vadd.f32 %v287, %v477
      %v479 = vpop.f32.mrb[0].mxu0
      %480 = vmatprep.mubr.bf16.mxu0 %v420
      %481 = vmatmul.mubr.bf16.gmra.mrb[0].mxu0 %v339
      %v482 = vpop.f32.mrb[0].mxu0
      %v483 = vadd.f32 %v287, %v482
      %v484 = vpop.f32.mrb[0].mxu0
      %v485 = vpop.f32.mrb[0].mxu0
      %v486 = vadd.f32 %v287, %v485
      %v487 = vpop.f32.mrb[0].mxu0
      %488 = vmatprep.mubr.bf16.mxu0 %v423
      %489 = vmatmul.mubr.bf16.gmra.mrb[0].mxu0 %v341
      %v490 = vpop.f32.mrb[0].mxu0
      %v491 = vadd.f32 %v287, %v490
      %v492 = vpop.f32.mrb[0].mxu0
      %v493 = vpop.f32.mrb[0].mxu0
      %v494 = vadd.f32 %v287, %v493
      %v495 = vpop.f32.mrb[0].mxu0
      %496 = vmatprep.mubr.bf16.mxu0 %v426
      %497 = vmatmul.mubr.bf16.gmra.mrb[0].mxu0 %v343
      %v498 = vpop.f32.mrb[0].mxu0
      %v499 = vadd.f32 %v287, %v498
      %v500 = vpop.f32.mrb[0].mxu0
      %v501 = vpop.f32.mrb[0].mxu0
      %v502 = vadd.f32 %v287, %v501
      %v503 = vpop.f32.mrb[0].mxu0
      %504 = vmatprep.mubr.bf16.mxu0 %v429
      %505 = vmatmul.mubr.bf16.gmra.mrb[0].mxu0 %v345
      %v506 = vpop.f32.mrb[0].mxu0
      %v507 = vadd.f32 %v287, %v506
      %v508 = vpop.f32.mrb[0].mxu0
      %v509 = vpop.f32.mrb[0].mxu0
      %v510 = vadd.f32 %v287, %v509
      %v511 = vpop.f32.mrb[0].mxu0
      %512 = vmatprep.mubr.bf16.mxu0 %v432
      %513 = vmatmul.mubr.bf16.gmra.mrb[0].mxu0 %v347
      %v514 = vpop.f32.mrb[0].mxu0
      %v515 = vadd.f32 %v287, %v514
      %v516 = vpop.f32.mrb[0].mxu0
      %v517 = vpop.f32.mrb[0].mxu0
      %v518 = vadd.f32 %v287, %v517
      %v519 = vpop.f32.mrb[0].mxu0
      %520 = vmatprep.mubr.bf16.mxu0 %v435
      %521 = vmatmul.mubr.bf16.gmra.mrb[0].mxu0 %v349
      %v522 = vpop.f32.mrb[0].mxu0
      %v523 = vadd.f32 %v287, %v522
      %v524 = vpop.f32.mrb[0].mxu0
      %v525 = vpop.f32.mrb[0].mxu0
      %v526 = vadd.f32 %v287, %v525
      %v527 = vpop.f32.mrb[0].mxu0
      %528 = vmatprep.mubr.bf16.mxu0 %v438
      %529 = vmatmul.mubr.bf16.gmra.mrb[0].mxu0 %v351
      %v530 = vpop.f32.mrb[0].mxu0
      %v531 = vadd.f32 %v287, %v530
      %v532 = vpop.f32.mrb[0].mxu0
      %v533 = vpop.f32.mrb[0].mxu0
      %v534 = vadd.f32 %v287, %v533
      %v535 = vpop.f32.mrb[0].mxu0
      %536 = vdwg.mxu0
      %vm537 = vcmp.ge.f32.partialorder %v475, 0.0
      %vm538 = vcmp.ge.f32.partialorder %v478, 0.0
      %vm539 = vcmp.ge.f32.partialorder %v483, 0.0
      %vm540 = vcmp.ge.f32.partialorder %v486, 0.0
      %vm541 = vcmp.ge.f32.partialorder %v491, 0.0
      %vm542 = vcmp.ge.f32.partialorder %v494, 0.0
      %vm543 = vcmp.ge.f32.partialorder %v499, 0.0
      %vm544 = vcmp.ge.f32.partialorder %v502, 0.0
      %vm545 = vcmp.ge.f32.partialorder %v507, 0.0
      %vm546 = vcmp.ge.f32.partialorder %v510, 0.0
      %vm547 = vcmp.ge.f32.partialorder %v515, 0.0
      %vm548 = vcmp.ge.f32.partialorder %v518, 0.0
      %vm549 = vcmp.ge.f32.partialorder %v523, 0.0
      %vm550 = vcmp.ge.f32.partialorder %v526, 0.0
      %vm551 = vcmp.ge.f32.partialorder %v531, 0.0
      %vm552 = vcmp.ge.f32.partialorder %v534, 0.0
      %v553 = vmul.f32 %v475, 0.2
      %v554 = vmul.f32 %v478, 0.2
      %v555 = vmul.f32 %v483, 0.2
      %v556 = vmul.f32 %v486, 0.2
      %v557 = vmul.f32 %v491, 0.2
      %v558 = vmul.f32 %v494, 0.2
      %v559 = vmul.f32 %v499, 0.2
      %v560 = vmul.f32 %v502, 0.2
      %v561 = vmul.f32 %v507, 0.2
      %v562 = vmul.f32 %v510, 0.2
      %v563 = vmul.f32 %v515, 0.2
      %v564 = vmul.f32 %v518, 0.2
      %v565 = vmul.f32 %v523, 0.2
      %v566 = vmul.f32 %v526, 0.2
      %v567 = vmul.f32 %v531, 0.2
      %v568 = vmul.f32 %v534, 0.2
      %v569 = vsel %vm537, %v475, %v553
      %v570 = vsel %vm538, %v478, %v554
      %v571 = vsel %vm539, %v483, %v555
      %v572 = vsel %vm540, %v486, %v556
      %v573 = vsel %vm541, %v491, %v557
      %v574 = vsel %vm542, %v494, %v558
      %v575 = vsel %vm543, %v499, %v559
      %v576 = vsel %vm544, %v502, %v560
      %v577 = vsel %vm545, %v507, %v561
      %v578 = vsel %vm546, %v510, %v562
      %v579 = vsel %vm547, %v515, %v563
      %v580 = vsel %vm548, %v518, %v564
      %v581 = vsel %vm549, %v523, %v565
      %v582 = vsel %vm550, %v526, %v566
      %v583 = vsel %vm551, %v531, %v567
      %v584 = vsel %vm552, %v534, %v568
      %v585 = vpack.c.bf16 %v570, %v569
      %v586 = vpack.c.bf16 %v572, %v571
      %v587 = vpack.c.bf16 %v574, %v573
      %v588 = vpack.c.bf16 %v576, %v575
      %v589 = vpack.c.bf16 %v578, %v577
      %v590 = vpack.c.bf16 %v580, %v579
      %v591 = vpack.c.bf16 %v582, %v581
      %v592 = vpack.c.bf16 %v584, %v583
      %v601 = vunpack.c.l.b16 %v585
      %v602 = vunpack.c.h.b16 %v585
      %v603 = vunpack.c.l.b16 %v586
      %v604 = vunpack.c.h.b16 %v586
      %v605 = vunpack.c.l.b16 %v587
      %v606 = vunpack.c.h.b16 %v587
      %v607 = vunpack.c.l.b16 %v588
      %v608 = vunpack.c.h.b16 %v588
      %v609 = vunpack.c.l.b16 %v589
      %v610 = vunpack.c.h.b16 %v589
      %v611 = vunpack.c.l.b16 %v590
      %v612 = vunpack.c.h.b16 %v590
      %v613 = vunpack.c.l.b16 %v591
      %v614 = vunpack.c.h.b16 %v591
      %v615 = vunpack.c.l.b16 %v592
      %v616 = vunpack.c.h.b16 %v592
      %v617 = vpack.c.b16 %v601, %v601
      %v618 = vpack.c.b16 %v602, %v602
      %v619 = vpack.c.b16 %v603, %v603
      %v620 = vpack.c.b16 %v604, %v604
      %v621 = vpack.c.b16 %v605, %v605
      %v622 = vpack.c.b16 %v606, %v606
      %v623 = vpack.c.b16 %v607, %v607
      %v624 = vpack.c.b16 %v608, %v608
      %v625 = vpack.c.b16 %v609, %v609
      %v626 = vpack.c.b16 %v610, %v610
      %v627 = vpack.c.b16 %v611, %v611
      %v628 = vpack.c.b16 %v612, %v612
      %v629 = vpack.c.b16 %v613, %v613
      %v630 = vpack.c.b16 %v614, %v614
      %v631 = vpack.c.b16 %v615, %v615
      %v632 = vpack.c.b16 %v616, %v616
      %vm649 = vcmask 257024
      %650 = vst.msk [vmem:[%s245] sm:$0xf] %vm649, %v617
      %651 = vst.msk [vmem:[%s245 + $0x4] sm:$0xf] %vm649, %v618
      %652 = vst.msk [vmem:[%s245 + $0x8] sm:$0xf] %vm649, %v619
      %653 = vst.msk [vmem:[%s245 + $0xc] sm:$0xf] %vm649, %v620
      %654 = vst.msk [vmem:[%s245 + $0x10] sm:$0xf] %vm649, %v621
      %655 = vst.msk [vmem:[%s245 + $0x14] sm:$0xf] %vm649, %v622
      %656 = vst.msk [vmem:[%s245 + $0x18] sm:$0xf] %vm649, %v623
      %657 = vst.msk [vmem:[%s245 + $0x1c] sm:$0xf] %vm649, %v624
      %658 = vst.msk [vmem:[%s245 + $0x20] sm:$0xf] %vm649, %v625
      %659 = vst.msk [vmem:[%s245 + $0x24] sm:$0xf] %vm649, %v626
      %660 = vst.msk [vmem:[%s245 + $0x28] sm:$0xf] %vm649, %v627
      %661 = vst.msk [vmem:[%s245 + $0x2c] sm:$0xf] %vm649, %v628
      %662 = vst.msk [vmem:[%s245 + $0x30] sm:$0xf] %vm649, %v629
      %663 = vst.msk [vmem:[%s245 + $0x34] sm:$0xf] %vm649, %v630
      %664 = vst.msk [vmem:[%s245 + $0x38] sm:$0xf] %vm649, %v631
      %665 = vst.msk [vmem:[%s245 + $0x3c] sm:$0xf] %vm649, %v632
      %s666 = smul.u32 16, %s19
      %p667 = scmp.lt.s32.totalorder %s18, 2
      %s668 = scalar_select %p667, %s18, 2
      %p669 = scmp.lt.s32.totalorder %s666, 15
      %s670 = scalar_select %p669, %s666, 15
      %s671 = smul.addr %s668, 16
      %s672 = sadd.s32 %s670, %s671
      %s673 = smul.addr %s672, 4
      %s674 = scalar_lea.vmem %s3, %s673
      // Predicated region
      $region33: #{forward.10} parent=31 // pred_check
        %p675 = pneg %p126
      $region34: #{forward.10} parent=31 // pred_check_branch
        %677 = sbr.rel (%p675) target = $region36
      $region35: #{forward.10} parent=31 // pred_region
        %s678 = smul.u32 16, %s19
      $region36: #{forward.10} parent=31 // pred_fallthru
        _
    $region32: #{forward.10} parent=5 // pred_fallthru
      _
    %p679 = scmp.le.s32.totalorder 2, %s9
    // Predicated region
    $region37: #{forward.10} parent=5 // pred_check
      %p680 = pneg %p679
    $region38: #{forward.10} parent=5 // pred_check_branch
      %682 = sbr.rel (%p680) target = $region40
    $region39: #{forward.10} parent=5 // pred_region
      %s683 = ssub.s32 %s9, 2
      // Predicated region
      $region41: #{forward.10} parent=39 // pred_check
        %p684 = pneg %p132
      $region42: #{forward.10} parent=39 // pred_check_branch
        %686 = sbr.rel (%p684) target = $region44
      $region43: #{forward.10} parent=39 // pred_region
        %s687 = smul.u32 16, %s21
        %p688 = scmp.lt.s32.totalorder %s20, 2
        %s689 = scalar_select %p688, %s20, 2
        %p690 = scmp.lt.s32.totalorder %s687, 15
        %s691 = scalar_select %p690, %s687, 15
        %s692 = smul.addr %s689, 16
        %s693 = sadd.s32 %s691, %s692
        %s694 = smul.addr %s693, 4
        %s695 = scalar_lea.vmem %s3, %s694
      $region44: #{forward.10} parent=39 // pred_fallthru
        _
    $region40: #{forward.10} parent=5 // pred_fallthru
      _
  $region6: #{forward.10} parent=0 // loop_footer
    %s13 = sadd.s32 1, %s9
  $region7: #{forward.10} parent=0 // loop_footer_branch
    %8 = sbr.rel target = $region3
  $region8: #{forward.10} parent=0 // loop_exit
    _

// kernel: forward.11
$region0: #{forward.11}
  #allocation0 [shape = 'u32[]', space=smem, size = 0x4, offset = 0x4, fixed_abs, tag = 'smem constant byte address 0x4 - core index']
  #allocation1 [shape = 'u32[144,128]{1,0:T(1,128)}', space=vmem, size = 0x12000, scoped, tag = 'internal scratch']
  %s0 = inlined_call_operand.vmem [shape: bf16[3,32,288], index: 0, kind: input, shape index: {}]
  %s1 = inlined_call_operand.vmem [shape: bf16[3,288,64], index: 1, kind: input, shape index: {}]
  %s2 = inlined_call_operand.vmem [shape: f32[3,1,64], index: 2, kind: input, shape index: {}]
  %s3 = inlined_call_operand.vmem [shape: bf16[3,32,64], index: 3, kind: output, shape index: {}]
  %s4 = sld [smem:[#allocation0]]
  $region45: #{forward.11} parent=0
    _
  %s6 = ssub.s32 1, %s4
  %s7 = scalar_select 0, %s6, %s4
  loop: start=0, step=1, limit=5
  $region2: #{forward.11} parent=0 // loop_pre_header
    _
  $region3: #{forward.11} parent=0 // loop_header
    %s9 = sphi 0, %s13
    %p10 = scmp.ge.s32.totalorder %s9, 5
    %s16 = sphi 0, %s28
    %s17 = sphi 0, %s24
    %s18 = sphi 0, %s16
    %s19 = sphi 0, %s17
    %s20 = sphi 0, %s18
    %s21 = sphi 0, %s19
    %s33 = sphi 0, %s35
    %s36 = sphi 0, %s33
    %s37 = sphi 0, %s36
    %s53 = sphi 0, %s37
    %s59 = sphi 0, %s61
    %s62 = sphi 0, %s59
    %s63 = sphi 0, %s62
    %s79 = sphi 0, %s63
    %s85 = sphi 0, %s87
    %s88 = sphi 0, %s85
    %s89 = sphi 0, %s88
    %s105 = sphi 0, %s89
    %s113 = sphi 0, %s115
    %s116 = sphi 0, %s113
    %s117 = sphi 0, %s116
    %s133 = sphi 0, %s117
  $region4: #{forward.11} parent=0 // loop_header_branch
    %12 = sbr.rel (%p10) target = $region8
  $region5: #{forward.11} parent=0 // loop_body
    %s14 = ssub.s32 %s9, 1
    %s15 = ssub.s32 %s9, 2
    %s22 = sadd.s32 1, %s17
    %p23 = scmp.ge.s32.totalorder %s22, 1
    %s24 = scalar_select %p23, 0, %s22
    %s25 = sadd.s32 1, %s16
    %s26 = scalar_select %p23, %s25, %s16
    %p27 = scmp.ge.s32.totalorder %s26, 3
    %s28 = scalar_select %p27, 0, %s26
    %s29 = ssub.s32 %s16, %s28
    %s30 = ssub.s32 %s17, %s24
    %s31 = sor.u32 %s29, %s30
    %p32 = scmp.eq.s32.totalorder %s31, 0
    %s34 = sadd.s32 %s33, 1
    %s35 = scalar_select %p32, %s33, %s34
    %p38 = pneg %p32
    %p39 = scmp.eq.s32.totalorder %s9, 2
    %p40 = por %p38, %p39
    %p41 = scmp.ne.s32.totalorder %s33, %s36
    %p42 = scmp.eq.s32.totalorder %s9, 0
    %p43 = por %p41, %p42
    %p44 = scmp.ne.s32.totalorder %s33, %s36
    %p45 = scmp.eq.s32.totalorder %s14, 2
    %p46 = por %p44, %p45
    %p47 = scmp.ne.s32.totalorder %s36, %s37
    %p48 = scmp.eq.s32.totalorder %s14, 0
    %p49 = por %p47, %p48
    %p50 = scmp.ne.s32.totalorder %s36, %s37
    %p51 = scmp.eq.s32.totalorder %s15, 2
    %p52 = por %p50, %p51
    %p54 = scmp.ne.s32.totalorder %s37, %s53
    %p55 = scmp.eq.s32.totalorder %s15, 0
    %p56 = por %p54, %p55
    %s57 = ssub.s32 %s16, %s28
    %p58 = scmp.eq.s32.totalorder %s57, 0
    %s60 = sadd.s32 %s59, 1
    %s61 = scalar_select %p58, %s59, %s60
    %p64 = pneg %p58
    %p65 = scmp.eq.s32.totalorder %s9, 2
    %p66 = por %p64, %p65
    %p67 = scmp.ne.s32.totalorder %s59, %s62
    %p68 = scmp.eq.s32.totalorder %s9, 0
    %p69 = por %p67, %p68
    %p70 = scmp.ne.s32.totalorder %s59, %s62
    %p71 = scmp.eq.s32.totalorder %s14, 2
    %p72 = por %p70, %p71
    %p73 = scmp.ne.s32.totalorder %s62, %s63
    %p74 = scmp.eq.s32.totalorder %s14, 0
    %p75 = por %p73, %p74
    %p76 = scmp.ne.s32.totalorder %s62, %s63
    %p77 = scmp.eq.s32.totalorder %s15, 2
    %p78 = por %p76, %p77
    %p80 = scmp.ne.s32.totalorder %s63, %s79
    %p81 = scmp.eq.s32.totalorder %s15, 0
    %p82 = por %p80, %p81
    %s83 = ssub.s32 %s16, %s28
    %p84 = scmp.eq.s32.totalorder %s83, 0
    %s86 = sadd.s32 %s85, 1
    %s87 = scalar_select %p84, %s85, %s86
    %p90 = pneg %p84
    %p91 = scmp.eq.s32.totalorder %s9, 2
    %p92 = por %p90, %p91
    %p93 = scmp.ne.s32.totalorder %s85, %s88
    %p94 = scmp.eq.s32.totalorder %s9, 0
    %p95 = por %p93, %p94
    %p96 = scmp.ne.s32.totalorder %s85, %s88
    %p97 = scmp.eq.s32.totalorder %s14, 2
    %p98 = por %p96, %p97
    %p99 = scmp.ne.s32.totalorder %s88, %s89
    %p100 = scmp.eq.s32.totalorder %s14, 0
    %p101 = por %p99, %p100
    %p102 = scmp.ne.s32.totalorder %s88, %s89
    %p103 = scmp.eq.s32.totalorder %s15, 2
    %p104 = por %p102, %p103
    %p106 = scmp.ne.s32.totalorder %s89, %s105
    %p107 = scmp.eq.s32.totalorder %s15, 0
    %p108 = por %p106, %p107
    %s109 = ssub.s32 %s16, %s28
    %s110 = ssub.s32 %s17, %s24
    %s111 = sor.u32 %s109, %s110
    %p112 = scmp.eq.s32.totalorder %s111, 0
    %s114 = sadd.s32 %s113, 1
    %s115 = scalar_select %p112, %s113, %s114
    %p118 = pneg %p112
    %p119 = scmp.eq.s32.totalorder %s9, 2
    %p120 = por %p118, %p119
    %p121 = scmp.ne.s32.totalorder %s113, %s116
    %p122 = scmp.eq.s32.totalorder %s9, 0
    %p123 = por %p121, %p122
    %p124 = scmp.ne.s32.totalorder %s113, %s116
    %p125 = scmp.eq.s32.totalorder %s14, 2
    %p126 = por %p124, %p125
    %p127 = scmp.ne.s32.totalorder %s116, %s117
    %p128 = scmp.eq.s32.totalorder %s14, 0
    %p129 = por %p127, %p128
    %p130 = scmp.ne.s32.totalorder %s116, %s117
    %p131 = scmp.eq.s32.totalorder %s15, 2
    %p132 = por %p130, %p131
    %p134 = scmp.ne.s32.totalorder %s117, %s133
    %p135 = scmp.eq.s32.totalorder %s15, 0
    %p136 = por %p134, %p135
    %p137 = scmp.le.s32.totalorder 1, %s9
    %p138 = scmp.lt.s32.totalorder %s9, 4
    %p139 = pnand %p137, %p138
    %p140 = pneg %p139
    // Predicated region
    $region9: #{forward.11} parent=5 // pred_check
      _
    $region10: #{forward.11} parent=5 // pred_check_branch
      %142 = sbr.rel (%p139) target = $region12
    $region11: #{forward.11} parent=5 // pred_region
      %s143 = ssub.s32 %s9, 1
    $region12: #{forward.11} parent=5 // pred_fallthru
      _
    %p144 = scmp.lt.s32.totalorder %s9, 3
    // Predicated region
    $region13: #{forward.11} parent=5 // pred_check
      %p145 = pneg %p144
    $region14: #{forward.11} parent=5 // pred_check_branch
      %147 = sbr.rel (%p145) target = $region16
    $region15: #{forward.11} parent=5 // pred_region
      // Predicated region
      $region17: #{forward.11} parent=15 // pred_check
        %p148 = pneg %p43
      $region18: #{forward.11} parent=15 // pred_check_branch
        %150 = sbr.rel (%p148) target = $region20
      $region19: #{forward.11} parent=15 // pred_region
        %s151 = smul.u32 4, %s17
        %p152 = scmp.lt.s32.totalorder %s16, 2
        %s153 = scalar_select %p152, %s16, 2
        %p154 = scmp.lt.s32.totalorder %s151, 3
        %s155 = scalar_select %p154, %s151, 3
        %s156 = smul.addr %s155, 3
        %s157 = smul.addr %s153, 12
        %s158 = sadd.s32 %s156, %s157
        %s159 = smul.addr %s158, 4
        %s160 = scalar_lea.vmem %s0, %s159
        %s161 = smul.u32 4, %s17
      $region20: #{forward.11} parent=15 // pred_fallthru
        _
      // Predicated region
      $region21: #{forward.11} parent=15 // pred_check
        %p162 = pneg %p69
      $region22: #{forward.11} parent=15 // pred_check_branch
        %164 = sbr.rel (%p162) target = $region24
      $region23: #{forward.11} parent=15 // pred_region
        %p165 = scmp.lt.s32.totalorder %s16, 2
        %s166 = scalar_select %p165, %s16, 2
        %s167 = smul.addr %s166, 36
        %s168 = smul.addr %s167, 4
        %s169 = scalar_lea.vmem %s1, %s168
      $region24: #{forward.11} parent=15 // pred_fallthru
        _
      // Predicated region
      $region25: #{forward.11} parent=15 // pred_check
        %p170 = pneg %p95
      $region26: #{forward.11} parent=15 // pred_check_branch
        %172 = sbr.rel (%p170) target = $region28
      $region27: #{forward.11} parent=15 // pred_region
        %p173 = scmp.lt.s32.totalorder %s16, 2
        %s174 = scalar_select %p173, %s16, 2
        %s175 = scalar_lea.vmem %s2, %s174
      $region28: #{forward.11} parent=15 // pred_fallthru
        _
    $region16: #{forward.11} parent=5 // pred_fallthru
      _
    %p176 = scmp.le.s32.totalorder 1, %s9
    %p177 = scmp.lt.s32.totalorder %s9, 4
    %p178 = pnand %p176, %p177
    %p179 = pneg %p178
    // Predicated region
    $region29: #{forward.11} parent=5 // pred_check
      _
    $region30: #{forward.11} parent=5 // pred_check_branch
      %181 = sbr.rel (%p178) target = $region32
    $region31: #{forward.11} parent=5 // pred_region
      %s182 = ssub.s32 %s9, 1
      %s183 = smul.u32 4, %s19
      %p184 = scmp.lt.s32.totalorder %s18, 2
      %s185 = scalar_select %p184, %s18, 2
      %p186 = scmp.lt.s32.totalorder %s183, 3
      %s187 = scalar_select %p186, %s183, 3
      %s188 = smul.addr %s187, 3
      %s189 = smul.addr %s185, 12
      %s190 = sadd.s32 %s188, %s189
      %s191 = smul.addr %s190, 4
      %s192 = scalar_lea.vmem %s0, %s191
      %p193 = pneg %p49
      %p194 = pneg %p46
      %p195 = scmp.lt.s32.totalorder %s18, 2
      %s196 = scalar_select %p195, %s18, 2
      %s197 = smul.addr %s196, 36
      %s198 = smul.addr %s197, 4
      %s199 = scalar_lea.vmem %s1, %s198
      %p200 = pneg %p75
      %p201 = pneg %p72
      %p202 = scmp.lt.s32.totalorder %s18, 2
      %s203 = scalar_select %p202, %s18, 2
      %s204 = scalar_lea.vmem %s2, %s203
      %p205 = pneg %p101
      %p206 = pneg %p98
      %p207 = pneg %p129
      %p208 = pneg %p126
      %s209 = smul.u32 4, %s19
      %p210 = scmp.lt.s32.totalorder %s18, 2
      %s211 = scalar_select %p210, %s18, 2
      %p212 = scmp.lt.s32.totalorder %s209, 3
      %s213 = scalar_select %p212, %s209, 3
      %s214 = smul.addr %s211, 4
      %s215 = sadd.s32 %s213, %s214
      %s216 = smul.addr %s215, 4
      %s217 = scalar_lea.vmem %s3, %s216
      %s218 = smul.u32 4, %s19
      %p219 = scmp.lt.s32.totalorder %s18, 2
      %s220 = scalar_select %p219, %s18, 2
      %p221 = scmp.lt.s32.totalorder %s218, 3
      %s222 = scalar_select %p221, %s218, 3
      %s223 = smul.addr %s222, 3
      %s224 = smul.addr %s220, 12
      %s225 = sadd.s32 %s223, %s224
      %s226 = smul.addr %s225, 4
      %s227 = scalar_lea.vmem %s0, %s226
      %s228 = smul.u32 4, %s19
      %p229 = scmp.lt.s32.totalorder %s18, 2
      %s230 = scalar_select %p229, %s18, 2
      %s231 = smul.addr %s230, 36
      %s232 = smul.addr %s231, 4
      %s233 = scalar_lea.vmem %s1, %s232
      %p234 = scmp.lt.s32.totalorder %s18, 2
      %s235 = scalar_select %p234, %s18, 2
      %s236 = scalar_lea.vmem %s2, %s235
      %s237 = smul.u32 4, %s19
      %p238 = scmp.lt.s32.totalorder %s18, 2
      %s239 = scalar_select %p238, %s18, 2
      %p240 = scmp.lt.s32.totalorder %s237, 3
      %s241 = scalar_select %p240, %s237, 3
      %s242 = smul.addr %s239, 4
      %s243 = sadd.s32 %s241, %s242
      %s244 = smul.addr %s243, 4
      %s245 = scalar_lea.vmem %s3, %s244
      %s246 = smul.u32 4, %s19
      %v248 = vld [vmem:[%s227] sm:$0xff]
      %v249 = vld [vmem:[%s227 + $0x8] sm:$0xf]
      %v250 = vld [vmem:[%s227 + $0xc] sm:$0xff]
      %v251 = vld [vmem:[%s227 + $0x14] sm:$0xf]
      %v252 = vld [vmem:[%s227 + $0x18] sm:$0xff]
      %v253 = vld [vmem:[%s227 + $0x20] sm:$0xf]
      %v254 = vld [vmem:[%s227 + $0x24] sm:$0xff]
      %v255 = vld [vmem:[%s227 + $0x2c] sm:$0xf]
      %v256 = vld [vmem:[%s233] sm:$0xf]
      %v257 = vld [vmem:[%s233 + $0x4] sm:$0xf]
      %v258 = vld [vmem:[%s233 + $0x8] sm:$0xf]
      %v259 = vld [vmem:[%s233 + $0xc] sm:$0xf]
      %v260 = vld [vmem:[%s233 + $0x10] sm:$0xf]
      %v261 = vld [vmem:[%s233 + $0x14] sm:$0xf]
      %v262 = vld [vmem:[%s233 + $0x18] sm:$0xf]
      %v263 = vld [vmem:[%s233 + $0x1c] sm:$0xf]
      %v264 = vld [vmem:[%s233 + $0x20] sm:$0xf]
      %v265 = vld [vmem:[%s233 + $0x24] sm:$0xf]
      %v266 = vld [vmem:[%s233 + $0x28] sm:$0xf]
      %v267 = vld [vmem:[%s233 + $0x2c] sm:$0xf]
      %v268 = vld [vmem:[%s233 + $0x30] sm:$0xf]
      %v269 = vld [vmem:[%s233 + $0x34] sm:$0xf]
      %v270 = vld [vmem:[%s233 + $0x38] sm:$0xf]
      %v271 = vld [vmem:[%s233 + $0x3c] sm:$0xf]
      %v272 = vld [vmem:[%s233 + $0x40] sm:$0xf]
      %v273 = vld [vmem:[%s233 + $0x44] sm:$0xf]
      %v274 = vld [vmem:[%s233 + $0x48] sm:$0xf]
      %v275 = vld [vmem:[%s233 + $0x4c] sm:$0xf]
      %v276 = vld [vmem:[%s233 + $0x50] sm:$0xf]
      %v277 = vld [vmem:[%s233 + $0x54] sm:$0xf]
      %v278 = vld [vmem:[%s233 + $0x58] sm:$0xf]
      %v279 = vld [vmem:[%s233 + $0x5c] sm:$0xf]
      %v280 = vld [vmem:[%s233 + $0x60] sm:$0xf]
      %v281 = vld [vmem:[%s233 + $0x64] sm:$0xf]
      %v282 = vld [vmem:[%s233 + $0x68] sm:$0xf]
      %v283 = vld [vmem:[%s233 + $0x6c] sm:$0xf]
      %v284 = vld [vmem:[%s233 + $0x70] sm:$0xf]
      %v285 = vld [vmem:[%s233 + $0x74] sm:$0xf]
      %v286 = vld [vmem:[%s233 + $0x78] sm:$0xf]
      %v287 = vld [vmem:[%s233 + $0x7c] sm:$0xf]
      %v288 = vld [vmem:[%s233 + $0x80] sm:$0xf]
      %v289 = vld [vmem:[%s233 + $0x84] sm:$0xf]
      %v290 = vld [vmem:[%s233 + $0x88] sm:$0xf]
      %v291 = vld [vmem:[%s233 + $0x8c] sm:$0xf]
      %v292 = vld [vmem:[%s236] sm:$0x1]
      %v294 = vlaneseq
      %v295 = vshrl.u32 %v294, 7
      %v296 = vsub.s32 0, %v295
      %v297 = vrot.slane %v292, %v296
      %v307 = vunpack.c.l.b16 %v248
      %v308 = vunpack.c.h.b16 %v248
      %v309 = vunpack.c.l.b16 %v249
      %v310 = vunpack.c.l.b16 %v250
      %v311 = vunpack.c.h.b16 %v250
      %v312 = vunpack.c.l.b16 %v251
      %v313 = vunpack.c.l.b16 %v252
      %v314 = vunpack.c.h.b16 %v252
      %v315 = vunpack.c.l.b16 %v253
      %v316 = vunpack.c.l.b16 %v254
      %v317 = vunpack.c.h.b16 %v254
      %v318 = vunpack.c.l.b16 %v255
      %v319 = vpack.c.b16 %v310, %v307
      %v320 = vpack.c.b16 %v311, %v308
      %v321 = vpack.c.b16 %v312, %v309
      %v322 = vpack.c.b16 %v316, %v313
      %v323 = vpack.c.b16 %v317, %v314
      %v324 = vpack.c.b16 %v318, %v315
      %v365 = vunpack.c.l.b16 %v256
      %v366 = vunpack.c.l.b16 %v257
      %v367 = vunpack.c.l.b16 %v258
      %v368 = vunpack.c.l.b16 %v259
      %v369 = vunpack.c.l.b16 %v260
      %v370 = vunpack.c.l.b16 %v261
      %v371 = vunpack.c.l.b16 %v262
      %v372 = vunpack.c.l.b16 %v263
      %v373 = vunpack.c.l.b16 %v264
      %v374 = vunpack.c.l.b16 %v265
      %v375 = vunpack.c.l.b16 %v266
      %v376 = vunpack.c.l.b16 %v267
      %v377 = vunpack.c.l.b16 %v268
      %v378 = vunpack.c.l.b16 %v269
      %v379 = vunpack.c.l.b16 %v270
      %v380 = vunpack.c.l.b16 %v271
      %v381 = vunpack.c.l.b16 %v272
      %v382 = vunpack.c.l.b16 %v273
      %v383 = vunpack.c.l.b16 %v274
      %v384 = vunpack.c.l.b16 %v275
      %v385 = vunpack.c.l.b16 %v276
      %v386 = vunpack.c.l.b16 %v277
      %v387 = vunpack.c.l.b16 %v278
      %v388 = vunpack.c.l.b16 %v279
      %v389 = vunpack.c.l.b16 %v280
      %v390 = vunpack.c.l.b16 %v281
      %v391 = vunpack.c.l.b16 %v282
      %v392 = vunpack.c.l.b16 %v283
      %v393 = vunpack.c.l.b16 %v284
      %v394 = vunpack.c.l.b16 %v285
      %v395 = vunpack.c.l.b16 %v286
      %v396 = vunpack.c.l.b16 %v287
      %v397 = vunpack.c.l.b16 %v288
      %v398 = vunpack.c.l.b16 %v289
      %v399 = vunpack.c.l.b16 %v290
      %v400 = vunpack.c.l.b16 %v291
      %v401 = vpack.c.b16 %v366, %v365
      %v402 = vpack.c.b16 %v368, %v367
      %v403 = vpack.c.b16 %v370, %v369
      %v404 = vpack.c.b16 %v372, %v371
      %v405 = vpack.c.b16 %v374, %v373
      %v406 = vpack.c.b16 %v376, %v375
      %v407 = vpack.c.b16 %v378, %v377
      %v408 = vpack.c.b16 %v380, %v379
      %v409 = vpack.c.b16 %v382, %v381
      %v410 = vpack.c.b16 %v384, %v383
      %v411 = vpack.c.b16 %v386, %v385
      %v412 = vpack.c.b16 %v388, %v387
      %v413 = vpack.c.b16 %v390, %v389
      %v414 = vpack.c.b16 %v392, %v391
      %v415 = vpack.c.b16 %v394, %v393
      %v416 = vpack.c.b16 %v396, %v395
      %v417 = vpack.c.b16 %v398, %v397
      %v418 = vpack.c.b16 %v400, %v399
      %vm437 = vcmask 261120
      %v439 = vsel %vm437, %v321, 0
      %v442 = vsel %vm437, %v324, 0
      %444 = vmatprep.subr.bf16.mxu0 0
      %445 = vmatpush1.bf16.msra.mxu0 %v401
      %446 = vmatprep.subr.bf16.mxu0 0
      %447 = vmatpush1.bf16.msra.mxu0 %v402
      %448 = vmatprep.subr.bf16.mxu0 0
      %449 = vmatpush1.bf16.msra.mxu0 %v403
      %450 = vmatprep.subr.bf16.mxu0 0
      %451 = vmatpush1.bf16.msra.mxu0 %v404
      %452 = vmatprep.subr.bf16.mxu0 0
      %453 = vmatpush1.bf16.msra.mxu0 %v405
      %454 = vmatprep.subr.bf16.mxu0 0
      %455 = vmatpush1.bf16.msra.mxu0 %v406
      %456 = vmatprep.subr.bf16.mxu0 0
      %457 = vmatpush1.bf16.msra.mxu0 %v407
      %458 = vmatprep.subr.bf16.mxu0 0
      %459 = vmatpush1.bf16.msra.mxu0 %v408
      %460 = vmatprep.subr.bf16.mxu0 0
      %461 = vmatpush1.bf16.msra.mxu0 %v409
      %462 = vmatprep.subr.bf16.mxu0 0
      %463 = vmatpush1.bf16.msra.mxu0 %v410
      %464 = vmatprep.subr.bf16.mxu0 0
      %465 = vmatpush1.bf16.msra.mxu0 %v411
      %466 = vmatprep.subr.bf16.mxu0 0
      %467 = vmatpush1.bf16.msra.mxu0 %v412
      %468 = vmatprep.subr.bf16.mxu0 0
      %469 = vmatpush1.bf16.msra.mxu0 %v413
      %470 = vmatprep.subr.bf16.mxu0 0
      %471 = vmatpush1.bf16.msra.mxu0 %v414
      %472 = vmatprep.subr.bf16.mxu0 0
      %473 = vmatpush1.bf16.msra.mxu0 %v415
      %474 = vmatprep.subr.bf16.mxu0 0
      %475 = vmatpush1.bf16.msra.mxu0 %v416
      %476 = vmatprep.mubr.bf16.mxu0 %v320
      %477 = vmatmul.mubr.bf16.gmra.mrb[0].mxu0 %v319
      %v478 = vpop.f32.mrb[0].mxu0
      %v479 = vadd.f32 %v297, %v478
      %v480 = vpop.f32.mrb[0].mxu0
      %v481 = vpop.f32.mrb[0].mxu0
      %v482 = vadd.f32 %v297, %v481
      %v483 = vpop.f32.mrb[0].mxu0
      %484 = vmatprep.mubr.bf16.mxu0 %v323
      %485 = vmatmul.mubr.bf16.gmra.mrb[0].mxu0 %v322
      %v486 = vpop.f32.mrb[0].mxu0
      %v487 = vadd.f32 %v297, %v486
      %v488 = vpop.f32.mrb[0].mxu0
      %v489 = vpop.f32.mrb[0].mxu0
      %v490 = vadd.f32 %v297, %v489
      %v491 = vpop.f32.mrb[0].mxu0
      %492 = vdwg.mxu0
      %493 = vmatprep.subr.bf16.mxu0 0
      %494 = vmatpush1.bf16.msra.mxu0 %v417
      %495 = vmatprep.subr.bf16.mxu0 0
      %496 = vmatpush1.bf16.msra.mxu0 %v418
      %497 = vmatprep.subr.bf16.mxu0 0
      %498 = vmatpush1.bf16.msra.mxu0 0
      %499 = vmatprep.subr.bf16.mxu0 0
      %500 = vmatpush1.bf16.msra.mxu0 0
      %501 = vmatprep.subr.bf16.mxu0 0
      %502 = vmatpush1.bf16.msra.mxu0 0
      %503 = vmatprep.subr.bf16.mxu0 0
      %504 = vmatpush1.bf16.msra.mxu0 0
      %505 = vmatprep.subr.bf16.mxu0 0
      %506 = vmatpush1.bf16.msra.mxu0 0
      %507 = vmatprep.subr.bf16.mxu0 0
      %508 = vmatpush1.bf16.msra.mxu0 0
      %509 = vmatprep.subr.bf16.mxu0 0
      %510 = vmatpush1.bf16.msra.mxu0 0
      %511 = vmatprep.subr.bf16.mxu0 0
      %512 = vmatpush1.bf16.msra.mxu0 0
      %513 = vmatprep.subr.bf16.mxu0 0
      %514 = vmatpush1.bf16.msra.mxu0 0
      %515 = vmatprep.subr.bf16.mxu0 0
      %516 = vmatpush1.bf16.msra.mxu0 0
      %517 = vmatprep.subr.bf16.mxu0 0
      %518 = vmatpush1.bf16.msra.mxu0 0
      %519 = vmatprep.subr.bf16.mxu0 0
      %520 = vmatpush1.bf16.msra.mxu0 0
      %521 = vmatprep.subr.bf16.mxu0 0
      %522 = vmatpush1.bf16.msra.mxu0 0
      %523 = vmatprep.subr.bf16.mxu0 0
      %524 = vmatpush1.bf16.msra.mxu0 0
      %525 = vmatprep.mubr.bf16.mxu0 0
      %526 = vmatmul.mubr.bf16.gmra.mrb[0].mxu0 %v439
      %v527 = vpop.f32.mrb[0].mxu0
      %v528 = vadd.f32 %v479, %v527
      %v529 = vpop.f32.mrb[0].mxu0
      %v530 = vpop.f32.mrb[0].mxu0
      %v531 = vadd.f32 %v482, %v530
      %v532 = vpop.f32.mrb[0].mxu0
      %533 = vmatprep.mubr.bf16.mxu0 0
      %534 = vmatmul.mubr.bf16.gmra.mrb[0].mxu0 %v442
      %v535 = vpop.f32.mrb[0].mxu0
      %v536 = vadd.f32 %v487, %v535
      %v537 = vpop.f32.mrb[0].mxu0
      %v538 = vpop.f32.mrb[0].mxu0
      %v539 = vadd.f32 %v490, %v538
      %v540 = vpop.f32.mrb[0].mxu0
      %541 = vdwg.mxu0
      %vm542 = vcmp.ge.f32.partialorder %v528, 0.0
      %vm543 = vcmp.ge.f32.partialorder %v531, 0.0
      %vm544 = vcmp.ge.f32.partialorder %v536, 0.0
      %vm545 = vcmp.ge.f32.partialorder %v539, 0.0
      %v546 = vmul.f32 %v528, 0.2
      %v547 = vmul.f32 %v531, 0.2
      %v548 = vmul.f32 %v536, 0.2
      %v549 = vmul.f32 %v539, 0.2
      %v550 = vsel %vm542, %v528, %v546
      %v551 = vsel %vm543, %v531, %v547
      %v552 = vsel %vm544, %v536, %v548
      %v553 = vsel %vm545, %v539, %v549
      %v554 = vpack.c.bf16 %v551, %v550
      %v555 = vpack.c.bf16 %v553, %v552
      %v558 = vunpack.c.l.b16 %v554
      %v559 = vunpack.c.h.b16 %v554
      %v560 = vunpack.c.l.b16 %v555
      %v561 = vunpack.c.h.b16 %v555
      %v562 = vpack.c.b16 %v558, %v558
      %v563 = vpack.c.b16 %v559, %v559
      %v564 = vpack.c.b16 %v560, %v560
      %v565 = vpack.c.b16 %v561, %v561
      %vm570 = vcmask 519168
      %571 = vst.msk [vmem:[%s245] sm:$0xf] %vm570, %v562
      %572 = vst.msk [vmem:[%s245 + $0x4] sm:$0xf] %vm570, %v563
      %573 = vst.msk [vmem:[%s245 + $0x8] sm:$0xf] %vm570, %v564
      %574 = vst.msk [vmem:[%s245 + $0xc] sm:$0xf] %vm570, %v565
      %s575 = smul.u32 4, %s19
      %p576 = scmp.lt.s32.totalorder %s18, 2
      %s577 = scalar_select %p576, %s18, 2
      %p578 = scmp.lt.s32.totalorder %s575, 3
      %s579 = scalar_select %p578, %s575, 3
      %s580 = smul.addr %s577, 4
      %s581 = sadd.s32 %s579, %s580
      %s582 = smul.addr %s581, 4
      %s583 = scalar_lea.vmem %s3, %s582
      // Predicated region
      $region33: #{forward.11} parent=31 // pred_check
        %p584 = pneg %p126
      $region34: #{forward.11} parent=31 // pred_check_branch
        %586 = sbr.rel (%p584) target = $region36
      $region35: #{forward.11} parent=31 // pred_region
        %s587 = smul.u32 4, %s19
      $region36: #{forward.11} parent=31 // pred_fallthru
        _
    $region32: #{forward.11} parent=5 // pred_fallthru
      _
    %p588 = scmp.le.s32.totalorder 2, %s9
    // Predicated region
    $region37: #{forward.11} parent=5 // pred_check
      %p589 = pneg %p588
    $region38: #{forward.11} parent=5 // pred_check_branch
      %591 = sbr.rel (%p589) target = $region40
    $region39: #{forward.11} parent=5 // pred_region
      %s592 = ssub.s32 %s9, 2
      // Predicated region
      $region41: #{forward.11} parent=39 // pred_check
        %p593 = pneg %p132
      $region42: #{forward.11} parent=39 // pred_check_branch
        %595 = sbr.rel (%p593) target = $region44
      $region43: #{forward.11} parent=39 // pred_region
        %s596 = smul.u32 4, %s21
        %p597 = scmp.lt.s32.totalorder %s20, 2
        %s598 = scalar_select %p597, %s20, 2
        %p599 = scmp.lt.s32.totalorder %s596, 3
        %s600 = scalar_select %p599, %s596, 3
        %s601 = smul.addr %s598, 4
        %s602 = sadd.s32 %s600, %s601
        %s603 = smul.addr %s602, 4
        %s604 = scalar_lea.vmem %s3, %s603
      $region44: #{forward.11} parent=39 // pred_fallthru
        _
    $region40: #{forward.11} parent=5 // pred_fallthru
      _
  $region6: #{forward.11} parent=0 // loop_footer
    %s13 = sadd.s32 1, %s9
  $region7: #{forward.11} parent=0 // loop_footer_branch
    %8 = sbr.rel target = $region3
  $region8: #{forward.11} parent=0 // loop_exit
    _

// kernel: forward.12
$region0: #{forward.12}
  #allocation0 [shape = 'u32[]', space=smem, size = 0x4, offset = 0x4, fixed_abs, tag = 'smem constant byte address 0x4 - core index']
  #allocation1 [shape = 'u32[144,128]{1,0:T(1,128)}', space=vmem, size = 0x12000, scoped, tag = 'internal scratch']
  %s0 = inlined_call_operand.vmem [shape: bf16[3,16,576], index: 0, kind: input, shape index: {}]
  %s1 = inlined_call_operand.vmem [shape: bf16[3,576,128], index: 1, kind: input, shape index: {}]
  %s2 = inlined_call_operand.vmem [shape: f32[3,1,128], index: 2, kind: input, shape index: {}]
  %s3 = inlined_call_operand.vmem [shape: bf16[3,16,128], index: 3, kind: output, shape index: {}]
  %s4 = sld [smem:[#allocation0]]
  $region45: #{forward.12} parent=0
    _
  %s6 = ssub.s32 1, %s4
  %s7 = scalar_select 0, %s6, %s4
  loop: start=0, step=1, limit=5
  $region2: #{forward.12} parent=0 // loop_pre_header
    _
  $region3: #{forward.12} parent=0 // loop_header
    %s9 = sphi 0, %s13
    %p10 = scmp.ge.s32.totalorder %s9, 5
    %s16 = sphi 0, %s28
    %s17 = sphi 0, %s24
    %s18 = sphi 0, %s16
    %s19 = sphi 0, %s17
    %s20 = sphi 0, %s18
    %s21 = sphi 0, %s19
    %s33 = sphi 0, %s35
    %s36 = sphi 0, %s33
    %s37 = sphi 0, %s36
    %s53 = sphi 0, %s37
    %s59 = sphi 0, %s61
    %s62 = sphi 0, %s59
    %s63 = sphi 0, %s62
    %s79 = sphi 0, %s63
    %s85 = sphi 0, %s87
    %s88 = sphi 0, %s85
    %s89 = sphi 0, %s88
    %s105 = sphi 0, %s89
    %s113 = sphi 0, %s115
    %s116 = sphi 0, %s113
    %s117 = sphi 0, %s116
    %s133 = sphi 0, %s117
  $region4: #{forward.12} parent=0 // loop_header_branch
    %12 = sbr.rel (%p10) target = $region8
  $region5: #{forward.12} parent=0 // loop_body
    %s14 = ssub.s32 %s9, 1
    %s15 = ssub.s32 %s9, 2
    %s22 = sadd.s32 1, %s17
    %p23 = scmp.ge.s32.totalorder %s22, 1
    %s24 = scalar_select %p23, 0, %s22
    %s25 = sadd.s32 1, %s16
    %s26 = scalar_select %p23, %s25, %s16
    %p27 = scmp.ge.s32.totalorder %s26, 3
    %s28 = scalar_select %p27, 0, %s26
    %s29 = ssub.s32 %s16, %s28
    %s30 = ssub.s32 %s17, %s24
    %s31 = sor.u32 %s29, %s30
    %p32 = scmp.eq.s32.totalorder %s31, 0
    %s34 = sadd.s32 %s33, 1
    %s35 = scalar_select %p32, %s33, %s34
    %p38 = pneg %p32
    %p39 = scmp.eq.s32.totalorder %s9, 2
    %p40 = por %p38, %p39
    %p41 = scmp.ne.s32.totalorder %s33, %s36
    %p42 = scmp.eq.s32.totalorder %s9, 0
    %p43 = por %p41, %p42
    %p44 = scmp.ne.s32.totalorder %s33, %s36
    %p45 = scmp.eq.s32.totalorder %s14, 2
    %p46 = por %p44, %p45
    %p47 = scmp.ne.s32.totalorder %s36, %s37
    %p48 = scmp.eq.s32.totalorder %s14, 0
    %p49 = por %p47, %p48
    %p50 = scmp.ne.s32.totalorder %s36, %s37
    %p51 = scmp.eq.s32.totalorder %s15, 2
    %p52 = por %p50, %p51
    %p54 = scmp.ne.s32.totalorder %s37, %s53
    %p55 = scmp.eq.s32.totalorder %s15, 0
    %p56 = por %p54, %p55
    %s57 = ssub.s32 %s16, %s28
    %p58 = scmp.eq.s32.totalorder %s57, 0
    %s60 = sadd.s32 %s59, 1
    %s61 = scalar_select %p58, %s59, %s60
    %p64 = pneg %p58
    %p65 = scmp.eq.s32.totalorder %s9, 2
    %p66 = por %p64, %p65
    %p67 = scmp.ne.s32.totalorder %s59, %s62
    %p68 = scmp.eq.s32.totalorder %s9, 0
    %p69 = por %p67, %p68
    %p70 = scmp.ne.s32.totalorder %s59, %s62
    %p71 = scmp.eq.s32.totalorder %s14, 2
    %p72 = por %p70, %p71
    %p73 = scmp.ne.s32.totalorder %s62, %s63
    %p74 = scmp.eq.s32.totalorder %s14, 0
    %p75 = por %p73, %p74
    %p76 = scmp.ne.s32.totalorder %s62, %s63
    %p77 = scmp.eq.s32.totalorder %s15, 2
    %p78 = por %p76, %p77
    %p80 = scmp.ne.s32.totalorder %s63, %s79
    %p81 = scmp.eq.s32.totalorder %s15, 0
    %p82 = por %p80, %p81
    %s83 = ssub.s32 %s16, %s28
    %p84 = scmp.eq.s32.totalorder %s83, 0
    %s86 = sadd.s32 %s85, 1
    %s87 = scalar_select %p84, %s85, %s86
    %p90 = pneg %p84
    %p91 = scmp.eq.s32.totalorder %s9, 2
    %p92 = por %p90, %p91
    %p93 = scmp.ne.s32.totalorder %s85, %s88
    %p94 = scmp.eq.s32.totalorder %s9, 0
    %p95 = por %p93, %p94
    %p96 = scmp.ne.s32.totalorder %s85, %s88
    %p97 = scmp.eq.s32.totalorder %s14, 2
    %p98 = por %p96, %p97
    %p99 = scmp.ne.s32.totalorder %s88, %s89
    %p100 = scmp.eq.s32.totalorder %s14, 0
    %p101 = por %p99, %p100
    %p102 = scmp.ne.s32.totalorder %s88, %s89
    %p103 = scmp.eq.s32.totalorder %s15, 2
    %p104 = por %p102, %p103
    %p106 = scmp.ne.s32.totalorder %s89, %s105
    %p107 = scmp.eq.s32.totalorder %s15, 0
    %p108 = por %p106, %p107
    %s109 = ssub.s32 %s16, %s28
    %s110 = ssub.s32 %s17, %s24
    %s111 = sor.u32 %s109, %s110
    %p112 = scmp.eq.s32.totalorder %s111, 0
    %s114 = sadd.s32 %s113, 1
    %s115 = scalar_select %p112, %s113, %s114
    %p118 = pneg %p112
    %p119 = scmp.eq.s32.totalorder %s9, 2
    %p120 = por %p118, %p119
    %p121 = scmp.ne.s32.totalorder %s113, %s116
    %p122 = scmp.eq.s32.totalorder %s9, 0
    %p123 = por %p121, %p122
    %p124 = scmp.ne.s32.totalorder %s113, %s116
    %p125 = scmp.eq.s32.totalorder %s14, 2
    %p126 = por %p124, %p125
    %p127 = scmp.ne.s32.totalorder %s116, %s117
    %p128 = scmp.eq.s32.totalorder %s14, 0
    %p129 = por %p127, %p128
    %p130 = scmp.ne.s32.totalorder %s116, %s117
    %p131 = scmp.eq.s32.totalorder %s15, 2
    %p132 = por %p130, %p131
    %p134 = scmp.ne.s32.totalorder %s117, %s133
    %p135 = scmp.eq.s32.totalorder %s15, 0
    %p136 = por %p134, %p135
    %p137 = scmp.le.s32.totalorder 1, %s9
    %p138 = scmp.lt.s32.totalorder %s9, 4
    %p139 = pnand %p137, %p138
    %p140 = pneg %p139
    // Predicated region
    $region9: #{forward.12} parent=5 // pred_check
      _
    $region10: #{forward.12} parent=5 // pred_check_branch
      %142 = sbr.rel (%p139) target = $region12
    $region11: #{forward.12} parent=5 // pred_region
      %s143 = ssub.s32 %s9, 1
    $region12: #{forward.12} parent=5 // pred_fallthru
      _
    %p144 = scmp.lt.s32.totalorder %s9, 3
    // Predicated region
    $region13: #{forward.12} parent=5 // pred_check
      %p145 = pneg %p144
    $region14: #{forward.12} parent=5 // pred_check_branch
      %147 = sbr.rel (%p145) target = $region16
    $region15: #{forward.12} parent=5 // pred_region
      // Predicated region
      $region17: #{forward.12} parent=15 // pred_check
        %p148 = pneg %p43
      $region18: #{forward.12} parent=15 // pred_check_branch
        %150 = sbr.rel (%p148) target = $region20
      $region19: #{forward.12} parent=15 // pred_region
        %s151 = smul.u32 2, %s17
        %p152 = scmp.lt.s32.totalorder %s16, 2
        %s153 = scalar_select %p152, %s16, 2
        %p154 = scmp.lt.s32.totalorder %s151, 1
        %s155 = scalar_select %p154, %s151, 1
        %s156 = smul.addr %s155, 5
        %s157 = smul.addr %s153, 10
        %s158 = sadd.s32 %s156, %s157
        %s159 = smul.addr %s158, 4
        %s160 = scalar_lea.vmem %s0, %s159
        %s161 = smul.u32 2, %s17
      $region20: #{forward.12} parent=15 // pred_fallthru
        _
      // Predicated region
      $region21: #{forward.12} parent=15 // pred_check
        %p162 = pneg %p69
      $region22: #{forward.12} parent=15 // pred_check_branch
        %164 = sbr.rel (%p162) target = $region24
      $region23: #{forward.12} parent=15 // pred_region
        %p165 = scmp.lt.s32.totalorder %s16, 2
        %s166 = scalar_select %p165, %s16, 2
        %s167 = smul.addr %s166, 72
        %s168 = smul.addr %s167, 4
        %s169 = scalar_lea.vmem %s1, %s168
      $region24: #{forward.12} parent=15 // pred_fallthru
        _
      // Predicated region
      $region25: #{forward.12} parent=15 // pred_check
        %p170 = pneg %p95
      $region26: #{forward.12} parent=15 // pred_check_branch
        %172 = sbr.rel (%p170) target = $region28
      $region27: #{forward.12} parent=15 // pred_region
        %p173 = scmp.lt.s32.totalorder %s16, 2
        %s174 = scalar_select %p173, %s16, 2
        %s175 = scalar_lea.vmem %s2, %s174
      $region28: #{forward.12} parent=15 // pred_fallthru
        _
    $region16: #{forward.12} parent=5 // pred_fallthru
      _
    %p176 = scmp.le.s32.totalorder 1, %s9
    %p177 = scmp.lt.s32.totalorder %s9, 4
    %p178 = pnand %p176, %p177
    %p179 = pneg %p178
    // Predicated region
    $region29: #{forward.12} parent=5 // pred_check
      _
    $region30: #{forward.12} parent=5 // pred_check_branch
      %181 = sbr.rel (%p178) target = $region32
    $region31: #{forward.12} parent=5 // pred_region
      %s182 = ssub.s32 %s9, 1
      %s183 = smul.u32 2, %s19
      %p184 = scmp.lt.s32.totalorder %s18, 2
      %s185 = scalar_select %p184, %s18, 2
      %p186 = scmp.lt.s32.totalorder %s183, 1
      %s187 = scalar_select %p186, %s183, 1
      %s188 = smul.addr %s187, 5
      %s189 = smul.addr %s185, 10
      %s190 = sadd.s32 %s188, %s189
      %s191 = smul.addr %s190, 4
      %s192 = scalar_lea.vmem %s0, %s191
      %p193 = pneg %p49
      %p194 = pneg %p46
      %p195 = scmp.lt.s32.totalorder %s18, 2
      %s196 = scalar_select %p195, %s18, 2
      %s197 = smul.addr %s196, 72
      %s198 = smul.addr %s197, 4
      %s199 = scalar_lea.vmem %s1, %s198
      %p200 = pneg %p75
      %p201 = pneg %p72
      %p202 = scmp.lt.s32.totalorder %s18, 2
      %s203 = scalar_select %p202, %s18, 2
      %s204 = scalar_lea.vmem %s2, %s203
      %p205 = pneg %p101
      %p206 = pneg %p98
      %p207 = pneg %p129
      %p208 = pneg %p126
      %s209 = smul.u32 2, %s19
      %p210 = scmp.lt.s32.totalorder %s18, 2
      %s211 = scalar_select %p210, %s18, 2
      %p212 = scmp.lt.s32.totalorder %s209, 1
      %s213 = scalar_select %p212, %s209, 1
      %s214 = smul.addr %s211, 2
      %s215 = sadd.s32 %s213, %s214
      %s216 = smul.addr %s215, 4
      %s217 = scalar_lea.vmem %s3, %s216
      %s218 = smul.u32 2, %s19
      %p219 = scmp.lt.s32.totalorder %s18, 2
      %s220 = scalar_select %p219, %s18, 2
      %p221 = scmp.lt.s32.totalorder %s218, 1
      %s222 = scalar_select %p221, %s218, 1
      %s223 = smul.addr %s222, 5
      %s224 = smul.addr %s220, 10
      %s225 = sadd.s32 %s223, %s224
      %s226 = smul.addr %s225, 4
      %s227 = scalar_lea.vmem %s0, %s226
      %s228 = smul.u32 2, %s19
      %p229 = scmp.lt.s32.totalorder %s18, 2
      %s230 = scalar_select %p229, %s18, 2
      %s231 = smul.addr %s230, 72
      %s232 = smul.addr %s231, 4
      %s233 = scalar_lea.vmem %s1, %s232
      %p234 = scmp.lt.s32.totalorder %s18, 2
      %s235 = scalar_select %p234, %s18, 2
      %s236 = scalar_lea.vmem %s2, %s235
      %s237 = smul.u32 2, %s19
      %p238 = scmp.lt.s32.totalorder %s18, 2
      %s239 = scalar_select %p238, %s18, 2
      %p240 = scmp.lt.s32.totalorder %s237, 1
      %s241 = scalar_select %p240, %s237, 1
      %s242 = smul.addr %s239, 2
      %s243 = sadd.s32 %s241, %s242
      %s244 = smul.addr %s243, 4
      %s245 = scalar_lea.vmem %s3, %s244
      %s246 = smul.u32 2, %s19
      %v248 = vld [vmem:[%s227] sm:$0xff]
      %v249 = vld [vmem:[%s227 + $0x8] sm:$0xff]
      %v250 = vld [vmem:[%s227 + $0x10] sm:$0xf]
      %v251 = vld [vmem:[%s227 + $0x14] sm:$0xff]
      %v252 = vld [vmem:[%s227 + $0x1c] sm:$0xff]
      %v253 = vld [vmem:[%s227 + $0x24] sm:$0xf]
      %v254 = vld [vmem:[%s233] sm:$0xf]
      %v255 = vld [vmem:[%s233 + $0x4] sm:$0xf]
      %v256 = vld [vmem:[%s233 + $0x8] sm:$0xf]
      %v257 = vld [vmem:[%s233 + $0xc] sm:$0xf]
      %v258 = vld [vmem:[%s233 + $0x10] sm:$0xf]
      %v259 = vld [vmem:[%s233 + $0x14] sm:$0xf]
      %v260 = vld [vmem:[%s233 + $0x18] sm:$0xf]
      %v261 = vld [vmem:[%s233 + $0x1c] sm:$0xf]
      %v262 = vld [vmem:[%s233 + $0x20] sm:$0xf]
      %v263 = vld [vmem:[%s233 + $0x24] sm:$0xf]
      %v264 = vld [vmem:[%s233 + $0x28] sm:$0xf]
      %v265 = vld [vmem:[%s233 + $0x2c] sm:$0xf]
      %v266 = vld [vmem:[%s233 + $0x30] sm:$0xf]
      %v267 = vld [vmem:[%s233 + $0x34] sm:$0xf]
      %v268 = vld [vmem:[%s233 + $0x38] sm:$0xf]
      %v269 = vld [vmem:[%s233 + $0x3c] sm:$0xf]
      %v270 = vld [vmem:[%s233 + $0x40] sm:$0xf]
      %v271 = vld [vmem:[%s233 + $0x44] sm:$0xf]
      %v272 = vld [vmem:[%s233 + $0x48] sm:$0xf]
      %v273 = vld [vmem:[%s233 + $0x4c] sm:$0xf]
      %v274 = vld [vmem:[%s233 + $0x50] sm:$0xf]
      %v275 = vld [vmem:[%s233 + $0x54] sm:$0xf]
      %v276 = vld [vmem:[%s233 + $0x58] sm:$0xf]
      %v277 = vld [vmem:[%s233 + $0x5c] sm:$0xf]
      %v278 = vld [vmem:[%s233 + $0x60] sm:$0xf]
      %v279 = vld [vmem:[%s233 + $0x64] sm:$0xf]
      %v280 = vld [vmem:[%s233 + $0x68] sm:$0xf]
      %v281 = vld [vmem:[%s233 + $0x6c] sm:$0xf]
      %v282 = vld [vmem:[%s233 + $0x70] sm:$0xf]
      %v283 = vld [vmem:[%s233 + $0x74] sm:$0xf]
      %v284 = vld [vmem:[%s233 + $0x78] sm:$0xf]
      %v285 = vld [vmem:[%s233 + $0x7c] sm:$0xf]
      %v286 = vld [vmem:[%s233 + $0x80] sm:$0xf]
      %v287 = vld [vmem:[%s233 + $0x84] sm:$0xf]
      %v288 = vld [vmem:[%s233 + $0x88] sm:$0xf]
      %v289 = vld [vmem:[%s233 + $0x8c] sm:$0xf]
      %v290 = vld [vmem:[%s233 + $0x90] sm:$0xf]
      %v291 = vld [vmem:[%s233 + $0x94] sm:$0xf]
      %v292 = vld [vmem:[%s233 + $0x98] sm:$0xf]
      %v293 = vld [vmem:[%s233 + $0x9c] sm:$0xf]
      %v294 = vld [vmem:[%s233 + $0xa0] sm:$0xf]
      %v295 = vld [vmem:[%s233 + $0xa4] sm:$0xf]
      %v296 = vld [vmem:[%s233 + $0xa8] sm:$0xf]
      %v297 = vld [vmem:[%s233 + $0xac] sm:$0xf]
      %v298 = vld [vmem:[%s233 + $0xb0] sm:$0xf]
      %v299 = vld [vmem:[%s233 + $0xb4] sm:$0xf]
      %v300 = vld [vmem:[%s233 + $0xb8] sm:$0xf]
      %v301 = vld [vmem:[%s233 + $0xbc] sm:$0xf]
      %v302 = vld [vmem:[%s233 + $0xc0] sm:$0xf]
      %v303 = vld [vmem:[%s233 + $0xc4] sm:$0xf]
      %v304 = vld [vmem:[%s233 + $0xc8] sm:$0xf]
      %v305 = vld [vmem:[%s233 + $0xcc] sm:$0xf]
      %v306 = vld [vmem:[%s233 + $0xd0] sm:$0xf]
      %v307 = vld [vmem:[%s233 + $0xd4] sm:$0xf]
      %v308 = vld [vmem:[%s233 + $0xd8] sm:$0xf]
      %v309 = vld [vmem:[%s233 + $0xdc] sm:$0xf]
      %v310 = vld [vmem:[%s233 + $0xe0] sm:$0xf]
      %v311 = vld [vmem:[%s233 + $0xe4] sm:$0xf]
      %v312 = vld [vmem:[%s233 + $0xe8] sm:$0xf]
      %v313 = vld [vmem:[%s233 + $0xec] sm:$0xf]
      %v314 = vld [vmem:[%s233 + $0xf0] sm:$0xf]
      %v315 = vld [vmem:[%s233 + $0xf4] sm:$0xf]
      %v316 = vld [vmem:[%s233 + $0xf8] sm:$0xf]
      %v317 = vld [vmem:[%s233 + $0xfc] sm:$0xf]
      %v318 = vld [vmem:[%s233 + $0x100] sm:$0xf]
      %v319 = vld [vmem:[%s233 + $0x104] sm:$0xf]
      %v320 = vld [vmem:[%s233 + $0x108] sm:$0xf]
      %v321 = vld [vmem:[%s233 + $0x10c] sm:$0xf]
      %v322 = vld [vmem:[%s233 + $0x110] sm:$0xf]
      %v323 = vld [vmem:[%s233 + $0x114] sm:$0xf]
      %v324 = vld [vmem:[%s233 + $0x118] sm:$0xf]
      %v325 = vld [vmem:[%s233 + $0x11c] sm:$0xf]
      %v326 = vld [vmem:[%s236] sm:$0x1]
      %v328 = vlaneseq
      %v329 = vshrl.u32 %v328, 7
      %v330 = vsub.s32 0, %v329
      %v331 = vrot.slane %v326, %v330
      %v339 = vunpack.c.l.b16 %v248
      %v340 = vunpack.c.h.b16 %v248
      %v341 = vunpack.c.l.b16 %v249
      %v342 = vunpack.c.h.b16 %v249
      %v343 = vunpack.c.l.b16 %v250
      %v344 = vunpack.c.l.b16 %v251
      %v345 = vunpack.c.h.b16 %v251
      %v346 = vunpack.c.l.b16 %v252
      %v347 = vunpack.c.h.b16 %v252
      %v348 = vunpack.c.l.b16 %v253
      %v349 = vpack.c.b16 %v344, %v339
      %v350 = vpack.c.b16 %v345, %v340
      %v351 = vpack.c.b16 %v346, %v341
      %v352 = vpack.c.b16 %v347, %v342
      %v353 = vpack.c.b16 %v348, %v343
      %v430 = vunpack.c.l.b16 %v254
      %v431 = vunpack.c.l.b16 %v255
      %v432 = vunpack.c.l.b16 %v256
      %v433 = vunpack.c.l.b16 %v257
      %v434 = vunpack.c.l.b16 %v258
      %v435 = vunpack.c.l.b16 %v259
      %v436 = vunpack.c.l.b16 %v260
      %v437 = vunpack.c.l.b16 %v261
      %v438 = vunpack.c.l.b16 %v262
      %v439 = vunpack.c.l.b16 %v263
      %v440 = vunpack.c.l.b16 %v264
      %v441 = vunpack.c.l.b16 %v265
      %v442 = vunpack.c.l.b16 %v266
      %v443 = vunpack.c.l.b16 %v267
      %v444 = vunpack.c.l.b16 %v268
      %v445 = vunpack.c.l.b16 %v269
      %v446 = vunpack.c.l.b16 %v270
      %v447 = vunpack.c.l.b16 %v271
      %v448 = vunpack.c.l.b16 %v272
      %v449 = vunpack.c.l.b16 %v273
      %v450 = vunpack.c.l.b16 %v274
      %v451 = vunpack.c.l.b16 %v275
      %v452 = vunpack.c.l.b16 %v276
      %v453 = vunpack.c.l.b16 %v277
      %v454 = vunpack.c.l.b16 %v278
      %v455 = vunpack.c.l.b16 %v279
      %v456 = vunpack.c.l.b16 %v280
      %v457 = vunpack.c.l.b16 %v281
      %v458 = vunpack.c.l.b16 %v282
      %v459 = vunpack.c.l.b16 %v283
      %v460 = vunpack.c.l.b16 %v284
      %v461 = vunpack.c.l.b16 %v285
      %v462 = vunpack.c.l.b16 %v286
      %v463 = vunpack.c.l.b16 %v287
      %v464 = vunpack.c.l.b16 %v288
      %v465 = vunpack.c.l.b16 %v289
      %v466 = vunpack.c.l.b16 %v290
      %v467 = vunpack.c.l.b16 %v291
      %v468 = vunpack.c.l.b16 %v292
      %v469 = vunpack.c.l.b16 %v293
      %v470 = vunpack.c.l.b16 %v294
      %v471 = vunpack.c.l.b16 %v295
      %v472 = vunpack.c.l.b16 %v296
      %v473 = vunpack.c.l.b16 %v297
      %v474 = vunpack.c.l.b16 %v298
      %v475 = vunpack.c.l.b16 %v299
      %v476 = vunpack.c.l.b16 %v300
      %v477 = vunpack.c.l.b16 %v301
      %v478 = vunpack.c.l.b16 %v302
      %v479 = vunpack.c.l.b16 %v303
      %v480 = vunpack.c.l.b16 %v304
      %v481 = vunpack.c.l.b16 %v305
      %v482 = vunpack.c.l.b16 %v306
      %v483 = vunpack.c.l.b16 %v307
      %v484 = vunpack.c.l.b16 %v308
      %v485 = vunpack.c.l.b16 %v309
      %v486 = vunpack.c.l.b16 %v310
      %v487 = vunpack.c.l.b16 %v311
      %v488 = vunpack.c.l.b16 %v312
      %v489 = vunpack.c.l.b16 %v313
      %v490 = vunpack.c.l.b16 %v314
      %v491 = vunpack.c.l.b16 %v315
      %v492 = vunpack.c.l.b16 %v316
      %v493 = vunpack.c.l.b16 %v317
      %v494 = vunpack.c.l.b16 %v318
      %v495 = vunpack.c.l.b16 %v319
      %v496 = vunpack.c.l.b16 %v320
      %v497 = vunpack.c.l.b16 %v321
      %v498 = vunpack.c.l.b16 %v322
      %v499 = vunpack.c.l.b16 %v323
      %v500 = vunpack.c.l.b16 %v324
      %v501 = vunpack.c.l.b16 %v325
      %v502 = vpack.c.b16 %v431, %v430
      %v503 = vpack.c.b16 %v433, %v432
      %v504 = vpack.c.b16 %v435, %v434
      %v505 = vpack.c.b16 %v437, %v436
      %v506 = vpack.c.b16 %v439, %v438
      %v507 = vpack.c.b16 %v441, %v440
      %v508 = vpack.c.b16 %v443, %v442
      %v509 = vpack.c.b16 %v445, %v444
      %v510 = vpack.c.b16 %v447, %v446
      %v511 = vpack.c.b16 %v449, %v448
      %v512 = vpack.c.b16 %v451, %v450
      %v513 = vpack.c.b16 %v453, %v452
      %v514 = vpack.c.b16 %v455, %v454
      %v515 = vpack.c.b16 %v457, %v456
      %v516 = vpack.c.b16 %v459, %v458
      %v517 = vpack.c.b16 %v461, %v460
      %v518 = vpack.c.b16 %v463, %v462
      %v519 = vpack.c.b16 %v465, %v464
      %v520 = vpack.c.b16 %v467, %v466
      %v521 = vpack.c.b16 %v469, %v468
      %v522 = vpack.c.b16 %v471, %v470
      %v523 = vpack.c.b16 %v473, %v472
      %v524 = vpack.c.b16 %v475, %v474
      %v525 = vpack.c.b16 %v477, %v476
      %v526 = vpack.c.b16 %v479, %v478
      %v527 = vpack.c.b16 %v481, %v480
      %v528 = vpack.c.b16 %v483, %v482
      %v529 = vpack.c.b16 %v485, %v484
      %v530 = vpack.c.b16 %v487, %v486
      %v531 = vpack.c.b16 %v489, %v488
      %v532 = vpack.c.b16 %v491, %v490
      %v533 = vpack.c.b16 %v493, %v492
      %v534 = vpack.c.b16 %v495, %v494
      %v535 = vpack.c.b16 %v497, %v496
      %v536 = vpack.c.b16 %v499, %v498
      %v537 = vpack.c.b16 %v501, %v500
      %vm574 = vcmask 523264
      %v576 = vsel %vm574, %v353, 0
      %578 = vmatprep.subr.bf16.mxu0 0
      %579 = vmatpush1.bf16.msra.mxu0 %v502
      %580 = vmatprep.subr.bf16.mxu0 0
      %581 = vmatpush1.bf16.msra.mxu0 %v503
      %582 = vmatprep.subr.bf16.mxu0 0
      %583 = vmatpush1.bf16.msra.mxu0 %v504
      %584 = vmatprep.subr.bf16.mxu0 0
      %585 = vmatpush1.bf16.msra.mxu0 %v505
      %586 = vmatprep.subr.bf16.mxu0 0
      %587 = vmatpush1.bf16.msra.mxu0 %v506
      %588 = vmatprep.subr.bf16.mxu0 0
      %589 = vmatpush1.bf16.msra.mxu0 %v507
      %590 = vmatprep.subr.bf16.mxu0 0
      %591 = vmatpush1.bf16.msra.mxu0 %v508
      %592 = vmatprep.subr.bf16.mxu0 0
      %593 = vmatpush1.bf16.msra.mxu0 %v509
      %594 = vmatprep.subr.bf16.mxu0 0
      %595 = vmatpush1.bf16.msra.mxu0 %v510
      %596 = vmatprep.subr.bf16.mxu0 0
      %597 = vmatpush1.bf16.msra.mxu0 %v511
      %598 = vmatprep.subr.bf16.mxu0 0
      %599 = vmatpush1.bf16.msra.mxu0 %v512
      %600 = vmatprep.subr.bf16.mxu0 0
      %601 = vmatpush1.bf16.msra.mxu0 %v513
      %602 = vmatprep.subr.bf16.mxu0 0
      %603 = vmatpush1.bf16.msra.mxu0 %v514
      %604 = vmatprep.subr.bf16.mxu0 0
      %605 = vmatpush1.bf16.msra.mxu0 %v515
      %606 = vmatprep.subr.bf16.mxu0 0
      %607 = vmatpush1.bf16.msra.mxu0 %v516
      %608 = vmatprep.subr.bf16.mxu0 0
      %609 = vmatpush1.bf16.msra.mxu0 %v517
      %610 = vmatprep.mubr.bf16.mxu0 %v350
      %611 = vmatmul.mubr.bf16.gmra.mrb[0].mxu0 %v349
      %v612 = vpop.f32.mrb[0].mxu0
      %v613 = vadd.f32 %v331, %v612
      %v614 = vpop.f32.mrb[0].mxu0
      %v615 = vpop.f32.mrb[0].mxu0
      %v616 = vadd.f32 %v331, %v615
      %v617 = vpop.f32.mrb[0].mxu0
      %618 = vdwg.mxu0
      %619 = vmatprep.subr.bf16.mxu0 0
      %620 = vmatpush1.bf16.msra.mxu0 %v518
      %621 = vmatprep.subr.bf16.mxu0 0
      %622 = vmatpush1.bf16.msra.mxu0 %v519
      %623 = vmatprep.subr.bf16.mxu0 0
      %624 = vmatpush1.bf16.msra.mxu0 %v520
      %625 = vmatprep.subr.bf16.mxu0 0
      %626 = vmatpush1.bf16.msra.mxu0 %v521
      %627 = vmatprep.subr.bf16.mxu0 0
      %628 = vmatpush1.bf16.msra.mxu0 %v522
      %629 = vmatprep.subr.bf16.mxu0 0
      %630 = vmatpush1.bf16.msra.mxu0 %v523
      %631 = vmatprep.subr.bf16.mxu0 0
      %632 = vmatpush1.bf16.msra.mxu0 %v524
      %633 = vmatprep.subr.bf16.mxu0 0
      %634 = vmatpush1.bf16.msra.mxu0 %v525
      %635 = vmatprep.subr.bf16.mxu0 0
      %636 = vmatpush1.bf16.msra.mxu0 %v526
      %637 = vmatprep.subr.bf16.mxu0 0
      %638 = vmatpush1.bf16.msra.mxu0 %v527
      %639 = vmatprep.subr.bf16.mxu0 0
      %640 = vmatpush1.bf16.msra.mxu0 %v528
      %641 = vmatprep.subr.bf16.mxu0 0
      %642 = vmatpush1.bf16.msra.mxu0 %v529
      %643 = vmatprep.subr.bf16.mxu0 0
      %644 = vmatpush1.bf16.msra.mxu0 %v530
      %645 = vmatprep.subr.bf16.mxu0 0
      %646 = vmatpush1.bf16.msra.mxu0 %v531
      %647 = vmatprep.subr.bf16.mxu0 0
      %648 = vmatpush1.bf16.msra.mxu0 %v532
      %649 = vmatprep.subr.bf16.mxu0 0
      %650 = vmatpush1.bf16.msra.mxu0 %v533
      %651 = vmatprep.mubr.bf16.mxu0 %v352
      %652 = vmatmul.mubr.bf16.gmra.mrb[0].mxu0 %v351
      %v653 = vpop.f32.mrb[0].mxu0
      %v654 = vadd.f32 %v613, %v653
      %v655 = vpop.f32.mrb[0].mxu0
      %v656 = vpop.f32.mrb[0].mxu0
      %v657 = vadd.f32 %v616, %v656
      %v658 = vpop.f32.mrb[0].mxu0
      %659 = vdwg.mxu0
      %660 = vmatprep.subr.bf16.mxu0 0
      %661 = vmatpush1.bf16.msra.mxu0 %v534
      %662 = vmatprep.subr.bf16.mxu0 0
      %663 = vmatpush1.bf16.msra.mxu0 %v535
      %664 = vmatprep.subr.bf16.mxu0 0
      %665 = vmatpush1.bf16.msra.mxu0 %v536
      %666 = vmatprep.subr.bf16.mxu0 0
      %667 = vmatpush1.bf16.msra.mxu0 %v537
      %668 = vmatprep.subr.bf16.mxu0 0
      %669 = vmatpush1.bf16.msra.mxu0 0
      %670 = vmatprep.subr.bf16.mxu0 0
      %671 = vmatpush1.bf16.msra.mxu0 0
      %672 = vmatprep.subr.bf16.mxu0 0
      %673 = vmatpush1.bf16.msra.mxu0 0
      %674 = vmatprep.subr.bf16.mxu0 0
      %675 = vmatpush1.bf16.msra.mxu0 0
      %676 = vmatprep.subr.bf16.mxu0 0
      %677 = vmatpush1.bf16.msra.mxu0 0
      %678 = vmatprep.subr.bf16.mxu0 0
      %679 = vmatpush1.bf16.msra.mxu0 0
      %680 = vmatprep.subr.bf16.mxu0 0
      %681 = vmatpush1.bf16.msra.mxu0 0
      %682 = vmatprep.subr.bf16.mxu0 0
      %683 = vmatpush1.bf16.msra.mxu0 0
      %684 = vmatprep.subr.bf16.mxu0 0
      %685 = vmatpush1.bf16.msra.mxu0 0
      %686 = vmatprep.subr.bf16.mxu0 0
      %687 = vmatpush1.bf16.msra.mxu0 0
      %688 = vmatprep.subr.bf16.mxu0 0
      %689 = vmatpush1.bf16.msra.mxu0 0
      %690 = vmatprep.subr.bf16.mxu0 0
      %691 = vmatpush1.bf16.msra.mxu0 0
      %692 = vmatprep.mubr.bf16.mxu0 0
      %693 = vmatmul.mubr.bf16.gmra.mrb[0].mxu0 %v576
      %v694 = vpop.f32.mrb[0].mxu0
      %v695 = vadd.f32 %v654, %v694
      %v696 = vpop.f32.mrb[0].mxu0
      %v697 = vpop.f32.mrb[0].mxu0
      %v698 = vadd.f32 %v657, %v697
      %v699 = vpop.f32.mrb[0].mxu0
      %700 = vdwg.mxu0
      %vm701 = vcmp.ge.f32.partialorder %v695, 0.0
      %vm702 = vcmp.ge.f32.partialorder %v698, 0.0
      %v703 = vmul.f32 %v695, 0.2
      %v704 = vmul.f32 %v698, 0.2
      %v705 = vsel %vm701, %v695, %v703
      %v706 = vsel %vm702, %v698, %v704
      %v707 = vpack.c.bf16 %v706, %v705
      %v709 = vunpack.c.l.b16 %v707
      %v710 = vunpack.c.h.b16 %v707
      %v711 = vpack.c.b16 %v709, %v709
      %v712 = vpack.c.b16 %v710, %v710
      %715 = vst [vmem:[%s245] sm:$0xf] %v711
      %716 = vst [vmem:[%s245 + $0x4] sm:$0xf] %v712
      %s717 = smul.u32 2, %s19
      %p718 = scmp.lt.s32.totalorder %s18, 2
      %s719 = scalar_select %p718, %s18, 2
      %p720 = scmp.lt.s32.totalorder %s717, 1
      %s721 = scalar_select %p720, %s717, 1
      %s722 = smul.addr %s719, 2
      %s723 = sadd.s32 %s721, %s722
      %s724 = smul.addr %s723, 4
      %s725 = scalar_lea.vmem %s3, %s724
      // Predicated region
      $region33: #{forward.12} parent=31 // pred_check
        %p726 = pneg %p126
      $region34: #{forward.12} parent=31 // pred_check_branch
        %728 = sbr.rel (%p726) target = $region36
      $region35: #{forward.12} parent=31 // pred_region
        %s729 = smul.u32 2, %s19
      $region36: #{forward.12} parent=31 // pred_fallthru
        _
    $region32: #{forward.12} parent=5 // pred_fallthru
      _
    %p730 = scmp.le.s32.totalorder 2, %s9
    // Predicated region
    $region37: #{forward.12} parent=5 // pred_check
      %p731 = pneg %p730
    $region38: #{forward.12} parent=5 // pred_check_branch
      %733 = sbr.rel (%p731) target = $region40
    $region39: #{forward.12} parent=5 // pred_region
      %s734 = ssub.s32 %s9, 2
      // Predicated region
      $region41: #{forward.12} parent=39 // pred_check
        %p735 = pneg %p132
      $region42: #{forward.12} parent=39 // pred_check_branch
        %737 = sbr.rel (%p735) target = $region44
      $region43: #{forward.12} parent=39 // pred_region
        %s738 = smul.u32 2, %s21
        %p739 = scmp.lt.s32.totalorder %s20, 2
        %s740 = scalar_select %p739, %s20, 2
        %p741 = scmp.lt.s32.totalorder %s738, 1
        %s742 = scalar_select %p741, %s738, 1
        %s743 = smul.addr %s740, 2
        %s744 = sadd.s32 %s742, %s743
        %s745 = smul.addr %s744, 4
        %s746 = scalar_lea.vmem %s3, %s745
      $region44: #{forward.12} parent=39 // pred_fallthru
        _
    $region40: #{forward.12} parent=5 // pred_fallthru
      _
  $region6: #{forward.12} parent=0 // loop_footer
    %s13 = sadd.s32 1, %s9
  $region7: #{forward.12} parent=0 // loop_footer_branch
    %8 = sbr.rel target = $region3
  $region8: #{forward.12} parent=0 // loop_exit
    _

// kernel: forward.13
$region0: #{forward.13}
  #allocation0 [shape = 'u32[]', space=smem, size = 0x4, offset = 0x4, fixed_abs, tag = 'smem constant byte address 0x4 - core index']
  #allocation1 [shape = 'u32[144,128]{1,0:T(1,128)}', space=vmem, size = 0x12000, scoped, tag = 'internal scratch']
  %s0 = inlined_call_operand.vmem [shape: bf16[3,16,1152], index: 0, kind: input, shape index: {}]
  %s1 = inlined_call_operand.vmem [shape: bf16[3,1152,256], index: 1, kind: input, shape index: {}]
  %s2 = inlined_call_operand.vmem [shape: f32[3,1,256], index: 2, kind: input, shape index: {}]
  %s3 = inlined_call_operand.vmem [shape: bf16[3,16,256], index: 3, kind: output, shape index: {}]
  %s4 = sld [smem:[#allocation0]]
  $region45: #{forward.13} parent=0
    _
  %s6 = ssub.s32 1, %s4
  %s7 = scalar_select 0, %s6, %s4
  loop: start=0, step=1, limit=5
  $region2: #{forward.13} parent=0 // loop_pre_header
    _
  $region3: #{forward.13} parent=0 // loop_header
    %s9 = sphi 0, %s13
    %p10 = scmp.ge.s32.totalorder %s9, 5
    %s16 = sphi 0, %s28
    %s17 = sphi 0, %s24
    %s18 = sphi 0, %s16
    %s19 = sphi 0, %s17
    %s20 = sphi 0, %s18
    %s21 = sphi 0, %s19
    %s33 = sphi 0, %s35
    %s36 = sphi 0, %s33
    %s37 = sphi 0, %s36
    %s53 = sphi 0, %s37
    %s59 = sphi 0, %s61
    %s62 = sphi 0, %s59
    %s63 = sphi 0, %s62
    %s79 = sphi 0, %s63
    %s85 = sphi 0, %s87
    %s88 = sphi 0, %s85
    %s89 = sphi 0, %s88
    %s105 = sphi 0, %s89
    %s113 = sphi 0, %s115
    %s116 = sphi 0, %s113
    %s117 = sphi 0, %s116
    %s133 = sphi 0, %s117
  $region4: #{forward.13} parent=0 // loop_header_branch
    %12 = sbr.rel (%p10) target = $region8
  $region5: #{forward.13} parent=0 // loop_body
    %s14 = ssub.s32 %s9, 1
    %s15 = ssub.s32 %s9, 2
    %s22 = sadd.s32 1, %s17
    %p23 = scmp.ge.s32.totalorder %s22, 1
    %s24 = scalar_select %p23, 0, %s22
    %s25 = sadd.s32 1, %s16
    %s26 = scalar_select %p23, %s25, %s16
    %p27 = scmp.ge.s32.totalorder %s26, 3
    %s28 = scalar_select %p27, 0, %s26
    %s29 = ssub.s32 %s16, %s28
    %s30 = ssub.s32 %s17, %s24
    %s31 = sor.u32 %s29, %s30
    %p32 = scmp.eq.s32.totalorder %s31, 0
    %s34 = sadd.s32 %s33, 1
    %s35 = scalar_select %p32, %s33, %s34
    %p38 = pneg %p32
    %p39 = scmp.eq.s32.totalorder %s9, 2
    %p40 = por %p38, %p39
    %p41 = scmp.ne.s32.totalorder %s33, %s36
    %p42 = scmp.eq.s32.totalorder %s9, 0
    %p43 = por %p41, %p42
    %p44 = scmp.ne.s32.totalorder %s33, %s36
    %p45 = scmp.eq.s32.totalorder %s14, 2
    %p46 = por %p44, %p45
    %p47 = scmp.ne.s32.totalorder %s36, %s37
    %p48 = scmp.eq.s32.totalorder %s14, 0
    %p49 = por %p47, %p48
    %p50 = scmp.ne.s32.totalorder %s36, %s37
    %p51 = scmp.eq.s32.totalorder %s15, 2
    %p52 = por %p50, %p51
    %p54 = scmp.ne.s32.totalorder %s37, %s53
    %p55 = scmp.eq.s32.totalorder %s15, 0
    %p56 = por %p54, %p55
    %s57 = ssub.s32 %s16, %s28
    %p58 = scmp.eq.s32.totalorder %s57, 0
    %s60 = sadd.s32 %s59, 1
    %s61 = scalar_select %p58, %s59, %s60
    %p64 = pneg %p58
    %p65 = scmp.eq.s32.totalorder %s9, 2
    %p66 = por %p64, %p65
    %p67 = scmp.ne.s32.totalorder %s59, %s62
    %p68 = scmp.eq.s32.totalorder %s9, 0
    %p69 = por %p67, %p68
    %p70 = scmp.ne.s32.totalorder %s59, %s62
    %p71 = scmp.eq.s32.totalorder %s14, 2
    %p72 = por %p70, %p71
    %p73 = scmp.ne.s32.totalorder %s62, %s63
    %p74 = scmp.eq.s32.totalorder %s14, 0
    %p75 = por %p73, %p74
    %p76 = scmp.ne.s32.totalorder %s62, %s63
    %p77 = scmp.eq.s32.totalorder %s15, 2
    %p78 = por %p76, %p77
    %p80 = scmp.ne.s32.totalorder %s63, %s79
    %p81 = scmp.eq.s32.totalorder %s15, 0
    %p82 = por %p80, %p81
    %s83 = ssub.s32 %s16, %s28
    %p84 = scmp.eq.s32.totalorder %s83, 0
    %s86 = sadd.s32 %s85, 1
    %s87 = scalar_select %p84, %s85, %s86
    %p90 = pneg %p84
    %p91 = scmp.eq.s32.totalorder %s9, 2
    %p92 = por %p90, %p91
    %p93 = scmp.ne.s32.totalorder %s85, %s88
    %p94 = scmp.eq.s32.totalorder %s9, 0
    %p95 = por %p93, %p94
    %p96 = scmp.ne.s32.totalorder %s85, %s88
    %p97 = scmp.eq.s32.totalorder %s14, 2
    %p98 = por %p96, %p97
    %p99 = scmp.ne.s32.totalorder %s88, %s89
    %p100 = scmp.eq.s32.totalorder %s14, 0
    %p101 = por %p99, %p100
    %p102 = scmp.ne.s32.totalorder %s88, %s89
    %p103 = scmp.eq.s32.totalorder %s15, 2
    %p104 = por %p102, %p103
    %p106 = scmp.ne.s32.totalorder %s89, %s105
    %p107 = scmp.eq.s32.totalorder %s15, 0
    %p108 = por %p106, %p107
    %s109 = ssub.s32 %s16, %s28
    %s110 = ssub.s32 %s17, %s24
    %s111 = sor.u32 %s109, %s110
    %p112 = scmp.eq.s32.totalorder %s111, 0
    %s114 = sadd.s32 %s113, 1
    %s115 = scalar_select %p112, %s113, %s114
    %p118 = pneg %p112
    %p119 = scmp.eq.s32.totalorder %s9, 2
    %p120 = por %p118, %p119
    %p121 = scmp.ne.s32.totalorder %s113, %s116
    %p122 = scmp.eq.s32.totalorder %s9, 0
    %p123 = por %p121, %p122
    %p124 = scmp.ne.s32.totalorder %s113, %s116
    %p125 = scmp.eq.s32.totalorder %s14, 2
    %p126 = por %p124, %p125
    %p127 = scmp.ne.s32.totalorder %s116, %s117
    %p128 = scmp.eq.s32.totalorder %s14, 0
    %p129 = por %p127, %p128
    %p130 = scmp.ne.s32.totalorder %s116, %s117
    %p131 = scmp.eq.s32.totalorder %s15, 2
    %p132 = por %p130, %p131
    %p134 = scmp.ne.s32.totalorder %s117, %s133
    %p135 = scmp.eq.s32.totalorder %s15, 0
    %p136 = por %p134, %p135
    %p137 = scmp.le.s32.totalorder 1, %s9
    %p138 = scmp.lt.s32.totalorder %s9, 4
    %p139 = pnand %p137, %p138
    %p140 = pneg %p139
    // Predicated region
    $region9: #{forward.13} parent=5 // pred_check
      _
    $region10: #{forward.13} parent=5 // pred_check_branch
      %142 = sbr.rel (%p139) target = $region12
    $region11: #{forward.13} parent=5 // pred_region
      %s143 = ssub.s32 %s9, 1
    $region12: #{forward.13} parent=5 // pred_fallthru
      _
    %p144 = scmp.lt.s32.totalorder %s9, 3
    // Predicated region
    $region13: #{forward.13} parent=5 // pred_check
      %p145 = pneg %p144
    $region14: #{forward.13} parent=5 // pred_check_branch
      %147 = sbr.rel (%p145) target = $region16
    $region15: #{forward.13} parent=5 // pred_region
      // Predicated region
      $region17: #{forward.13} parent=15 // pred_check
        %p148 = pneg %p43
      $region18: #{forward.13} parent=15 // pred_check_branch
        %150 = sbr.rel (%p148) target = $region20
      $region19: #{forward.13} parent=15 // pred_region
        %s151 = smul.u32 2, %s17
        %p152 = scmp.lt.s32.totalorder %s16, 2
        %s153 = scalar_select %p152, %s16, 2
        %p154 = scmp.lt.s32.totalorder %s151, 1
        %s155 = scalar_select %p154, %s151, 1
        %s156 = smul.addr %s155, 9
        %s157 = smul.addr %s153, 18
        %s158 = sadd.s32 %s156, %s157
        %s159 = smul.addr %s158, 4
        %s160 = scalar_lea.vmem %s0, %s159
        %s161 = smul.u32 2, %s17
      $region20: #{forward.13} parent=15 // pred_fallthru
        _
      // Predicated region
      $region21: #{forward.13} parent=15 // pred_check
        %p162 = pneg %p69
      $region22: #{forward.13} parent=15 // pred_check_branch
        %164 = sbr.rel (%p162) target = $region24
      $region23: #{forward.13} parent=15 // pred_region
        %p165 = scmp.lt.s32.totalorder %s16, 2
        %s166 = scalar_select %p165, %s16, 2
        %s167 = smul.addr %s166, 288
        %s168 = smul.addr %s167, 4
        %s169 = scalar_lea.vmem %s1, %s168
      $region24: #{forward.13} parent=15 // pred_fallthru
        _
      // Predicated region
      $region25: #{forward.13} parent=15 // pred_check
        %p170 = pneg %p95
      $region26: #{forward.13} parent=15 // pred_check_branch
        %172 = sbr.rel (%p170) target = $region28
      $region27: #{forward.13} parent=15 // pred_region
        %p173 = scmp.lt.s32.totalorder %s16, 2
        %s174 = scalar_select %p173, %s16, 2
        %s175 = smul.addr %s174, 2
        %s176 = scalar_lea.vmem %s2, %s175
      $region28: #{forward.13} parent=15 // pred_fallthru
        _
    $region16: #{forward.13} parent=5 // pred_fallthru
      _
    %p177 = scmp.le.s32.totalorder 1, %s9
    %p178 = scmp.lt.s32.totalorder %s9, 4
    %p179 = pnand %p177, %p178
    %p180 = pneg %p179
    // Predicated region
    $region29: #{forward.13} parent=5 // pred_check
      _
    $region30: #{forward.13} parent=5 // pred_check_branch
      %182 = sbr.rel (%p179) target = $region32
    $region31: #{forward.13} parent=5 // pred_region
      %s183 = ssub.s32 %s9, 1
      %s184 = smul.u32 2, %s19
      %p185 = scmp.lt.s32.totalorder %s18, 2
      %s186 = scalar_select %p185, %s18, 2
      %p187 = scmp.lt.s32.totalorder %s184, 1
      %s188 = scalar_select %p187, %s184, 1
      %s189 = smul.addr %s188, 9
      %s190 = smul.addr %s186, 18
      %s191 = sadd.s32 %s189, %s190
      %s192 = smul.addr %s191, 4
      %s193 = scalar_lea.vmem %s0, %s192
      %p194 = pneg %p49
      %p195 = pneg %p46
      %p196 = scmp.lt.s32.totalorder %s18, 2
      %s197 = scalar_select %p196, %s18, 2
      %s198 = smul.addr %s197, 288
      %s199 = smul.addr %s198, 4
      %s200 = scalar_lea.vmem %s1, %s199
      %p201 = pneg %p75
      %p202 = pneg %p72
      %p203 = scmp.lt.s32.totalorder %s18, 2
      %s204 = scalar_select %p203, %s18, 2
      %s205 = smul.addr %s204, 2
      %s206 = scalar_lea.vmem %s2, %s205
      %p207 = pneg %p101
      %p208 = pneg %p98
      %p209 = pneg %p129
      %p210 = pneg %p126
      %s211 = smul.u32 2, %s19
      %p212 = scmp.lt.s32.totalorder %s18, 2
      %s213 = scalar_select %p212, %s18, 2
      %p214 = scmp.lt.s32.totalorder %s211, 1
      %s215 = scalar_select %p214, %s211, 1
      %s216 = smul.addr %s215, 2
      %s217 = smul.addr %s213, 4
      %s218 = sadd.s32 %s216, %s217
      %s219 = smul.addr %s218, 4
      %s220 = scalar_lea.vmem %s3, %s219
      %s221 = smul.u32 2, %s19
      %p222 = scmp.lt.s32.totalorder %s18, 2
      %s223 = scalar_select %p222, %s18, 2
      %p224 = scmp.lt.s32.totalorder %s221, 1
      %s225 = scalar_select %p224, %s221, 1
      %s226 = smul.addr %s225, 9
      %s227 = smul.addr %s223, 18
      %s228 = sadd.s32 %s226, %s227
      %s229 = smul.addr %s228, 4
      %s230 = scalar_lea.vmem %s0, %s229
      %s231 = smul.u32 2, %s19
      %p232 = scmp.lt.s32.totalorder %s18, 2
      %s233 = scalar_select %p232, %s18, 2
      %s234 = smul.addr %s233, 288
      %s235 = smul.addr %s234, 4
      %s236 = scalar_lea.vmem %s1, %s235
      %p237 = scmp.lt.s32.totalorder %s18, 2
      %s238 = scalar_select %p237, %s18, 2
      %s239 = smul.addr %s238, 2
      %s240 = scalar_lea.vmem %s2, %s239
      %s241 = smul.u32 2, %s19
      %p242 = scmp.lt.s32.totalorder %s18, 2
      %s243 = scalar_select %p242, %s18, 2
      %p244 = scmp.lt.s32.totalorder %s241, 1
      %s245 = scalar_select %p244, %s241, 1
      %s246 = smul.addr %s245, 2
      %s247 = smul.addr %s243, 4
      %s248 = sadd.s32 %s246, %s247
      %s249 = smul.addr %s248, 4
      %s250 = scalar_lea.vmem %s3, %s249
      %s251 = smul.u32 2, %s19
      %v253 = vld [vmem:[%s230] sm:$0xff]
      %v254 = vld [vmem:[%s230 + $0x8] sm:$0xff]
      %v255 = vld [vmem:[%s230 + $0x10] sm:$0xff]
      %v256 = vld [vmem:[%s230 + $0x18] sm:$0xff]
      %v257 = vld [vmem:[%s230 + $0x20] sm:$0xf]
      %v258 = vld [vmem:[%s230 + $0x24] sm:$0xff]
      %v259 = vld [vmem:[%s230 + $0x2c] sm:$0xff]
      %v260 = vld [vmem:[%s230 + $0x34] sm:$0xff]
      %v261 = vld [vmem:[%s230 + $0x3c] sm:$0xff]
      %v262 = vld [vmem:[%s230 + $0x44] sm:$0xf]
      %v263 = vld [vmem:[%s236] sm:$0xff]
      %v264 = vld [vmem:[%s236 + $0x8] sm:$0xff]
      %v265 = vld [vmem:[%s236 + $0x10] sm:$0xff]
      %v266 = vld [vmem:[%s236 + $0x18] sm:$0xff]
      %v267 = vld [vmem:[%s236 + $0x20] sm:$0xff]
      %v268 = vld [vmem:[%s236 + $0x28] sm:$0xff]
      %v269 = vld [vmem:[%s236 + $0x30] sm:$0xff]
      %v270 = vld [vmem:[%s236 + $0x38] sm:$0xff]
      %v271 = vld [vmem:[%s236 + $0x40] sm:$0xff]
      %v272 = vld [vmem:[%s236 + $0x48] sm:$0xff]
      %v273 = vld [vmem:[%s236 + $0x50] sm:$0xff]
      %v274 = vld [vmem:[%s236 + $0x58] sm:$0xff]
      %v275 = vld [vmem:[%s236 + $0x60] sm:$0xff]
      %v276 = vld [vmem:[%s236 + $0x68] sm:$0xff]
      %v277 = vld [vmem:[%s236 + $0x70] sm:$0xff]
      %v278 = vld [vmem:[%s236 + $0x78] sm:$0xff]
      %v279 = vld [vmem:[%s236 + $0x80] sm:$0xff]
      %v280 = vld [vmem:[%s236 + $0x88] sm:$0xff]
      %v281 = vld [vmem:[%s236 + $0x90] sm:$0xff]
      %v282 = vld [vmem:[%s236 + $0x98] sm:$0xff]
      %v283 = vld [vmem:[%s236 + $0xa0] sm:$0xff]
      %v284 = vld [vmem:[%s236 + $0xa8] sm:$0xff]
      %v285 = vld [vmem:[%s236 + $0xb0] sm:$0xff]
      %v286 = vld [vmem:[%s236 + $0xb8] sm:$0xff]
      %v287 = vld [vmem:[%s236 + $0xc0] sm:$0xff]
      %v288 = vld [vmem:[%s236 + $0xc8] sm:$0xff]
      %v289 = vld [vmem:[%s236 + $0xd0] sm:$0xff]
      %v290 = vld [vmem:[%s236 + $0xd8] sm:$0xff]
      %v291 = vld [vmem:[%s236 + $0xe0] sm:$0xff]
      %v292 = vld [vmem:[%s236 + $0xe8] sm:$0xff]
      %v293 = vld [vmem:[%s236 + $0xf0] sm:$0xff]
      %v294 = vld [vmem:[%s236 + $0xf8] sm:$0xff]
      %v295 = vld [vmem:[%s236 + $0x100] sm:$0xff]
      %v296 = vld [vmem:[%s236 + $0x108] sm:$0xff]
      %v297 = vld [vmem:[%s236 + $0x110] sm:$0xff]
      %v298 = vld [vmem:[%s236 + $0x118] sm:$0xff]
      %v299 = vld [vmem:[%s236 + $0x120] sm:$0xff]
      %v300 = vld [vmem:[%s236 + $0x128] sm:$0xff]
      %v301 = vld [vmem:[%s236 + $0x130] sm:$0xff]
      %v302 = vld [vmem:[%s236 + $0x138] sm:$0xff]
      %v303 = vld [vmem:[%s236 + $0x140] sm:$0xff]
      %v304 = vld [vmem:[%s236 + $0x148] sm:$0xff]
      %v305 = vld [vmem:[%s236 + $0x150] sm:$0xff]
      %v306 = vld [vmem:[%s236 + $0x158] sm:$0xff]
      %v307 = vld [vmem:[%s236 + $0x160] sm:$0xff]
      %v308 = vld [vmem:[%s236 + $0x168] sm:$0xff]
      %v309 = vld [vmem:[%s236 + $0x170] sm:$0xff]
      %v310 = vld [vmem:[%s236 + $0x178] sm:$0xff]
      %v311 = vld [vmem:[%s236 + $0x180] sm:$0xff]
      %v312 = vld [vmem:[%s236 + $0x188] sm:$0xff]
      %v313 = vld [vmem:[%s236 + $0x190] sm:$0xff]
      %v314 = vld [vmem:[%s236 + $0x198] sm:$0xff]
      %v315 = vld [vmem:[%s236 + $0x1a0] sm:$0xff]
      %v316 = vld [vmem:[%s236 + $0x1a8] sm:$0xff]
      %v317 = vld [vmem:[%s236 + $0x1b0] sm:$0xff]
      %v318 = vld [vmem:[%s236 + $0x1b8] sm:$0xff]
      %v319 = vld [vmem:[%s236 + $0x1c0] sm:$0xff]
      %v320 = vld [vmem:[%s236 + $0x1c8] sm:$0xff]
      %v321 = vld [vmem:[%s236 + $0x1d0] sm:$0xff]
      %v322 = vld [vmem:[%s236 + $0x1d8] sm:$0xff]
      %v323 = vld [vmem:[%s236 + $0x1e0] sm:$0xff]
      %v324 = vld [vmem:[%s236 + $0x1e8] sm:$0xff]
      %v325 = vld [vmem:[%s236 + $0x1f0] sm:$0xff]
      %v326 = vld [vmem:[%s236 + $0x1f8] sm:$0xff]
      %v327 = vld [vmem:[%s236 + $0x200] sm:$0xff]
      %v328 = vld [vmem:[%s236 + $0x208] sm:$0xff]
      %v329 = vld [vmem:[%s236 + $0x210] sm:$0xff]
      %v330 = vld [vmem:[%s236 + $0x218] sm:$0xff]
      %v331 = vld [vmem:[%s236 + $0x220] sm:$0xff]
      %v332 = vld [vmem:[%s236 + $0x228] sm:$0xff]
      %v333 = vld [vmem:[%s236 + $0x230] sm:$0xff]
      %v334 = vld [vmem:[%s236 + $0x238] sm:$0xff]
      %v335 = vld [vmem:[%s236 + $0x240] sm:$0xff]
      %v336 = vld [vmem:[%s236 + $0x248] sm:$0xff]
      %v337 = vld [vmem:[%s236 + $0x250] sm:$0xff]
      %v338 = vld [vmem:[%s236 + $0x258] sm:$0xff]
      %v339 = vld [vmem:[%s236 + $0x260] sm:$0xff]
      %v340 = vld [vmem:[%s236 + $0x268] sm:$0xff]
      %v341 = vld [vmem:[%s236 + $0x270] sm:$0xff]
      %v342 = vld [vmem:[%s236 + $0x278] sm:$0xff]
      %v343 = vld [vmem:[%s236 + $0x280] sm:$0xff]
      %v344 = vld [vmem:[%s236 + $0x288] sm:$0xff]
      %v345 = vld [vmem:[%s236 + $0x290] sm:$0xff]
      %v346 = vld [vmem:[%s236 + $0x298] sm:$0xff]
      %v347 = vld [vmem:[%s236 + $0x2a0] sm:$0xff]
      %v348 = vld [vmem:[%s236 + $0x2a8] sm:$0xff]
      %v349 = vld [vmem:[%s236 + $0x2b0] sm:$0xff]
      %v350 = vld [vmem:[%s236 + $0x2b8] sm:$0xff]
      %v351 = vld [vmem:[%s236 + $0x2c0] sm:$0xff]
      %v352 = vld [vmem:[%s236 + $0x2c8] sm:$0xff]
      %v353 = vld [vmem:[%s236 + $0x2d0] sm:$0xff]
      %v354 = vld [vmem:[%s236 + $0x2d8] sm:$0xff]
      %v355 = vld [vmem:[%s236 + $0x2e0] sm:$0xff]
      %v356 = vld [vmem:[%s236 + $0x2e8] sm:$0xff]
      %v357 = vld [vmem:[%s236 + $0x2f0] sm:$0xff]
      %v358 = vld [vmem:[%s236 + $0x2f8] sm:$0xff]
      %v359 = vld [vmem:[%s236 + $0x300] sm:$0xff]
      %v360 = vld [vmem:[%s236 + $0x308] sm:$0xff]
      %v361 = vld [vmem:[%s236 + $0x310] sm:$0xff]
      %v362 = vld [vmem:[%s236 + $0x318] sm:$0xff]
      %v363 = vld [vmem:[%s236 + $0x320] sm:$0xff]
      %v364 = vld [vmem:[%s236 + $0x328] sm:$0xff]
      %v365 = vld [vmem:[%s236 + $0x330] sm:$0xff]
      %v366 = vld [vmem:[%s236 + $0x338] sm:$0xff]
      %v367 = vld [vmem:[%s236 + $0x340] sm:$0xff]
      %v368 = vld [vmem:[%s236 + $0x348] sm:$0xff]
      %v369 = vld [vmem:[%s236 + $0x350] sm:$0xff]
      %v370 = vld [vmem:[%s236 + $0x358] sm:$0xff]
      %v371 = vld [vmem:[%s236 + $0x360] sm:$0xff]
      %v372 = vld [vmem:[%s236 + $0x368] sm:$0xff]
      %v373 = vld [vmem:[%s236 + $0x370] sm:$0xff]
      %v374 = vld [vmem:[%s236 + $0x378] sm:$0xff]
      %v375 = vld [vmem:[%s236 + $0x380] sm:$0xff]
      %v376 = vld [vmem:[%s236 + $0x388] sm:$0xff]
      %v377 = vld [vmem:[%s236 + $0x390] sm:$0xff]
      %v378 = vld [vmem:[%s236 + $0x398] sm:$0xff]
      %v379 = vld [vmem:[%s236 + $0x3a0] sm:$0xff]
      %v380 = vld [vmem:[%s236 + $0x3a8] sm:$0xff]
      %v381 = vld [vmem:[%s236 + $0x3b0] sm:$0xff]
      %v382 = vld [vmem:[%s236 + $0x3b8] sm:$0xff]
      %v383 = vld [vmem:[%s236 + $0x3c0] sm:$0xff]
      %v384 = vld [vmem:[%s236 + $0x3c8] sm:$0xff]
      %v385 = vld [vmem:[%s236 + $0x3d0] sm:$0xff]
      %v386 = vld [vmem:[%s236 + $0x3d8] sm:$0xff]
      %v387 = vld [vmem:[%s236 + $0x3e0] sm:$0xff]
      %v388 = vld [vmem:[%s236 + $0x3e8] sm:$0xff]
      %v389 = vld [vmem:[%s236 + $0x3f0] sm:$0xff]
      %v390 = vld [vmem:[%s236 + $0x3f8] sm:$0xff]
      %v391 = vld [vmem:[%s236 + $0x400] sm:$0xff]
      %v392 = vld [vmem:[%s236 + $0x408] sm:$0xff]
      %v393 = vld [vmem:[%s236 + $0x410] sm:$0xff]
      %v394 = vld [vmem:[%s236 + $0x418] sm:$0xff]
      %v395 = vld [vmem:[%s236 + $0x420] sm:$0xff]
      %v396 = vld [vmem:[%s236 + $0x428] sm:$0xff]
      %v397 = vld [vmem:[%s236 + $0x430] sm:$0xff]
      %v398 = vld [vmem:[%s236 + $0x438] sm:$0xff]
      %v399 = vld [vmem:[%s236 + $0x440] sm:$0xff]
      %v400 = vld [vmem:[%s236 + $0x448] sm:$0xff]
      %v401 = vld [vmem:[%s236 + $0x450] sm:$0xff]
      %v402 = vld [vmem:[%s236 + $0x458] sm:$0xff]
      %v403 = vld [vmem:[%s236 + $0x460] sm:$0xff]
      %v404 = vld [vmem:[%s236 + $0x468] sm:$0xff]
      %v405 = vld [vmem:[%s236 + $0x470] sm:$0xff]
      %v406 = vld [vmem:[%s236 + $0x478] sm:$0xff]
      %v407 = vld [vmem:[%s240] sm:$0x3]
      %v409 = vlaneseq
      %v410 = vshrl.u32 %v409, 7
      %v411 = vsub.s32 0, %v410
      %v412 = vrot.slane %v407, %v411
      %v413 = vlaneseq
      %v414 = vshrl.u32 %v413, 7
      %v415 = vsub.s32 1, %v414
      %v416 = vrot.slane %v407, %v415
      %v429 = vunpack.c.l.b16 %v253
      %v430 = vunpack.c.h.b16 %v253
      %v431 = vunpack.c.l.b16 %v254
      %v432 = vunpack.c.h.b16 %v254
      %v433 = vunpack.c.l.b16 %v255
      %v434 = vunpack.c.h.b16 %v255
      %v435 = vunpack.c.l.b16 %v256
      %v436 = vunpack.c.h.b16 %v256
      %v437 = vunpack.c.l.b16 %v257
      %v438 = vunpack.c.l.b16 %v258
      %v439 = vunpack.c.h.b16 %v258
      %v440 = vunpack.c.l.b16 %v259
      %v441 = vunpack.c.h.b16 %v259
      %v442 = vunpack.c.l.b16 %v260
      %v443 = vunpack.c.h.b16 %v260
      %v444 = vunpack.c.l.b16 %v261
      %v445 = vunpack.c.h.b16 %v261
      %v446 = vunpack.c.l.b16 %v262
      %v447 = vpack.c.b16 %v438, %v429
      %v448 = vpack.c.b16 %v439, %v430
      %v449 = vpack.c.b16 %v440, %v431
      %v450 = vpack.c.b16 %v441, %v432
      %v451 = vpack.c.b16 %v442, %v433
      %v452 = vpack.c.b16 %v443, %v434
      %v453 = vpack.c.b16 %v444, %v435
      %v454 = vpack.c.b16 %v445, %v436
      %v455 = vpack.c.b16 %v446, %v437
      %v609 = vunpack.c.l.b16 %v263
      %v610 = vunpack.c.h.b16 %v263
      %v611 = vunpack.c.l.b16 %v264
      %v612 = vunpack.c.h.b16 %v264
      %v613 = vunpack.c.l.b16 %v265
      %v614 = vunpack.c.h.b16 %v265
      %v615 = vunpack.c.l.b16 %v266
      %v616 = vunpack.c.h.b16 %v266
      %v617 = vunpack.c.l.b16 %v267
      %v618 = vunpack.c.h.b16 %v267
      %v619 = vunpack.c.l.b16 %v268
      %v620 = vunpack.c.h.b16 %v268
      %v621 = vunpack.c.l.b16 %v269
      %v622 = vunpack.c.h.b16 %v269
      %v623 = vunpack.c.l.b16 %v270
      %v624 = vunpack.c.h.b16 %v270
      %v625 = vunpack.c.l.b16 %v271
      %v626 = vunpack.c.h.b16 %v271
      %v627 = vunpack.c.l.b16 %v272
      %v628 = vunpack.c.h.b16 %v272
      %v629 = vunpack.c.l.b16 %v273
      %v630 = vunpack.c.h.b16 %v273
      %v631 = vunpack.c.l.b16 %v274
      %v632 = vunpack.c.h.b16 %v274
      %v633 = vunpack.c.l.b16 %v275
      %v634 = vunpack.c.h.b16 %v275
      %v635 = vunpack.c.l.b16 %v276
      %v636 = vunpack.c.h.b16 %v276
      %v637 = vunpack.c.l.b16 %v277
      %v638 = vunpack.c.h.b16 %v277
      %v639 = vunpack.c.l.b16 %v278
      %v640 = vunpack.c.h.b16 %v278
      %v641 = vunpack.c.l.b16 %v279
      %v642 = vunpack.c.h.b16 %v279
      %v643 = vunpack.c.l.b16 %v280
      %v644 = vunpack.c.h.b16 %v280
      %v645 = vunpack.c.l.b16 %v281
      %v646 = vunpack.c.h.b16 %v281
      %v647 = vunpack.c.l.b16 %v282
      %v648 = vunpack.c.h.b16 %v282
      %v649 = vunpack.c.l.b16 %v283
      %v650 = vunpack.c.h.b16 %v283
      %v651 = vunpack.c.l.b16 %v284
      %v652 = vunpack.c.h.b16 %v284
      %v653 = vunpack.c.l.b16 %v285
      %v654 = vunpack.c.h.b16 %v285
      %v655 = vunpack.c.l.b16 %v286
      %v656 = vunpack.c.h.b16 %v286
      %v657 = vunpack.c.l.b16 %v287
      %v658 = vunpack.c.h.b16 %v287
      %v659 = vunpack.c.l.b16 %v288
      %v660 = vunpack.c.h.b16 %v288
      %v661 = vunpack.c.l.b16 %v289
      %v662 = vunpack.c.h.b16 %v289
      %v663 = vunpack.c.l.b16 %v290
      %v664 = vunpack.c.h.b16 %v290
      %v665 = vunpack.c.l.b16 %v291
      %v666 = vunpack.c.h.b16 %v291
      %v667 = vunpack.c.l.b16 %v292
      %v668 = vunpack.c.h.b16 %v292
      %v669 = vunpack.c.l.b16 %v293
      %v670 = vunpack.c.h.b16 %v293
      %v671 = vunpack.c.l.b16 %v294
      %v672 = vunpack.c.h.b16 %v294
      %v673 = vunpack.c.l.b16 %v295
      %v674 = vunpack.c.h.b16 %v295
      %v675 = vunpack.c.l.b16 %v296
      %v676 = vunpack.c.h.b16 %v296
      %v677 = vunpack.c.l.b16 %v297
      %v678 = vunpack.c.h.b16 %v297
      %v679 = vunpack.c.l.b16 %v298
      %v680 = vunpack.c.h.b16 %v298
      %v681 = vunpack.c.l.b16 %v299
      %v682 = vunpack.c.h.b16 %v299
      %v683 = vunpack.c.l.b16 %v300
      %v684 = vunpack.c.h.b16 %v300
      %v685 = vunpack.c.l.b16 %v301
      %v686 = vunpack.c.h.b16 %v301
      %v687 = vunpack.c.l.b16 %v302
      %v688 = vunpack.c.h.b16 %v302
      %v689 = vunpack.c.l.b16 %v303
      %v690 = vunpack.c.h.b16 %v303
      %v691 = vunpack.c.l.b16 %v304
      %v692 = vunpack.c.h.b16 %v304
      %v693 = vunpack.c.l.b16 %v305
      %v694 = vunpack.c.h.b16 %v305
      %v695 = vunpack.c.l.b16 %v306
      %v696 = vunpack.c.h.b16 %v306
      %v697 = vunpack.c.l.b16 %v307
      %v698 = vunpack.c.h.b16 %v307
      %v699 = vunpack.c.l.b16 %v308
      %v700 = vunpack.c.h.b16 %v308
      %v701 = vunpack.c.l.b16 %v309
      %v702 = vunpack.c.h.b16 %v309
      %v703 = vunpack.c.l.b16 %v310
      %v704 = vunpack.c.h.b16 %v310
      %v705 = vunpack.c.l.b16 %v311
      %v706 = vunpack.c.h.b16 %v311
      %v707 = vunpack.c.l.b16 %v312
      %v708 = vunpack.c.h.b16 %v312
      %v709 = vunpack.c.l.b16 %v313
      %v710 = vunpack.c.h.b16 %v313
      %v711 = vunpack.c.l.b16 %v314
      %v712 = vunpack.c.h.b16 %v314
      %v713 = vunpack.c.l.b16 %v315
      %v714 = vunpack.c.h.b16 %v315
      %v715 = vunpack.c.l.b16 %v316
      %v716 = vunpack.c.h.b16 %v316
      %v717 = vunpack.c.l.b16 %v317
      %v718 = vunpack.c.h.b16 %v317
      %v719 = vunpack.c.l.b16 %v318
      %v720 = vunpack.c.h.b16 %v318
      %v721 = vunpack.c.l.b16 %v319
      %v722 = vunpack.c.h.b16 %v319
      %v723 = vunpack.c.l.b16 %v320
      %v724 = vunpack.c.h.b16 %v320
      %v725 = vunpack.c.l.b16 %v321
      %v726 = vunpack.c.h.b16 %v321
      %v727 = vunpack.c.l.b16 %v322
      %v728 = vunpack.c.h.b16 %v322
      %v729 = vunpack.c.l.b16 %v323
      %v730 = vunpack.c.h.b16 %v323
      %v731 = vunpack.c.l.b16 %v324
      %v732 = vunpack.c.h.b16 %v324
      %v733 = vunpack.c.l.b16 %v325
      %v734 = vunpack.c.h.b16 %v325
      %v735 = vunpack.c.l.b16 %v326
      %v736 = vunpack.c.h.b16 %v326
      %v737 = vunpack.c.l.b16 %v327
      %v738 = vunpack.c.h.b16 %v327
      %v739 = vunpack.c.l.b16 %v328
      %v740 = vunpack.c.h.b16 %v328
      %v741 = vunpack.c.l.b16 %v329
      %v742 = vunpack.c.h.b16 %v329
      %v743 = vunpack.c.l.b16 %v330
      %v744 = vunpack.c.h.b16 %v330
      %v745 = vunpack.c.l.b16 %v331
      %v746 = vunpack.c.h.b16 %v331
      %v747 = vunpack.c.l.b16 %v332
      %v748 = vunpack.c.h.b16 %v332
      %v749 = vunpack.c.l.b16 %v333
      %v750 = vunpack.c.h.b16 %v333
      %v751 = vunpack.c.l.b16 %v334
      %v752 = vunpack.c.h.b16 %v334
      %v753 = vunpack.c.l.b16 %v335
      %v754 = vunpack.c.h.b16 %v335
      %v755 = vunpack.c.l.b16 %v336
      %v756 = vunpack.c.h.b16 %v336
      %v757 = vunpack.c.l.b16 %v337
      %v758 = vunpack.c.h.b16 %v337
      %v759 = vunpack.c.l.b16 %v338
      %v760 = vunpack.c.h.b16 %v338
      %v761 = vunpack.c.l.b16 %v339
      %v762 = vunpack.c.h.b16 %v339
      %v763 = vunpack.c.l.b16 %v340
      %v764 = vunpack.c.h.b16 %v340
      %v765 = vunpack.c.l.b16 %v341
      %v766 = vunpack.c.h.b16 %v341
      %v767 = vunpack.c.l.b16 %v342
      %v768 = vunpack.c.h.b16 %v342
      %v769 = vunpack.c.l.b16 %v343
      %v770 = vunpack.c.h.b16 %v343
      %v771 = vunpack.c.l.b16 %v344
      %v772 = vunpack.c.h.b16 %v344
      %v773 = vunpack.c.l.b16 %v345
      %v774 = vunpack.c.h.b16 %v345
      %v775 = vunpack.c.l.b16 %v346
      %v776 = vunpack.c.h.b16 %v346
      %v777 = vunpack.c.l.b16 %v347
      %v778 = vunpack.c.h.b16 %v347
      %v779 = vunpack.c.l.b16 %v348
      %v780 = vunpack.c.h.b16 %v348
      %v781 = vunpack.c.l.b16 %v349
      %v782 = vunpack.c.h.b16 %v349
      %v783 = vunpack.c.l.b16 %v350
      %v784 = vunpack.c.h.b16 %v350
      %v785 = vunpack.c.l.b16 %v351
      %v786 = vunpack.c.h.b16 %v351
      %v787 = vunpack.c.l.b16 %v352
      %v788 = vunpack.c.h.b16 %v352
      %v789 = vunpack.c.l.b16 %v353
      %v790 = vunpack.c.h.b16 %v353
      %v791 = vunpack.c.l.b16 %v354
      %v792 = vunpack.c.h.b16 %v354
      %v793 = vunpack.c.l.b16 %v355
      %v794 = vunpack.c.h.b16 %v355
      %v795 = vunpack.c.l.b16 %v356
      %v796 = vunpack.c.h.b16 %v356
      %v797 = vunpack.c.l.b16 %v357
      %v798 = vunpack.c.h.b16 %v357
      %v799 = vunpack.c.l.b16 %v358
      %v800 = vunpack.c.h.b16 %v358
      %v801 = vunpack.c.l.b16 %v359
      %v802 = vunpack.c.h.b16 %v359
      %v803 = vunpack.c.l.b16 %v360
      %v804 = vunpack.c.h.b16 %v360
      %v805 = vunpack.c.l.b16 %v361
      %v806 = vunpack.c.h.b16 %v361
      %v807 = vunpack.c.l.b16 %v362
      %v808 = vunpack.c.h.b16 %v362
      %v809 = vunpack.c.l.b16 %v363
      %v810 = vunpack.c.h.b16 %v363
      %v811 = vunpack.c.l.b16 %v364
      %v812 = vunpack.c.h.b16 %v364
      %v813 = vunpack.c.l.b16 %v365
      %v814 = vunpack.c.h.b16 %v365
      %v815 = vunpack.c.l.b16 %v366
      %v816 = vunpack.c.h.b16 %v366
      %v817 = vunpack.c.l.b16 %v367
      %v818 = vunpack.c.h.b16 %v367
      %v819 = vunpack.c.l.b16 %v368
      %v820 = vunpack.c.h.b16 %v368
      %v821 = vunpack.c.l.b16 %v369
      %v822 = vunpack.c.h.b16 %v369
      %v823 = vunpack.c.l.b16 %v370
      %v824 = vunpack.c.h.b16 %v370
      %v825 = vunpack.c.l.b16 %v371
      %v826 = vunpack.c.h.b16 %v371
      %v827 = vunpack.c.l.b16 %v372
      %v828 = vunpack.c.h.b16 %v372
      %v829 = vunpack.c.l.b16 %v373
      %v830 = vunpack.c.h.b16 %v373
      %v831 = vunpack.c.l.b16 %v374
      %v832 = vunpack.c.h.b16 %v374
      %v833 = vunpack.c.l.b16 %v375
      %v834 = vunpack.c.h.b16 %v375
      %v835 = vunpack.c.l.b16 %v376
      %v836 = vunpack.c.h.b16 %v376
      %v837 = vunpack.c.l.b16 %v377
      %v838 = vunpack.c.h.b16 %v377
      %v839 = vunpack.c.l.b16 %v378
      %v840 = vunpack.c.h.b16 %v378
      %v841 = vunpack.c.l.b16 %v379
      %v842 = vunpack.c.h.b16 %v379
      %v843 = vunpack.c.l.b16 %v380
      %v844 = vunpack.c.h.b16 %v380
      %v845 = vunpack.c.l.b16 %v381
      %v846 = vunpack.c.h.b16 %v381
      %v847 = vunpack.c.l.b16 %v382
      %v848 = vunpack.c.h.b16 %v382
      %v849 = vunpack.c.l.b16 %v383
      %v850 = vunpack.c.h.b16 %v383
      %v851 = vunpack.c.l.b16 %v384
      %v852 = vunpack.c.h.b16 %v384
      %v853 = vunpack.c.l.b16 %v385
      %v854 = vunpack.c.h.b16 %v385
      %v855 = vunpack.c.l.b16 %v386
      %v856 = vunpack.c.h.b16 %v386
      %v857 = vunpack.c.l.b16 %v387
      %v858 = vunpack.c.h.b16 %v387
      %v859 = vunpack.c.l.b16 %v388
      %v860 = vunpack.c.h.b16 %v388
      %v861 = vunpack.c.l.b16 %v389
      %v862 = vunpack.c.h.b16 %v389
      %v863 = vunpack.c.l.b16 %v390
      %v864 = vunpack.c.h.b16 %v390
      %v865 = vunpack.c.l.b16 %v391
      %v866 = vunpack.c.h.b16 %v391
      %v867 = vunpack.c.l.b16 %v392
      %v868 = vunpack.c.h.b16 %v392
      %v869 = vunpack.c.l.b16 %v393
      %v870 = vunpack.c.h.b16 %v393
      %v871 = vunpack.c.l.b16 %v394
      %v872 = vunpack.c.h.b16 %v394
      %v873 = vunpack.c.l.b16 %v395
      %v874 = vunpack.c.h.b16 %v395
      %v875 = vunpack.c.l.b16 %v396
      %v876 = vunpack.c.h.b16 %v396
      %v877 = vunpack.c.l.b16 %v397
      %v878 = vunpack.c.h.b16 %v397
      %v879 = vunpack.c.l.b16 %v398
      %v880 = vunpack.c.h.b16 %v398
      %v881 = vunpack.c.l.b16 %v399
      %v882 = vunpack.c.h.b16 %v399
      %v883 = vunpack.c.l.b16 %v400
      %v884 = vunpack.c.h.b16 %v400
      %v885 = vunpack.c.l.b16 %v401
      %v886 = vunpack.c.h.b16 %v401
      %v887 = vunpack.c.l.b16 %v402
      %v888 = vunpack.c.h.b16 %v402
      %v889 = vunpack.c.l.b16 %v403
      %v890 = vunpack.c.h.b16 %v403
      %v891 = vunpack.c.l.b16 %v404
      %v892 = vunpack.c.h.b16 %v404
      %v893 = vunpack.c.l.b16 %v405
      %v894 = vunpack.c.h.b16 %v405
      %v895 = vunpack.c.l.b16 %v406
      %v896 = vunpack.c.h.b16 %v406
      %v897 = vpack.c.b16 %v611, %v609
      %v898 = vpack.c.b16 %v612, %v610
      %v899 = vpack.c.b16 %v615, %v613
      %v900 = vpack.c.b16 %v616, %v614
      %v901 = vpack.c.b16 %v619, %v617
      %v902 = vpack.c.b16 %v620, %v618
      %v903 = vpack.c.b16 %v623, %v621
      %v904 = vpack.c.b16 %v624, %v622
      %v905 = vpack.c.b16 %v627, %v625
      %v906 = vpack.c.b16 %v628, %v626
      %v907 = vpack.c.b16 %v631, %v629
      %v908 = vpack.c.b16 %v632, %v630
      %v909 = vpack.c.b16 %v635, %v633
      %v910 = vpack.c.b16 %v636, %v634
      %v911 = vpack.c.b16 %v639, %v637
      %v912 = vpack.c.b16 %v640, %v638
      %v913 = vpack.c.b16 %v643, %v641
      %v914 = vpack.c.b16 %v644, %v642
      %v915 = vpack.c.b16 %v647, %v645
      %v916 = vpack.c.b16 %v648, %v646
      %v917 = vpack.c.b16 %v651, %v649
      %v918 = vpack.c.b16 %v652, %v650
      %v919 = vpack.c.b16 %v655, %v653
      %v920 = vpack.c.b16 %v656, %v654
      %v921 = vpack.c.b16 %v659, %v657
      %v922 = vpack.c.b16 %v660, %v658
      %v923 = vpack.c.b16 %v663, %v661
      %v924 = vpack.c.b16 %v664, %v662
      %v925 = vpack.c.b16 %v667, %v665
      %v926 = vpack.c.b16 %v668, %v666
      %v927 = vpack.c.b16 %v671, %v669
      %v928 = vpack.c.b16 %v672, %v670
      %v929 = vpack.c.b16 %v675, %v673
      %v930 = vpack.c.b16 %v676, %v674
      %v931 = vpack.c.b16 %v679, %v677
      %v932 = vpack.c.b16 %v680, %v678
      %v933 = vpack.c.b16 %v683, %v681
      %v934 = vpack.c.b16 %v684, %v682
      %v935 = vpack.c.b16 %v687, %v685
      %v936 = vpack.c.b16 %v688, %v686
      %v937 = vpack.c.b16 %v691, %v689
      %v938 = vpack.c.b16 %v692, %v690
      %v939 = vpack.c.b16 %v695, %v693
      %v940 = vpack.c.b16 %v696, %v694
      %v941 = vpack.c.b16 %v699, %v697
      %v942 = vpack.c.b16 %v700, %v698
      %v943 = vpack.c.b16 %v703, %v701
      %v944 = vpack.c.b16 %v704, %v702
      %v945 = vpack.c.b16 %v707, %v705
      %v946 = vpack.c.b16 %v708, %v706
      %v947 = vpack.c.b16 %v711, %v709
      %v948 = vpack.c.b16 %v712, %v710
      %v949 = vpack.c.b16 %v715, %v713
      %v950 = vpack.c.b16 %v716, %v714
      %v951 = vpack.c.b16 %v719, %v717
      %v952 = vpack.c.b16 %v720, %v718
      %v953 = vpack.c.b16 %v723, %v721
      %v954 = vpack.c.b16 %v724, %v722
      %v955 = vpack.c.b16 %v727, %v725
      %v956 = vpack.c.b16 %v728, %v726
      %v957 = vpack.c.b16 %v731, %v729
      %v958 = vpack.c.b16 %v732, %v730
      %v959 = vpack.c.b16 %v735, %v733
      %v960 = vpack.c.b16 %v736, %v734
      %v961 = vpack.c.b16 %v739, %v737
      %v962 = vpack.c.b16 %v740, %v738
      %v963 = vpack.c.b16 %v743, %v741
      %v964 = vpack.c.b16 %v744, %v742
      %v965 = vpack.c.b16 %v747, %v745
      %v966 = vpack.c.b16 %v748, %v746
      %v967 = vpack.c.b16 %v751, %v749
      %v968 = vpack.c.b16 %v752, %v750
      %v969 = vpack.c.b16 %v755, %v753
      %v970 = vpack.c.b16 %v756, %v754
      %v971 = vpack.c.b16 %v759, %v757
      %v972 = vpack.c.b16 %v760, %v758
      %v973 = vpack.c.b16 %v763, %v761
      %v974 = vpack.c.b16 %v764, %v762
      %v975 = vpack.c.b16 %v767, %v765
      %v976 = vpack.c.b16 %v768, %v766
      %v977 = vpack.c.b16 %v771, %v769
      %v978 = vpack.c.b16 %v772, %v770
      %v979 = vpack.c.b16 %v775, %v773
      %v980 = vpack.c.b16 %v776, %v774
      %v981 = vpack.c.b16 %v779, %v777
      %v982 = vpack.c.b16 %v780, %v778
      %v983 = vpack.c.b16 %v783, %v781
      %v984 = vpack.c.b16 %v784, %v782
      %v985 = vpack.c.b16 %v787, %v785
      %v986 = vpack.c.b16 %v788, %v786
      %v987 = vpack.c.b16 %v791, %v789
      %v988 = vpack.c.b16 %v792, %v790
      %v989 = vpack.c.b16 %v795, %v793
      %v990 = vpack.c.b16 %v796, %v794
      %v991 = vpack.c.b16 %v799, %v797
      %v992 = vpack.c.b16 %v800, %v798
      %v993 = vpack.c.b16 %v803, %v801
      %v994 = vpack.c.b16 %v804, %v802
      %v995 = vpack.c.b16 %v807, %v805
      %v996 = vpack.c.b16 %v808, %v806
      %v997 = vpack.c.b16 %v811, %v809
      %v998 = vpack.c.b16 %v812, %v810
      %v999 = vpack.c.b16 %v815, %v813
      %v1000 = vpack.c.b16 %v816, %v814
      %v1001 = vpack.c.b16 %v819, %v817
      %v1002 = vpack.c.b16 %v820, %v818
      %v1003 = vpack.c.b16 %v823, %v821
      %v1004 = vpack.c.b16 %v824, %v822
      %v1005 = vpack.c.b16 %v827, %v825
      %v1006 = vpack.c.b16 %v828, %v826
      %v1007 = vpack.c.b16 %v831, %v829
      %v1008 = vpack.c.b16 %v832, %v830
      %v1009 = vpack.c.b16 %v835, %v833
      %v1010 = vpack.c.b16 %v836, %v834
      %v1011 = vpack.c.b16 %v839, %v837
      %v1012 = vpack.c.b16 %v840, %v838
      %v1013 = vpack.c.b16 %v843, %v841
      %v1014 = vpack.c.b16 %v844, %v842
      %v1015 = vpack.c.b16 %v847, %v845
      %v1016 = vpack.c.b16 %v848, %v846
      %v1017 = vpack.c.b16 %v851, %v849
      %v1018 = vpack.c.b16 %v852, %v850
      %v1019 = vpack.c.b16 %v855, %v853
      %v1020 = vpack.c.b16 %v856, %v854
      %v1021 = vpack.c.b16 %v859, %v857
      %v1022 = vpack.c.b16 %v860, %v858
      %v1023 = vpack.c.b16 %v863, %v861
      %v1024 = vpack.c.b16 %v864, %v862
      %v1025 = vpack.c.b16 %v867, %v865
      %v1026 = vpack.c.b16 %v868, %v866
      %v1027 = vpack.c.b16 %v871, %v869
      %v1028 = vpack.c.b16 %v872, %v870
      %v1029 = vpack.c.b16 %v875, %v873
      %v1030 = vpack.c.b16 %v876, %v874
      %v1031 = vpack.c.b16 %v879, %v877
      %v1032 = vpack.c.b16 %v880, %v878
      %v1033 = vpack.c.b16 %v883, %v881
      %v1034 = vpack.c.b16 %v884, %v882
      %v1035 = vpack.c.b16 %v887, %v885
      %v1036 = vpack.c.b16 %v888, %v886
      %v1037 = vpack.c.b16 %v891, %v889
      %v1038 = vpack.c.b16 %v892, %v890
      %v1039 = vpack.c.b16 %v895, %v893
      %v1040 = vpack.c.b16 %v896, %v894
      %1185 = vmatprep.subr.bf16.mxu0 %v898
      %1186 = vmatpush1.bf16.msra.mxu0 %v897
      %1187 = vmatprep.subr.bf16.mxu0 %v900
      %1188 = vmatpush1.bf16.msra.mxu0 %v899
      %1189 = vmatprep.subr.bf16.mxu0 %v902
      %1190 = vmatpush1.bf16.msra.mxu0 %v901
      %1191 = vmatprep.subr.bf16.mxu0 %v904
      %1192 = vmatpush1.bf16.msra.mxu0 %v903
      %1193 = vmatprep.subr.bf16.mxu0 %v906
      %1194 = vmatpush1.bf16.msra.mxu0 %v905
      %1195 = vmatprep.subr.bf16.mxu0 %v908
      %1196 = vmatpush1.bf16.msra.mxu0 %v907
      %1197 = vmatprep.subr.bf16.mxu0 %v910
      %1198 = vmatpush1.bf16.msra.mxu0 %v909
      %1199 = vmatprep.subr.bf16.mxu0 %v912
      %1200 = vmatpush1.bf16.msra.mxu0 %v911
      %1201 = vmatprep.subr.bf16.mxu0 %v914
      %1202 = vmatpush1.bf16.msra.mxu0 %v913
      %1203 = vmatprep.subr.bf16.mxu0 %v916
      %1204 = vmatpush1.bf16.msra.mxu0 %v915
      %1205 = vmatprep.subr.bf16.mxu0 %v918
      %1206 = vmatpush1.bf16.msra.mxu0 %v917
      %1207 = vmatprep.subr.bf16.mxu0 %v920
      %1208 = vmatpush1.bf16.msra.mxu0 %v919
      %1209 = vmatprep.subr.bf16.mxu0 %v922
      %1210 = vmatpush1.bf16.msra.mxu0 %v921
      %1211 = vmatprep.subr.bf16.mxu0 %v924
      %1212 = vmatpush1.bf16.msra.mxu0 %v923
      %1213 = vmatprep.subr.bf16.mxu0 %v926
      %1214 = vmatpush1.bf16.msra.mxu0 %v925
      %1215 = vmatprep.subr.bf16.mxu0 %v928
      %1216 = vmatpush1.bf16.msra.mxu0 %v927
      %1217 = vmatprep.mubr.bf16.mxu0 %v448
      %1218 = vmatmul.mubr.bf16.gmra.mrb[0].mxu0 %v447
      %v1219 = vpop.f32.mrb[0].mxu0
      %v1220 = vadd.f32 %v412, %v1219
      %v1221 = vpop.f32.mrb[0].mxu0
      %v1222 = vadd.f32 %v416, %v1221
      %v1223 = vpop.f32.mrb[0].mxu0
      %v1224 = vadd.f32 %v412, %v1223
      %v1225 = vpop.f32.mrb[0].mxu0
      %v1226 = vadd.f32 %v416, %v1225
      %1227 = vdwg.mxu0
      %1228 = vmatprep.subr.bf16.mxu0 %v930
      %1229 = vmatpush1.bf16.msra.mxu0 %v929
      %1230 = vmatprep.subr.bf16.mxu0 %v932
      %1231 = vmatpush1.bf16.msra.mxu0 %v931
      %1232 = vmatprep.subr.bf16.mxu0 %v934
      %1233 = vmatpush1.bf16.msra.mxu0 %v933
      %1234 = vmatprep.subr.bf16.mxu0 %v936
      %1235 = vmatpush1.bf16.msra.mxu0 %v935
      %1236 = vmatprep.subr.bf16.mxu0 %v938
      %1237 = vmatpush1.bf16.msra.mxu0 %v937
      %1238 = vmatprep.subr.bf16.mxu0 %v940
      %1239 = vmatpush1.bf16.msra.mxu0 %v939
      %1240 = vmatprep.subr.bf16.mxu0 %v942
      %1241 = vmatpush1.bf16.msra.mxu0 %v941
      %1242 = vmatprep.subr.bf16.mxu0 %v944
      %1243 = vmatpush1.bf16.msra.mxu0 %v943
      %1244 = vmatprep.subr.bf16.mxu0 %v946
      %1245 = vmatpush1.bf16.msra.mxu0 %v945
      %1246 = vmatprep.subr.bf16.mxu0 %v948
      %1247 = vmatpush1.bf16.msra.mxu0 %v947
      %1248 = vmatprep.subr.bf16.mxu0 %v950
      %1249 = vmatpush1.bf16.msra.mxu0 %v949
      %1250 = vmatprep.subr.bf16.mxu0 %v952
      %1251 = vmatpush1.bf16.msra.mxu0 %v951
      %1252 = vmatprep.subr.bf16.mxu0 %v954
      %1253 = vmatpush1.bf16.msra.mxu0 %v953
      %1254 = vmatprep.subr.bf16.mxu0 %v956
      %1255 = vmatpush1.bf16.msra.mxu0 %v955
      %1256 = vmatprep.subr.bf16.mxu0 %v958
      %1257 = vmatpush1.bf16.msra.mxu0 %v957
      %1258 = vmatprep.subr.bf16.mxu0 %v960
      %1259 = vmatpush1.bf16.msra.mxu0 %v959
      %1260 = vmatprep.mubr.bf16.mxu0 %v450
      %1261 = vmatmul.mubr.bf16.gmra.mrb[0].mxu0 %v449
      %v1262 = vpop.f32.mrb[0].mxu0
      %v1263 = vadd.f32 %v1220, %v1262
      %v1264 = vpop.f32.mrb[0].mxu0
      %v1265 = vadd.f32 %v1222, %v1264
      %v1266 = vpop.f32.mrb[0].mxu0
      %v1267 = vadd.f32 %v1224, %v1266
      %v1268 = vpop.f32.mrb[0].mxu0
      %v1269 = vadd.f32 %v1226, %v1268
      %1270 = vdwg.mxu0
      %1271 = vmatprep.subr.bf16.mxu0 %v962
      %1272 = vmatpush1.bf16.msra.mxu0 %v961
      %1273 = vmatprep.subr.bf16.mxu0 %v964
      %1274 = vmatpush1.bf16.msra.mxu0 %v963
      %1275 = vmatprep.subr.bf16.mxu0 %v966
      %1276 = vmatpush1.bf16.msra.mxu0 %v965
      %1277 = vmatprep.subr.bf16.mxu0 %v968
      %1278 = vmatpush1.bf16.msra.mxu0 %v967
      %1279 = vmatprep.subr.bf16.mxu0 %v970
      %1280 = vmatpush1.bf16.msra.mxu0 %v969
      %1281 = vmatprep.subr.bf16.mxu0 %v972
      %1282 = vmatpush1.bf16.msra.mxu0 %v971
      %1283 = vmatprep.subr.bf16.mxu0 %v974
      %1284 = vmatpush1.bf16.msra.mxu0 %v973
      %1285 = vmatprep.subr.bf16.mxu0 %v976
      %1286 = vmatpush1.bf16.msra.mxu0 %v975
      %1287 = vmatprep.subr.bf16.mxu0 %v978
      %1288 = vmatpush1.bf16.msra.mxu0 %v977
      %1289 = vmatprep.subr.bf16.mxu0 %v980
      %1290 = vmatpush1.bf16.msra.mxu0 %v979
      %1291 = vmatprep.subr.bf16.mxu0 %v982
      %1292 = vmatpush1.bf16.msra.mxu0 %v981
      %1293 = vmatprep.subr.bf16.mxu0 %v984
      %1294 = vmatpush1.bf16.msra.mxu0 %v983
      %1295 = vmatprep.subr.bf16.mxu0 %v986
      %1296 = vmatpush1.bf16.msra.mxu0 %v985
      %1297 = vmatprep.subr.bf16.mxu0 %v988
      %1298 = vmatpush1.bf16.msra.mxu0 %v987
      %1299 = vmatprep.subr.bf16.mxu0 %v990
      %1300 = vmatpush1.bf16.msra.mxu0 %v989
      %1301 = vmatprep.subr.bf16.mxu0 %v992
      %1302 = vmatpush1.bf16.msra.mxu0 %v991
      %1303 = vmatprep.mubr.bf16.mxu0 %v452
      %1304 = vmatmul.mubr.bf16.gmra.mrb[0].mxu0 %v451
      %v1305 = vpop.f32.mrb[0].mxu0
      %v1306 = vadd.f32 %v1263, %v1305
      %v1307 = vpop.f32.mrb[0].mxu0
      %v1308 = vadd.f32 %v1265, %v1307
      %v1309 = vpop.f32.mrb[0].mxu0
      %v1310 = vadd.f32 %v1267, %v1309
      %v1311 = vpop.f32.mrb[0].mxu0
      %v1312 = vadd.f32 %v1269, %v1311
      %1313 = vdwg.mxu0
      %1314 = vmatprep.subr.bf16.mxu0 %v994
      %1315 = vmatpush1.bf16.msra.mxu0 %v993
      %1316 = vmatprep.subr.bf16.mxu0 %v996
      %1317 = vmatpush1.bf16.msra.mxu0 %v995
      %1318 = vmatprep.subr.bf16.mxu0 %v998
      %1319 = vmatpush1.bf16.msra.mxu0 %v997
      %1320 = vmatprep.subr.bf16.mxu0 %v1000
      %1321 = vmatpush1.bf16.msra.mxu0 %v999
      %1322 = vmatprep.subr.bf16.mxu0 %v1002
      %1323 = vmatpush1.bf16.msra.mxu0 %v1001
      %1324 = vmatprep.subr.bf16.mxu0 %v1004
      %1325 = vmatpush1.bf16.msra.mxu0 %v1003
      %1326 = vmatprep.subr.bf16.mxu0 %v1006
      %1327 = vmatpush1.bf16.msra.mxu0 %v1005
      %1328 = vmatprep.subr.bf16.mxu0 %v1008
      %1329 = vmatpush1.bf16.msra.mxu0 %v1007
      %1330 = vmatprep.subr.bf16.mxu0 %v1010
      %1331 = vmatpush1.bf16.msra.mxu0 %v1009
      %1332 = vmatprep.subr.bf16.mxu0 %v1012
      %1333 = vmatpush1.bf16.msra.mxu0 %v1011
      %1334 = vmatprep.subr.bf16.mxu0 %v1014
      %1335 = vmatpush1.bf16.msra.mxu0 %v1013
      %1336 = vmatprep.subr.bf16.mxu0 %v1016
      %1337 = vmatpush1.bf16.msra.mxu0 %v1015
      %1338 = vmatprep.subr.bf16.mxu0 %v1018
      %1339 = vmatpush1.bf16.msra.mxu0 %v1017
      %1340 = vmatprep.subr.bf16.mxu0 %v1020
      %1341 = vmatpush1.bf16.msra.mxu0 %v1019
      %1342 = vmatprep.subr.bf16.mxu0 %v1022
      %1343 = vmatpush1.bf16.msra.mxu0 %v1021
      %1344 = vmatprep.subr.bf16.mxu0 %v1024
      %1345 = vmatpush1.bf16.msra.mxu0 %v1023
      %1346 = vmatprep.mubr.bf16.mxu0 %v454
      %1347 = vmatmul.mubr.bf16.gmra.mrb[0].mxu0 %v453
      %v1348 = vpop.f32.mrb[0].mxu0
      %v1349 = vadd.f32 %v1306, %v1348
      %v1350 = vpop.f32.mrb[0].mxu0
      %v1351 = vadd.f32 %v1308, %v1350
      %v1352 = vpop.f32.mrb[0].mxu0
      %v1353 = vadd.f32 %v1310, %v1352
      %v1354 = vpop.f32.mrb[0].mxu0
      %v1355 = vadd.f32 %v1312, %v1354
      %1356 = vdwg.mxu0
      %1357 = vmatprep.subr.bf16.mxu0 %v1026
      %1358 = vmatpush1.bf16.msra.mxu0 %v1025
      %1359 = vmatprep.subr.bf16.mxu0 %v1028
      %1360 = vmatpush1.bf16.msra.mxu0 %v1027
      %1361 = vmatprep.subr.bf16.mxu0 %v1030
      %1362 = vmatpush1.bf16.msra.mxu0 %v1029
      %1363 = vmatprep.subr.bf16.mxu0 %v1032
      %1364 = vmatpush1.bf16.msra.mxu0 %v1031
      %1365 = vmatprep.subr.bf16.mxu0 %v1034
      %1366 = vmatpush1.bf16.msra.mxu0 %v1033
      %1367 = vmatprep.subr.bf16.mxu0 %v1036
      %1368 = vmatpush1.bf16.msra.mxu0 %v1035
      %1369 = vmatprep.subr.bf16.mxu0 %v1038
      %1370 = vmatpush1.bf16.msra.mxu0 %v1037
      %1371 = vmatprep.subr.bf16.mxu0 %v1040
      %1372 = vmatpush1.bf16.msra.mxu0 %v1039
      %1373 = vmatprep.subr.bf16.mxu0 0
      %1374 = vmatpush1.bf16.msra.mxu0 0
      %1375 = vmatprep.subr.bf16.mxu0 0
      %1376 = vmatpush1.bf16.msra.mxu0 0
      %1377 = vmatprep.subr.bf16.mxu0 0
      %1378 = vmatpush1.bf16.msra.mxu0 0
      %1379 = vmatprep.subr.bf16.mxu0 0
      %1380 = vmatpush1.bf16.msra.mxu0 0
      %1381 = vmatprep.subr.bf16.mxu0 0
      %1382 = vmatpush1.bf16.msra.mxu0 0
      %1383 = vmatprep.subr.bf16.mxu0 0
      %1384 = vmatpush1.bf16.msra.mxu0 0
      %1385 = vmatprep.subr.bf16.mxu0 0
      %1386 = vmatpush1.bf16.msra.mxu0 0
      %1387 = vmatprep.subr.bf16.mxu0 0
      %1388 = vmatpush1.bf16.msra.mxu0 0
      %1389 = vmatprep.mubr.bf16.mxu0 0
      %1390 = vmatmul.mubr.bf16.gmra.mrb[0].mxu0 %v455
      %v1391 = vpop.f32.mrb[0].mxu0
      %v1392 = vadd.f32 %v1349, %v1391
      %v1393 = vpop.f32.mrb[0].mxu0
      %v1394 = vadd.f32 %v1351, %v1393
      %v1395 = vpop.f32.mrb[0].mxu0
      %v1396 = vadd.f32 %v1353, %v1395
      %v1397 = vpop.f32.mrb[0].mxu0
      %v1398 = vadd.f32 %v1355, %v1397
      %1399 = vdwg.mxu0
      %vm1400 = vcmp.ge.f32.partialorder %v1392, 0.0
      %vm1401 = vcmp.ge.f32.partialorder %v1394, 0.0
      %vm1402 = vcmp.ge.f32.partialorder %v1396, 0.0
      %vm1403 = vcmp.ge.f32.partialorder %v1398, 0.0
      %v1404 = vmul.f32 %v1392, 0.2
      %v1405 = vmul.f32 %v1394, 0.2
      %v1406 = vmul.f32 %v1396, 0.2
      %v1407 = vmul.f32 %v1398, 0.2
      %v1408 = vsel %vm1400, %v1392, %v1404
      %v1409 = vsel %vm1401, %v1394, %v1405
      %v1410 = vsel %vm1402, %v1396, %v1406
      %v1411 = vsel %vm1403, %v1398, %v1407
      %v1412 = vpack.c.bf16 %v1410, %v1408
      %v1413 = vpack.c.bf16 %v1411, %v1409
      %v1416 = vunpack.c.l.b16 %v1412
      %v1417 = vunpack.c.l.b16 %v1413
      %v1418 = vunpack.c.h.b16 %v1412
      %v1419 = vunpack.c.h.b16 %v1413
      %v1420 = vpack.c.b16 %v1417, %v1416
      %v1421 = vpack.c.b16 %v1419, %v1418
      %1424 = vst [vmem:[%s250] sm:$0xff] %v1420
      %1425 = vst [vmem:[%s250 + $0x8] sm:$0xff] %v1421
      %s1426 = smul.u32 2, %s19
      %p1427 = scmp.lt.s32.totalorder %s18, 2
      %s1428 = scalar_select %p1427, %s18, 2
      %p1429 = scmp.lt.s32.totalorder %s1426, 1
      %s1430 = scalar_select %p1429, %s1426, 1
      %s1431 = smul.addr %s1430, 2
      %s1432 = smul.addr %s1428, 4
      %s1433 = sadd.s32 %s1431, %s1432
      %s1434 = smul.addr %s1433, 4
      %s1435 = scalar_lea.vmem %s3, %s1434
      // Predicated region
      $region33: #{forward.13} parent=31 // pred_check
        %p1436 = pneg %p126
      $region34: #{forward.13} parent=31 // pred_check_branch
        %1438 = sbr.rel (%p1436) target = $region36
      $region35: #{forward.13} parent=31 // pred_region
        %s1439 = smul.u32 2, %s19
      $region36: #{forward.13} parent=31 // pred_fallthru
        _
    $region32: #{forward.13} parent=5 // pred_fallthru
      _
    %p1440 = scmp.le.s32.totalorder 2, %s9
    // Predicated region
    $region37: #{forward.13} parent=5 // pred_check
      %p1441 = pneg %p1440
    $region38: #{forward.13} parent=5 // pred_check_branch
      %1443 = sbr.rel (%p1441) target = $region40
    $region39: #{forward.13} parent=5 // pred_region
      %s1444 = ssub.s32 %s9, 2
      // Predicated region
      $region41: #{forward.13} parent=39 // pred_check
        %p1445 = pneg %p132
      $region42: #{forward.13} parent=39 // pred_check_branch
        %1447 = sbr.rel (%p1445) target = $region44
      $region43: #{forward.13} parent=39 // pred_region
        %s1448 = smul.u32 2, %s21
        %p1449 = scmp.lt.s32.totalorder %s20, 2
        %s1450 = scalar_select %p1449, %s20, 2
        %p1451 = scmp.lt.s32.totalorder %s1448, 1
        %s1452 = scalar_select %p1451, %s1448, 1
        %s1453 = smul.addr %s1452, 2
        %s1454 = smul.addr %s1450, 4
        %s1455 = sadd.s32 %s1453, %s1454
        %s1456 = smul.addr %s1455, 4
        %s1457 = scalar_lea.vmem %s3, %s1456
      $region44: #{forward.13} parent=39 // pred_fallthru
        _
    $region40: #{forward.13} parent=5 // pred_fallthru
      _
  $region6: #{forward.13} parent=0 // loop_footer
    %s13 = sadd.s32 1, %s9
  $region7: #{forward.13} parent=0 // loop_footer_branch
    %8 = sbr.rel target = $region3
  $region8: #{forward.13} parent=0 // loop_exit
    _

// kernel: forward.14
$region0: #{forward.14}
  #allocation0 [shape = 'u32[]', space=smem, size = 0x4, offset = 0x4, fixed_abs, tag = 'smem constant byte address 0x4 - core index']
  #allocation1 [shape = 'u32[144,128]{1,0:T(1,128)}', space=vmem, size = 0x12000, scoped, tag = 'internal scratch']
  %s0 = inlined_call_operand.vmem [shape: bf16[3,16,256], index: 0, kind: input, shape index: {}]
  %s1 = inlined_call_operand.vmem [shape: bf16[3,256,32], index: 1, kind: input, shape index: {}]
  %s2 = inlined_call_operand.vmem [shape: f32[3,1,32], index: 2, kind: input, shape index: {}]
  %s3 = inlined_call_operand.vmem [shape: bf16[3,16,32], index: 3, kind: output, shape index: {}]
  %s4 = sld [smem:[#allocation0]]
  $region45: #{forward.14} parent=0
    _
  %s6 = ssub.s32 1, %s4
  %s7 = scalar_select 0, %s6, %s4
  loop: start=0, step=1, limit=5
  $region2: #{forward.14} parent=0 // loop_pre_header
    _
  $region3: #{forward.14} parent=0 // loop_header
    %s9 = sphi 0, %s13
    %p10 = scmp.ge.s32.totalorder %s9, 5
    %s16 = sphi 0, %s28
    %s17 = sphi 0, %s24
    %s18 = sphi 0, %s16
    %s19 = sphi 0, %s17
    %s20 = sphi 0, %s18
    %s21 = sphi 0, %s19
    %s33 = sphi 0, %s35
    %s36 = sphi 0, %s33
    %s37 = sphi 0, %s36
    %s53 = sphi 0, %s37
    %s59 = sphi 0, %s61
    %s62 = sphi 0, %s59
    %s63 = sphi 0, %s62
    %s79 = sphi 0, %s63
    %s85 = sphi 0, %s87
    %s88 = sphi 0, %s85
    %s89 = sphi 0, %s88
    %s105 = sphi 0, %s89
    %s113 = sphi 0, %s115
    %s116 = sphi 0, %s113
    %s117 = sphi 0, %s116
    %s133 = sphi 0, %s117
  $region4: #{forward.14} parent=0 // loop_header_branch
    %12 = sbr.rel (%p10) target = $region8
  $region5: #{forward.14} parent=0 // loop_body
    %s14 = ssub.s32 %s9, 1
    %s15 = ssub.s32 %s9, 2
    %s22 = sadd.s32 1, %s17
    %p23 = scmp.ge.s32.totalorder %s22, 1
    %s24 = scalar_select %p23, 0, %s22
    %s25 = sadd.s32 1, %s16
    %s26 = scalar_select %p23, %s25, %s16
    %p27 = scmp.ge.s32.totalorder %s26, 3
    %s28 = scalar_select %p27, 0, %s26
    %s29 = ssub.s32 %s16, %s28
    %s30 = ssub.s32 %s17, %s24
    %s31 = sor.u32 %s29, %s30
    %p32 = scmp.eq.s32.totalorder %s31, 0
    %s34 = sadd.s32 %s33, 1
    %s35 = scalar_select %p32, %s33, %s34
    %p38 = pneg %p32
    %p39 = scmp.eq.s32.totalorder %s9, 2
    %p40 = por %p38, %p39
    %p41 = scmp.ne.s32.totalorder %s33, %s36
    %p42 = scmp.eq.s32.totalorder %s9, 0
    %p43 = por %p41, %p42
    %p44 = scmp.ne.s32.totalorder %s33, %s36
    %p45 = scmp.eq.s32.totalorder %s14, 2
    %p46 = por %p44, %p45
    %p47 = scmp.ne.s32.totalorder %s36, %s37
    %p48 = scmp.eq.s32.totalorder %s14, 0
    %p49 = por %p47, %p48
    %p50 = scmp.ne.s32.totalorder %s36, %s37
    %p51 = scmp.eq.s32.totalorder %s15, 2
    %p52 = por %p50, %p51
    %p54 = scmp.ne.s32.totalorder %s37, %s53
    %p55 = scmp.eq.s32.totalorder %s15, 0
    %p56 = por %p54, %p55
    %s57 = ssub.s32 %s16, %s28
    %p58 = scmp.eq.s32.totalorder %s57, 0
    %s60 = sadd.s32 %s59, 1
    %s61 = scalar_select %p58, %s59, %s60
    %p64 = pneg %p58
    %p65 = scmp.eq.s32.totalorder %s9, 2
    %p66 = por %p64, %p65
    %p67 = scmp.ne.s32.totalorder %s59, %s62
    %p68 = scmp.eq.s32.totalorder %s9, 0
    %p69 = por %p67, %p68
    %p70 = scmp.ne.s32.totalorder %s59, %s62
    %p71 = scmp.eq.s32.totalorder %s14, 2
    %p72 = por %p70, %p71
    %p73 = scmp.ne.s32.totalorder %s62, %s63
    %p74 = scmp.eq.s32.totalorder %s14, 0
    %p75 = por %p73, %p74
    %p76 = scmp.ne.s32.totalorder %s62, %s63
    %p77 = scmp.eq.s32.totalorder %s15, 2
    %p78 = por %p76, %p77
    %p80 = scmp.ne.s32.totalorder %s63, %s79
    %p81 = scmp.eq.s32.totalorder %s15, 0
    %p82 = por %p80, %p81
    %s83 = ssub.s32 %s16, %s28
    %p84 = scmp.eq.s32.totalorder %s83, 0
    %s86 = sadd.s32 %s85, 1
    %s87 = scalar_select %p84, %s85, %s86
    %p90 = pneg %p84
    %p91 = scmp.eq.s32.totalorder %s9, 2
    %p92 = por %p90, %p91
    %p93 = scmp.ne.s32.totalorder %s85, %s88
    %p94 = scmp.eq.s32.totalorder %s9, 0
    %p95 = por %p93, %p94
    %p96 = scmp.ne.s32.totalorder %s85, %s88
    %p97 = scmp.eq.s32.totalorder %s14, 2
    %p98 = por %p96, %p97
    %p99 = scmp.ne.s32.totalorder %s88, %s89
    %p100 = scmp.eq.s32.totalorder %s14, 0
    %p101 = por %p99, %p100
    %p102 = scmp.ne.s32.totalorder %s88, %s89
    %p103 = scmp.eq.s32.totalorder %s15, 2
    %p104 = por %p102, %p103
    %p106 = scmp.ne.s32.totalorder %s89, %s105
    %p107 = scmp.eq.s32.totalorder %s15, 0
    %p108 = por %p106, %p107
    %s109 = ssub.s32 %s16, %s28
    %s110 = ssub.s32 %s17, %s24
    %s111 = sor.u32 %s109, %s110
    %p112 = scmp.eq.s32.totalorder %s111, 0
    %s114 = sadd.s32 %s113, 1
    %s115 = scalar_select %p112, %s113, %s114
    %p118 = pneg %p112
    %p119 = scmp.eq.s32.totalorder %s9, 2
    %p120 = por %p118, %p119
    %p121 = scmp.ne.s32.totalorder %s113, %s116
    %p122 = scmp.eq.s32.totalorder %s9, 0
    %p123 = por %p121, %p122
    %p124 = scmp.ne.s32.totalorder %s113, %s116
    %p125 = scmp.eq.s32.totalorder %s14, 2
    %p126 = por %p124, %p125
    %p127 = scmp.ne.s32.totalorder %s116, %s117
    %p128 = scmp.eq.s32.totalorder %s14, 0
    %p129 = por %p127, %p128
    %p130 = scmp.ne.s32.totalorder %s116, %s117
    %p131 = scmp.eq.s32.totalorder %s15, 2
    %p132 = por %p130, %p131
    %p134 = scmp.ne.s32.totalorder %s117, %s133
    %p135 = scmp.eq.s32.totalorder %s15, 0
    %p136 = por %p134, %p135
    %p137 = scmp.le.s32.totalorder 1, %s9
    %p138 = scmp.lt.s32.totalorder %s9, 4
    %p139 = pnand %p137, %p138
    %p140 = pneg %p139
    // Predicated region
    $region9: #{forward.14} parent=5 // pred_check
      _
    $region10: #{forward.14} parent=5 // pred_check_branch
      %142 = sbr.rel (%p139) target = $region12
    $region11: #{forward.14} parent=5 // pred_region
      %s143 = ssub.s32 %s9, 1
    $region12: #{forward.14} parent=5 // pred_fallthru
      _
    %p144 = scmp.lt.s32.totalorder %s9, 3
    // Predicated region
    $region13: #{forward.14} parent=5 // pred_check
      %p145 = pneg %p144
    $region14: #{forward.14} parent=5 // pred_check_branch
      %147 = sbr.rel (%p145) target = $region16
    $region15: #{forward.14} parent=5 // pred_region
      // Predicated region
      $region17: #{forward.14} parent=15 // pred_check
        %p148 = pneg %p43
      $region18: #{forward.14} parent=15 // pred_check_branch
        %150 = sbr.rel (%p148) target = $region20
      $region19: #{forward.14} parent=15 // pred_region
        %s151 = smul.u32 2, %s17
        %p152 = scmp.lt.s32.totalorder %s16, 2
        %s153 = scalar_select %p152, %s16, 2
        %p154 = scmp.lt.s32.totalorder %s151, 1
        %s155 = scalar_select %p154, %s151, 1
        %s156 = smul.addr %s155, 2
        %s157 = smul.addr %s153, 4
        %s158 = sadd.s32 %s156, %s157
        %s159 = smul.addr %s158, 4
        %s160 = scalar_lea.vmem %s0, %s159
        %s161 = smul.u32 2, %s17
      $region20: #{forward.14} parent=15 // pred_fallthru
        _
      // Predicated region
      $region21: #{forward.14} parent=15 // pred_check
        %p162 = pneg %p69
      $region22: #{forward.14} parent=15 // pred_check_branch
        %164 = sbr.rel (%p162) target = $region24
      $region23: #{forward.14} parent=15 // pred_region
        %p165 = scmp.lt.s32.totalorder %s16, 2
        %s166 = scalar_select %p165, %s16, 2
        %s167 = smul.addr %s166, 32
        %s168 = smul.addr %s167, 4
        %s169 = scalar_lea.vmem %s1, %s168
      $region24: #{forward.14} parent=15 // pred_fallthru
        _
      // Predicated region
      $region25: #{forward.14} parent=15 // pred_check
        %p170 = pneg %p95
      $region26: #{forward.14} parent=15 // pred_check_branch
        %172 = sbr.rel (%p170) target = $region28
      $region27: #{forward.14} parent=15 // pred_region
        %p173 = scmp.lt.s32.totalorder %s16, 2
        %s174 = scalar_select %p173, %s16, 2
        %s175 = scalar_lea.vmem %s2, %s174
      $region28: #{forward.14} parent=15 // pred_fallthru
        _
    $region16: #{forward.14} parent=5 // pred_fallthru
      _
    %p176 = scmp.le.s32.totalorder 1, %s9
    %p177 = scmp.lt.s32.totalorder %s9, 4
    %p178 = pnand %p176, %p177
    %p179 = pneg %p178
    // Predicated region
    $region29: #{forward.14} parent=5 // pred_check
      _
    $region30: #{forward.14} parent=5 // pred_check_branch
      %181 = sbr.rel (%p178) target = $region32
    $region31: #{forward.14} parent=5 // pred_region
      %s182 = ssub.s32 %s9, 1
      %s183 = smul.u32 2, %s19
      %p184 = scmp.lt.s32.totalorder %s18, 2
      %s185 = scalar_select %p184, %s18, 2
      %p186 = scmp.lt.s32.totalorder %s183, 1
      %s187 = scalar_select %p186, %s183, 1
      %s188 = smul.addr %s187, 2
      %s189 = smul.addr %s185, 4
      %s190 = sadd.s32 %s188, %s189
      %s191 = smul.addr %s190, 4
      %s192 = scalar_lea.vmem %s0, %s191
      %p193 = pneg %p49
      %p194 = pneg %p46
      %p195 = scmp.lt.s32.totalorder %s18, 2
      %s196 = scalar_select %p195, %s18, 2
      %s197 = smul.addr %s196, 32
      %s198 = smul.addr %s197, 4
      %s199 = scalar_lea.vmem %s1, %s198
      %p200 = pneg %p75
      %p201 = pneg %p72
      %p202 = scmp.lt.s32.totalorder %s18, 2
      %s203 = scalar_select %p202, %s18, 2
      %s204 = scalar_lea.vmem %s2, %s203
      %p205 = pneg %p101
      %p206 = pneg %p98
      %p207 = pneg %p129
      %p208 = pneg %p126
      %s209 = smul.u32 2, %s19
      %p210 = scmp.lt.s32.totalorder %s18, 2
      %s211 = scalar_select %p210, %s18, 2
      %p212 = scmp.lt.s32.totalorder %s209, 1
      %s213 = scalar_select %p212, %s209, 1
      %s214 = smul.addr %s211, 2
      %s215 = sadd.s32 %s213, %s214
      %s216 = smul.addr %s215, 4
      %s217 = scalar_lea.vmem %s3, %s216
      %s218 = smul.u32 2, %s19
      %p219 = scmp.lt.s32.totalorder %s18, 2
      %s220 = scalar_select %p219, %s18, 2
      %p221 = scmp.lt.s32.totalorder %s218, 1
      %s222 = scalar_select %p221, %s218, 1
      %s223 = smul.addr %s222, 2
      %s224 = smul.addr %s220, 4
      %s225 = sadd.s32 %s223, %s224
      %s226 = smul.addr %s225, 4
      %s227 = scalar_lea.vmem %s0, %s226
      %s228 = smul.u32 2, %s19
      %p229 = scmp.lt.s32.totalorder %s18, 2
      %s230 = scalar_select %p229, %s18, 2
      %s231 = smul.addr %s230, 32
      %s232 = smul.addr %s231, 4
      %s233 = scalar_lea.vmem %s1, %s232
      %p234 = scmp.lt.s32.totalorder %s18, 2
      %s235 = scalar_select %p234, %s18, 2
      %s236 = scalar_lea.vmem %s2, %s235
      %s237 = smul.u32 2, %s19
      %p238 = scmp.lt.s32.totalorder %s18, 2
      %s239 = scalar_select %p238, %s18, 2
      %p240 = scmp.lt.s32.totalorder %s237, 1
      %s241 = scalar_select %p240, %s237, 1
      %s242 = smul.addr %s239, 2
      %s243 = sadd.s32 %s241, %s242
      %s244 = smul.addr %s243, 4
      %s245 = scalar_lea.vmem %s3, %s244
      %s246 = smul.u32 2, %s19
      %v248 = vld [vmem:[%s227] sm:$0xff]
      %v249 = vld [vmem:[%s227 + $0x8] sm:$0xff]
      %v250 = vld [vmem:[%s233] sm:$0xf]
      %v251 = vld [vmem:[%s233 + $0x4] sm:$0xf]
      %v252 = vld [vmem:[%s233 + $0x8] sm:$0xf]
      %v253 = vld [vmem:[%s233 + $0xc] sm:$0xf]
      %v254 = vld [vmem:[%s233 + $0x10] sm:$0xf]
      %v255 = vld [vmem:[%s233 + $0x14] sm:$0xf]
      %v256 = vld [vmem:[%s233 + $0x18] sm:$0xf]
      %v257 = vld [vmem:[%s233 + $0x1c] sm:$0xf]
      %v258 = vld [vmem:[%s233 + $0x20] sm:$0xf]
      %v259 = vld [vmem:[%s233 + $0x24] sm:$0xf]
      %v260 = vld [vmem:[%s233 + $0x28] sm:$0xf]
      %v261 = vld [vmem:[%s233 + $0x2c] sm:$0xf]
      %v262 = vld [vmem:[%s233 + $0x30] sm:$0xf]
      %v263 = vld [vmem:[%s233 + $0x34] sm:$0xf]
      %v264 = vld [vmem:[%s233 + $0x38] sm:$0xf]
      %v265 = vld [vmem:[%s233 + $0x3c] sm:$0xf]
      %v266 = vld [vmem:[%s233 + $0x40] sm:$0xf]
      %v267 = vld [vmem:[%s233 + $0x44] sm:$0xf]
      %v268 = vld [vmem:[%s233 + $0x48] sm:$0xf]
      %v269 = vld [vmem:[%s233 + $0x4c] sm:$0xf]
      %v270 = vld [vmem:[%s233 + $0x50] sm:$0xf]
      %v271 = vld [vmem:[%s233 + $0x54] sm:$0xf]
      %v272 = vld [vmem:[%s233 + $0x58] sm:$0xf]
      %v273 = vld [vmem:[%s233 + $0x5c] sm:$0xf]
      %v274 = vld [vmem:[%s233 + $0x60] sm:$0xf]
      %v275 = vld [vmem:[%s233 + $0x64] sm:$0xf]
      %v276 = vld [vmem:[%s233 + $0x68] sm:$0xf]
      %v277 = vld [vmem:[%s233 + $0x6c] sm:$0xf]
      %v278 = vld [vmem:[%s233 + $0x70] sm:$0xf]
      %v279 = vld [vmem:[%s233 + $0x74] sm:$0xf]
      %v280 = vld [vmem:[%s233 + $0x78] sm:$0xf]
      %v281 = vld [vmem:[%s233 + $0x7c] sm:$0xf]
      %v282 = vld [vmem:[%s236] sm:$0x1]
      %v284 = vlaneseq
      %v285 = vshrl.u32 %v284, 7
      %v286 = vsub.s32 0, %v285
      %v287 = vrot.slane %v282, %v286
      %v291 = vunpack.c.l.b16 %v248
      %v292 = vunpack.c.h.b16 %v248
      %v293 = vunpack.c.l.b16 %v249
      %v294 = vunpack.c.h.b16 %v249
      %v295 = vpack.c.b16 %v293, %v291
      %v296 = vpack.c.b16 %v294, %v292
      %v331 = vunpack.c.l.b16 %v250
      %v332 = vunpack.c.l.b16 %v251
      %v333 = vunpack.c.l.b16 %v252
      %v334 = vunpack.c.l.b16 %v253
      %v335 = vunpack.c.l.b16 %v254
      %v336 = vunpack.c.l.b16 %v255
      %v337 = vunpack.c.l.b16 %v256
      %v338 = vunpack.c.l.b16 %v257
      %v339 = vunpack.c.l.b16 %v258
      %v340 = vunpack.c.l.b16 %v259
      %v341 = vunpack.c.l.b16 %v260
      %v342 = vunpack.c.l.b16 %v261
      %v343 = vunpack.c.l.b16 %v262
      %v344 = vunpack.c.l.b16 %v263
      %v345 = vunpack.c.l.b16 %v264
      %v346 = vunpack.c.l.b16 %v265
      %v347 = vunpack.c.l.b16 %v266
      %v348 = vunpack.c.l.b16 %v267
      %v349 = vunpack.c.l.b16 %v268
      %v350 = vunpack.c.l.b16 %v269
      %v351 = vunpack.c.l.b16 %v270
      %v352 = vunpack.c.l.b16 %v271
      %v353 = vunpack.c.l.b16 %v272
      %v354 = vunpack.c.l.b16 %v273
      %v355 = vunpack.c.l.b16 %v274
      %v356 = vunpack.c.l.b16 %v275
      %v357 = vunpack.c.l.b16 %v276
      %v358 = vunpack.c.l.b16 %v277
      %v359 = vunpack.c.l.b16 %v278
      %v360 = vunpack.c.l.b16 %v279
      %v361 = vunpack.c.l.b16 %v280
      %v362 = vunpack.c.l.b16 %v281
      %v363 = vpack.c.b16 %v332, %v331
      %v364 = vpack.c.b16 %v334, %v333
      %v365 = vpack.c.b16 %v336, %v335
      %v366 = vpack.c.b16 %v338, %v337
      %v367 = vpack.c.b16 %v340, %v339
      %v368 = vpack.c.b16 %v342, %v341
      %v369 = vpack.c.b16 %v344, %v343
      %v370 = vpack.c.b16 %v346, %v345
      %v371 = vpack.c.b16 %v348, %v347
      %v372 = vpack.c.b16 %v350, %v349
      %v373 = vpack.c.b16 %v352, %v351
      %v374 = vpack.c.b16 %v354, %v353
      %v375 = vpack.c.b16 %v356, %v355
      %v376 = vpack.c.b16 %v358, %v357
      %v377 = vpack.c.b16 %v360, %v359
      %v378 = vpack.c.b16 %v362, %v361
      %395 = vmatprep.subr.bf16.mxu0 0
      %396 = vmatpush1.bf16.msra.mxu0 %v363
      %397 = vmatprep.subr.bf16.mxu0 0
      %398 = vmatpush1.bf16.msra.mxu0 %v364
      %399 = vmatprep.subr.bf16.mxu0 0
      %400 = vmatpush1.bf16.msra.mxu0 %v365
      %401 = vmatprep.subr.bf16.mxu0 0
      %402 = vmatpush1.bf16.msra.mxu0 %v366
      %403 = vmatprep.subr.bf16.mxu0 0
      %404 = vmatpush1.bf16.msra.mxu0 %v367
      %405 = vmatprep.subr.bf16.mxu0 0
      %406 = vmatpush1.bf16.msra.mxu0 %v368
      %407 = vmatprep.subr.bf16.mxu0 0
      %408 = vmatpush1.bf16.msra.mxu0 %v369
      %409 = vmatprep.subr.bf16.mxu0 0
      %410 = vmatpush1.bf16.msra.mxu0 %v370
      %411 = vmatprep.subr.bf16.mxu0 0
      %412 = vmatpush1.bf16.msra.mxu0 %v371
      %413 = vmatprep.subr.bf16.mxu0 0
      %414 = vmatpush1.bf16.msra.mxu0 %v372
      %415 = vmatprep.subr.bf16.mxu0 0
      %416 = vmatpush1.bf16.msra.mxu0 %v373
      %417 = vmatprep.subr.bf16.mxu0 0
      %418 = vmatpush1.bf16.msra.mxu0 %v374
      %419 = vmatprep.subr.bf16.mxu0 0
      %420 = vmatpush1.bf16.msra.mxu0 %v375
      %421 = vmatprep.subr.bf16.mxu0 0
      %422 = vmatpush1.bf16.msra.mxu0 %v376
      %423 = vmatprep.subr.bf16.mxu0 0
      %424 = vmatpush1.bf16.msra.mxu0 %v377
      %425 = vmatprep.subr.bf16.mxu0 0
      %426 = vmatpush1.bf16.msra.mxu0 %v378
      %427 = vmatprep.mubr.bf16.mxu0 %v296
      %428 = vmatmul.mubr.bf16.gmra.mrb[0].mxu0 %v295
      %v429 = vpop.f32.mrb[0].mxu0
      %v430 = vadd.f32 %v287, %v429
      %v431 = vpop.f32.mrb[0].mxu0
      %v432 = vpop.f32.mrb[0].mxu0
      %v433 = vadd.f32 %v287, %v432
      %v434 = vpop.f32.mrb[0].mxu0
      %435 = vdwg.mxu0
      %vm436 = vcmp.ge.f32.partialorder %v430, 0.0
      %vm437 = vcmp.ge.f32.partialorder %v433, 0.0
      %v438 = vmul.f32 %v430, 0.2
      %v439 = vmul.f32 %v433, 0.2
      %v440 = vsel %vm436, %v430, %v438
      %v441 = vsel %vm437, %v433, %v439
      %v442 = vpack.c.bf16 %v441, %v440
      %v444 = vunpack.c.l.b16 %v442
      %v445 = vunpack.c.h.b16 %v442
      %v446 = vpack.c.b16 %v444, %v444
      %v447 = vpack.c.b16 %v445, %v445
      %vm450 = vcmask 257024
      %451 = vst.msk [vmem:[%s245] sm:$0xf] %vm450, %v446
      %452 = vst.msk [vmem:[%s245 + $0x4] sm:$0xf] %vm450, %v447
      %s453 = smul.u32 2, %s19
      %p454 = scmp.lt.s32.totalorder %s18, 2
      %s455 = scalar_select %p454, %s18, 2
      %p456 = scmp.lt.s32.totalorder %s453, 1
      %s457 = scalar_select %p456, %s453, 1
      %s458 = smul.addr %s455, 2
      %s459 = sadd.s32 %s457, %s458
      %s460 = smul.addr %s459, 4
      %s461 = scalar_lea.vmem %s3, %s460
      // Predicated region
      $region33: #{forward.14} parent=31 // pred_check
        %p462 = pneg %p126
      $region34: #{forward.14} parent=31 // pred_check_branch
        %464 = sbr.rel (%p462) target = $region36
      $region35: #{forward.14} parent=31 // pred_region
        %s465 = smul.u32 2, %s19
      $region36: #{forward.14} parent=31 // pred_fallthru
        _
    $region32: #{forward.14} parent=5 // pred_fallthru
      _
    %p466 = scmp.le.s32.totalorder 2, %s9
    // Predicated region
    $region37: #{forward.14} parent=5 // pred_check
      %p467 = pneg %p466
    $region38: #{forward.14} parent=5 // pred_check_branch
      %469 = sbr.rel (%p467) target = $region40
    $region39: #{forward.14} parent=5 // pred_region
      %s470 = ssub.s32 %s9, 2
      // Predicated region
      $region41: #{forward.14} parent=39 // pred_check
        %p471 = pneg %p132
      $region42: #{forward.14} parent=39 // pred_check_branch
        %473 = sbr.rel (%p471) target = $region44
      $region43: #{forward.14} parent=39 // pred_region
        %s474 = smul.u32 2, %s21
        %p475 = scmp.lt.s32.totalorder %s20, 2
        %s476 = scalar_select %p475, %s20, 2
        %p477 = scmp.lt.s32.totalorder %s474, 1
        %s478 = scalar_select %p477, %s474, 1
        %s479 = smul.addr %s476, 2
        %s480 = sadd.s32 %s478, %s479
        %s481 = smul.addr %s480, 4
        %s482 = scalar_lea.vmem %s3, %s481
      $region44: #{forward.14} parent=39 // pred_fallthru
        _
    $region40: #{forward.14} parent=5 // pred_fallthru
      _
  $region6: #{forward.14} parent=0 // loop_footer
    %s13 = sadd.s32 1, %s9
  $region7: #{forward.14} parent=0 // loop_footer_branch
    %8 = sbr.rel target = $region3
  $region8: #{forward.14} parent=0 // loop_exit
    _

// kernel: squeeze.7
$region0: #{squeeze.7}
  %s0 = inlined_call_operand.vmem [shape: f32[16], index: 0, kind: input, shape index: {}]
  %s1 = inlined_call_operand.hbm [shape: f32[2,8], index: 1, kind: output, shape index: {}]
  $region1: #{squeeze.7} parent=0
    #allocation0 [shape = 'u8[1024]{0}', space=vmem, size = 0x400, scoped, tag = 'operand span for operand 1']
    #allocation1 [shape = 's32[1]{0}', space=sflag, size = 0x4, scoped, tag = 'scoped memory for squeeze.7']
    #allocation2 [shape = 'u8[4096]{0}', space=vmem, size = 0x1000, scoped, tag = 'scoped mem for output reshape']
    #allocation3 [shape = 'u8[4096]{0}', space=vmem, size = 0x1000, scoped, tag = 'scoped mem for input reshape']
    %2 = vsyncpa [#allocation1], 0
    %s4 = sshllo.u32 0, 1
    %v5 = vld [vmem:[%s0] sm:%s4]
    %6 = vst [vmem:[#allocation3] sm:%s4] %v5
    %v7 = vld [vmem:[#allocation3] sm:$0x1]
    %vm8 = vcmask 64512
    %9 = vst.msk [vmem:[#allocation2] sm:$0x1] %vm8, %v7
    %v10 = vld [vmem:[#allocation3] sm:$0x1]
    %11 = vrot.lane.b32.xlu0 %v10, 120
    %v12 = vpop.permute.xlu0 %11
    %vm13 = vcmask 64512
    %s14 = scalar_lea.vmem [#allocation2], 1
    %15 = vst.msk [vmem:[%s14] sm:$0x1] %vm13, %v12
    %s17 = sshllo.u32 0, 2
    %v19 = vld [vmem:[#allocation2] sm:%s17]
    %s20 = sshllo.u32 0, 2
    %21 = vst [vmem:[#allocation0] sm:%s20] %v19
    %s23 = ssub.s32 32, 32
    %24 = vsyncadd [#allocation1], %s23
    %s26 = sshll.u32 [#allocation0], 4
    %s27 = int_to_ptr.vmem [resolvable:$true] %s26
    %29 = dma.vmem_to_hbm [thread:$0]  %s27, 32, %s1, [#allocation1]
    %30 = dma.done [#allocation1], 32
    %31 = vsyncpa [#allocation1], 1

// kernel: forward.8
$region0: #{forward.8}
  #allocation0 [shape = 'u32[]', space=smem, size = 0x4, offset = 0x4, fixed_abs, tag = 'smem constant byte address 0x4 - core index']
  #allocation1 [shape = 'u32[144,128]{1,0:T(1,128)}', space=vmem, size = 0x12000, scoped, tag = 'internal scratch']
  %s0 = inlined_call_operand.vmem [shape: bf16[16,16], index: 0, kind: input, shape index: {}]
  %s1 = inlined_call_operand.vmem [shape: bf16[16,32], index: 1, kind: input, shape index: {}]
  %s2 = inlined_call_operand.vmem [shape: f32[1,32], index: 2, kind: input, shape index: {}]
  %s3 = inlined_call_operand.vmem [shape: bf16[32,32], index: 3, kind: input, shape index: {}]
  %s4 = inlined_call_operand.vmem [shape: f32[1,32], index: 4, kind: input, shape index: {}]
  %s5 = inlined_call_operand.vmem [shape: bf16[16,32], index: 5, kind: output, shape index: {}]
  %s6 = sld [smem:[#allocation0]]
  $region30: #{forward.8} parent=0
    _
  %s8 = ssub.s32 1, %s6
  %s9 = scalar_select 0, %s8, %s6
  // Predicated region
  $region2: #{forward.8} parent=0 // pred_check
    _
  $region3: #{forward.8} parent=0 // pred_check_branch
    %11 = sbr.rel (0) target = $region5
  $region4: #{forward.8} parent=0 // pred_region
    _
  $region5: #{forward.8} parent=0 // pred_fallthru
    _
  // Predicated region
  $region6: #{forward.8} parent=0 // pred_check
    _
  $region7: #{forward.8} parent=0 // pred_check_branch
    %13 = sbr.rel (0) target = $region9
  $region8: #{forward.8} parent=0 // pred_region
    _
  $region9: #{forward.8} parent=0 // pred_fallthru
    _
  // Predicated region
  $region10: #{forward.8} parent=0 // pred_check
    _
  $region11: #{forward.8} parent=0 // pred_check_branch
    %15 = sbr.rel (0) target = $region13
  $region12: #{forward.8} parent=0 // pred_region
    _
  $region13: #{forward.8} parent=0 // pred_fallthru
    _
  // Predicated region
  $region14: #{forward.8} parent=0 // pred_check
    _
  $region15: #{forward.8} parent=0 // pred_check_branch
    %17 = sbr.rel (0) target = $region17
  $region16: #{forward.8} parent=0 // pred_region
    _
  $region17: #{forward.8} parent=0 // pred_fallthru
    _
  // Predicated region
  $region18: #{forward.8} parent=0 // pred_check
    _
  $region19: #{forward.8} parent=0 // pred_check_branch
    %19 = sbr.rel (0) target = $region21
  $region20: #{forward.8} parent=0 // pred_region
    _
  $region21: #{forward.8} parent=0 // pred_fallthru
    _
  %v21 = vld [vmem:[%s0] sm:$0xf]
  %v22 = vld [vmem:[%s0 + $0x4] sm:$0xf]
  %v23 = vld [vmem:[%s1] sm:$0xf]
  %v24 = vld [vmem:[%s1 + $0x4] sm:$0xf]
  %v25 = vld [vmem:[%s2] sm:$0x1]
  %v27 = vlaneseq
  %v28 = vshrl.u32 %v27, 7
  %v29 = vsub.s32 0, %v28
  %v30 = vrot.slane %v25, %v29
  %v34 = vunpack.c.l.b16 %v21
  %v35 = vunpack.c.l.b16 %v22
  %v36 = vpack.c.b16 %v35, %v34
  %v39 = vunpack.c.l.b16 %v23
  %v40 = vunpack.c.l.b16 %v24
  %v41 = vpack.c.b16 %v40, %v39
  %vm43 = vcmask 130048
  %v45 = vsel %vm43, %v36, 0
  %47 = vmatprep.subr.bf16.mxu0 0
  %48 = vmatpush1.bf16.msra.mxu0 %v41
  %49 = vmatprep.subr.bf16.mxu0 0
  %50 = vmatpush1.bf16.msra.mxu0 0
  %51 = vmatprep.subr.bf16.mxu0 0
  %52 = vmatpush1.bf16.msra.mxu0 0
  %53 = vmatprep.subr.bf16.mxu0 0
  %54 = vmatpush1.bf16.msra.mxu0 0
  %55 = vmatprep.subr.bf16.mxu0 0
  %56 = vmatpush1.bf16.msra.mxu0 0
  %57 = vmatprep.subr.bf16.mxu0 0
  %58 = vmatpush1.bf16.msra.mxu0 0
  %59 = vmatprep.subr.bf16.mxu0 0
  %60 = vmatpush1.bf16.msra.mxu0 0
  %61 = vmatprep.subr.bf16.mxu0 0
  %62 = vmatpush1.bf16.msra.mxu0 0
  %63 = vmatprep.subr.bf16.mxu0 0
  %64 = vmatpush1.bf16.msra.mxu0 0
  %65 = vmatprep.subr.bf16.mxu0 0
  %66 = vmatpush1.bf16.msra.mxu0 0
  %67 = vmatprep.subr.bf16.mxu0 0
  %68 = vmatpush1.bf16.msra.mxu0 0
  %69 = vmatprep.subr.bf16.mxu0 0
  %70 = vmatpush1.bf16.msra.mxu0 0
  %71 = vmatprep.subr.bf16.mxu0 0
  %72 = vmatpush1.bf16.msra.mxu0 0
  %73 = vmatprep.subr.bf16.mxu0 0
  %74 = vmatpush1.bf16.msra.mxu0 0
  %75 = vmatprep.subr.bf16.mxu0 0
  %76 = vmatpush1.bf16.msra.mxu0 0
  %77 = vmatprep.subr.bf16.mxu0 0
  %78 = vmatpush1.bf16.msra.mxu0 0
  %79 = vmatprep.mubr.bf16.mxu0 0
  %80 = vmatmul.mubr.bf16.gmra.mrb[0].mxu0 %v45
  %v81 = vpop.f32.mrb[0].mxu0
  %v82 = vadd.f32 %v30, %v81
  %v83 = vpop.f32.mrb[0].mxu0
  %v84 = vpop.f32.mrb[0].mxu0
  %v85 = vadd.f32 %v30, %v84
  %v86 = vpop.f32.mrb[0].mxu0
  %87 = vdwg.mxu0
  %vm88 = vcmp.ge.f32.partialorder %v82, 0.0
  %vm89 = vcmp.ge.f32.partialorder %v85, 0.0
  %v90 = vmul.f32 %v82, 0.2
  %v91 = vmul.f32 %v85, 0.2
  %v92 = vsel %vm88, %v82, %v90
  %v93 = vsel %vm89, %v85, %v91
  %v94 = vpack.c.bf16 %v93, %v92
  %v95 = vld [vmem:[%s3] sm:$0xf]
  %v96 = vld [vmem:[%s3 + $0x4] sm:$0xf]
  %v97 = vld [vmem:[%s3 + $0x8] sm:$0xf]
  %v98 = vld [vmem:[%s3 + $0xc] sm:$0xf]
  %v99 = vld [vmem:[%s4] sm:$0x1]
  %v101 = vlaneseq
  %v102 = vshrl.u32 %v101, 7
  %v103 = vsub.s32 0, %v102
  %v104 = vrot.slane %v99, %v103
  %v110 = vunpack.c.l.b16 %v95
  %v111 = vunpack.c.l.b16 %v96
  %v112 = vunpack.c.l.b16 %v97
  %v113 = vunpack.c.l.b16 %v98
  %v114 = vpack.c.b16 %v111, %v110
  %v115 = vpack.c.b16 %v113, %v112
  %vm118 = vcmask 261120
  %v120 = vsel %vm118, %v94, 0
  %122 = vmatprep.subr.bf16.mxu0 0
  %123 = vmatpush1.bf16.msra.mxu0 %v114
  %124 = vmatprep.subr.bf16.mxu0 0
  %125 = vmatpush1.bf16.msra.mxu0 %v115
  %126 = vmatprep.subr.bf16.mxu0 0
  %127 = vmatpush1.bf16.msra.mxu0 0
  %128 = vmatprep.subr.bf16.mxu0 0
  %129 = vmatpush1.bf16.msra.mxu0 0
  %130 = vmatprep.subr.bf16.mxu0 0
  %131 = vmatpush1.bf16.msra.mxu0 0
  %132 = vmatprep.subr.bf16.mxu0 0
  %133 = vmatpush1.bf16.msra.mxu0 0
  %134 = vmatprep.subr.bf16.mxu0 0
  %135 = vmatpush1.bf16.msra.mxu0 0
  %136 = vmatprep.subr.bf16.mxu0 0
  %137 = vmatpush1.bf16.msra.mxu0 0
  %138 = vmatprep.subr.bf16.mxu0 0
  %139 = vmatpush1.bf16.msra.mxu0 0
  %140 = vmatprep.subr.bf16.mxu0 0
  %141 = vmatpush1.bf16.msra.mxu0 0
  %142 = vmatprep.subr.bf16.mxu0 0
  %143 = vmatpush1.bf16.msra.mxu0 0
  %144 = vmatprep.subr.bf16.mxu0 0
  %145 = vmatpush1.bf16.msra.mxu0 0
  %146 = vmatprep.subr.bf16.mxu0 0
  %147 = vmatpush1.bf16.msra.mxu0 0
  %148 = vmatprep.subr.bf16.mxu0 0
  %149 = vmatpush1.bf16.msra.mxu0 0
  %150 = vmatprep.subr.bf16.mxu0 0
  %151 = vmatpush1.bf16.msra.mxu0 0
  %152 = vmatprep.subr.bf16.mxu0 0
  %153 = vmatpush1.bf16.msra.mxu0 0
  %154 = vmatprep.mubr.bf16.mxu0 0
  %155 = vmatmul.mubr.bf16.gmra.mrb[0].mxu0 %v120
  %v156 = vpop.f32.mrb[0].mxu0
  %v157 = vadd.f32 %v104, %v156
  %v158 = vpop.f32.mrb[0].mxu0
  %v159 = vpop.f32.mrb[0].mxu0
  %v160 = vadd.f32 %v104, %v159
  %v161 = vpop.f32.mrb[0].mxu0
  %162 = vdwg.mxu0
  %vm163 = vcmp.ge.f32.partialorder %v157, 0.0
  %vm164 = vcmp.ge.f32.partialorder %v160, 0.0
  %v165 = vmul.f32 %v157, 0.2
  %v166 = vmul.f32 %v160, 0.2
  %v167 = vsel %vm163, %v157, %v165
  %v168 = vsel %vm164, %v160, %v166
  %v169 = vpack.c.bf16 %v168, %v167
  %v171 = vunpack.c.l.b16 %v169
  %v172 = vunpack.c.h.b16 %v169
  %v173 = vpack.c.b16 %v171, %v171
  %v174 = vpack.c.b16 %v172, %v172
  %vm177 = vcmask 257024
  %178 = vst.msk [vmem:[%s5] sm:$0xf] %vm177, %v173
  %179 = vst.msk [vmem:[%s5 + $0x4] sm:$0xf] %vm177, %v174
  // Predicated region
  $region22: #{forward.8} parent=0 // pred_check
    _
  $region23: #{forward.8} parent=0 // pred_check_branch
    %181 = sbr.rel (0) target = $region25
  $region24: #{forward.8} parent=0 // pred_region
    _
  $region25: #{forward.8} parent=0 // pred_fallthru
    _
  // Predicated region
  $region26: #{forward.8} parent=0 // pred_check
    _
  $region27: #{forward.8} parent=0 // pred_check_branch
    %183 = sbr.rel (0) target = $region29
  $region28: #{forward.8} parent=0 // pred_region
    _
  $region29: #{forward.8} parent=0 // pred_fallthru
    _

// kernel: forward.15
$region0: #{forward.15}
  #allocation0 [shape = 'u32[]', space=smem, size = 0x4, offset = 0x4, fixed_abs, tag = 'smem constant byte address 0x4 - core index']
  #allocation1 [shape = 'u32[144,128]{1,0:T(1,128)}', space=vmem, size = 0x12000, scoped, tag = 'internal scratch']
  %s0 = inlined_call_operand.vmem [shape: bf16[16,128], index: 0, kind: input, shape index: {}]
  %s1 = inlined_call_operand.vmem [shape: bf16[128,64], index: 1, kind: input, shape index: {}]
  %s2 = inlined_call_operand.vmem [shape: f32[1,64], index: 2, kind: input, shape index: {}]
  %s3 = inlined_call_operand.vmem [shape: bf16[64,32], index: 3, kind: input, shape index: {}]
  %s4 = inlined_call_operand.vmem [shape: f32[1,32], index: 4, kind: input, shape index: {}]
  %s5 = inlined_call_operand.vmem [shape: bf16[32,32], index: 5, kind: input, shape index: {}]
  %s6 = inlined_call_operand.vmem [shape: f32[1,32], index: 6, kind: input, shape index: {}]
  %s7 = inlined_call_operand.vmem [shape: bf16[32,128], index: 7, kind: input, shape index: {}]
  %s8 = inlined_call_operand.vmem [shape: f32[1,128], index: 8, kind: input, shape index: {}]
  %s9 = inlined_call_operand.vmem [shape: f32[16,128], index: 9, kind: output, shape index: {}]
  %s10 = sld [smem:[#allocation0]]
  $region46: #{forward.15} parent=0
    _
  %s12 = ssub.s32 1, %s10
  %s13 = scalar_select 0, %s12, %s10
  // Predicated region
  $region2: #{forward.15} parent=0 // pred_check
    _
  $region3: #{forward.15} parent=0 // pred_check_branch
    %15 = sbr.rel (0) target = $region5
  $region4: #{forward.15} parent=0 // pred_region
    _
  $region5: #{forward.15} parent=0 // pred_fallthru
    _
  // Predicated region
  $region6: #{forward.15} parent=0 // pred_check
    _
  $region7: #{forward.15} parent=0 // pred_check_branch
    %17 = sbr.rel (0) target = $region9
  $region8: #{forward.15} parent=0 // pred_region
    _
  $region9: #{forward.15} parent=0 // pred_fallthru
    _
  // Predicated region
  $region10: #{forward.15} parent=0 // pred_check
    _
  $region11: #{forward.15} parent=0 // pred_check_branch
    %19 = sbr.rel (0) target = $region13
  $region12: #{forward.15} parent=0 // pred_region
    _
  $region13: #{forward.15} parent=0 // pred_fallthru
    _
  // Predicated region
  $region14: #{forward.15} parent=0 // pred_check
    _
  $region15: #{forward.15} parent=0 // pred_check_branch
    %21 = sbr.rel (0) target = $region17
  $region16: #{forward.15} parent=0 // pred_region
    _
  $region17: #{forward.15} parent=0 // pred_fallthru
    _
  // Predicated region
  $region18: #{forward.15} parent=0 // pred_check
    _
  $region19: #{forward.15} parent=0 // pred_check_branch
    %23 = sbr.rel (0) target = $region21
  $region20: #{forward.15} parent=0 // pred_region
    _
  $region21: #{forward.15} parent=0 // pred_fallthru
    _
  // Predicated region
  $region22: #{forward.15} parent=0 // pred_check
    _
  $region23: #{forward.15} parent=0 // pred_check_branch
    %25 = sbr.rel (0) target = $region25
  $region24: #{forward.15} parent=0 // pred_region
    _
  $region25: #{forward.15} parent=0 // pred_fallthru
    _
  // Predicated region
  $region26: #{forward.15} parent=0 // pred_check
    _
  $region27: #{forward.15} parent=0 // pred_check_branch
    %27 = sbr.rel (0) target = $region29
  $region28: #{forward.15} parent=0 // pred_region
    _
  $region29: #{forward.15} parent=0 // pred_fallthru
    _
  // Predicated region
  $region30: #{forward.15} parent=0 // pred_check
    _
  $region31: #{forward.15} parent=0 // pred_check_branch
    %29 = sbr.rel (0) target = $region33
  $region32: #{forward.15} parent=0 // pred_region
    _
  $region33: #{forward.15} parent=0 // pred_fallthru
    _
  // Predicated region
  $region34: #{forward.15} parent=0 // pred_check
    _
  $region35: #{forward.15} parent=0 // pred_check_branch
    %31 = sbr.rel (0) target = $region37
  $region36: #{forward.15} parent=0 // pred_region
    _
  $region37: #{forward.15} parent=0 // pred_fallthru
    _
  %v33 = vld [vmem:[%s0] sm:$0xf]
  %v34 = vld [vmem:[%s0 + $0x4] sm:$0xf]
  %v35 = vld [vmem:[%s1] sm:$0xf]
  %v36 = vld [vmem:[%s1 + $0x4] sm:$0xf]
  %v37 = vld [vmem:[%s1 + $0x8] sm:$0xf]
  %v38 = vld [vmem:[%s1 + $0xc] sm:$0xf]
  %v39 = vld [vmem:[%s1 + $0x10] sm:$0xf]
  %v40 = vld [vmem:[%s1 + $0x14] sm:$0xf]
  %v41 = vld [vmem:[%s1 + $0x18] sm:$0xf]
  %v42 = vld [vmem:[%s1 + $0x1c] sm:$0xf]
  %v43 = vld [vmem:[%s1 + $0x20] sm:$0xf]
  %v44 = vld [vmem:[%s1 + $0x24] sm:$0xf]
  %v45 = vld [vmem:[%s1 + $0x28] sm:$0xf]
  %v46 = vld [vmem:[%s1 + $0x2c] sm:$0xf]
  %v47 = vld [vmem:[%s1 + $0x30] sm:$0xf]
  %v48 = vld [vmem:[%s1 + $0x34] sm:$0xf]
  %v49 = vld [vmem:[%s1 + $0x38] sm:$0xf]
  %v50 = vld [vmem:[%s1 + $0x3c] sm:$0xf]
  %v51 = vld [vmem:[%s2] sm:$0x1]
  %v53 = vlaneseq
  %v54 = vshrl.u32 %v53, 7
  %v55 = vsub.s32 0, %v54
  %v56 = vrot.slane %v51, %v55
  %v60 = vunpack.c.l.b16 %v33
  %v61 = vunpack.c.l.b16 %v34
  %v62 = vpack.c.b16 %v61, %v60
  %v80 = vunpack.c.l.b16 %v35
  %v81 = vunpack.c.l.b16 %v36
  %v82 = vunpack.c.l.b16 %v37
  %v83 = vunpack.c.l.b16 %v38
  %v84 = vunpack.c.l.b16 %v39
  %v85 = vunpack.c.l.b16 %v40
  %v86 = vunpack.c.l.b16 %v41
  %v87 = vunpack.c.l.b16 %v42
  %v88 = vunpack.c.l.b16 %v43
  %v89 = vunpack.c.l.b16 %v44
  %v90 = vunpack.c.l.b16 %v45
  %v91 = vunpack.c.l.b16 %v46
  %v92 = vunpack.c.l.b16 %v47
  %v93 = vunpack.c.l.b16 %v48
  %v94 = vunpack.c.l.b16 %v49
  %v95 = vunpack.c.l.b16 %v50
  %v96 = vpack.c.b16 %v81, %v80
  %v97 = vpack.c.b16 %v83, %v82
  %v98 = vpack.c.b16 %v85, %v84
  %v99 = vpack.c.b16 %v87, %v86
  %v100 = vpack.c.b16 %v89, %v88
  %v101 = vpack.c.b16 %v91, %v90
  %v102 = vpack.c.b16 %v93, %v92
  %v103 = vpack.c.b16 %v95, %v94
  %112 = vmatprep.subr.bf16.mxu0 0
  %113 = vmatpush1.bf16.msra.mxu0 %v96
  %114 = vmatprep.subr.bf16.mxu0 0
  %115 = vmatpush1.bf16.msra.mxu0 %v97
  %116 = vmatprep.subr.bf16.mxu0 0
  %117 = vmatpush1.bf16.msra.mxu0 %v98
  %118 = vmatprep.subr.bf16.mxu0 0
  %119 = vmatpush1.bf16.msra.mxu0 %v99
  %120 = vmatprep.subr.bf16.mxu0 0
  %121 = vmatpush1.bf16.msra.mxu0 %v100
  %122 = vmatprep.subr.bf16.mxu0 0
  %123 = vmatpush1.bf16.msra.mxu0 %v101
  %124 = vmatprep.subr.bf16.mxu0 0
  %125 = vmatpush1.bf16.msra.mxu0 %v102
  %126 = vmatprep.subr.bf16.mxu0 0
  %127 = vmatpush1.bf16.msra.mxu0 %v103
  %128 = vmatprep.subr.bf16.mxu0 0
  %129 = vmatpush1.bf16.msra.mxu0 0
  %130 = vmatprep.subr.bf16.mxu0 0
  %131 = vmatpush1.bf16.msra.mxu0 0
  %132 = vmatprep.subr.bf16.mxu0 0
  %133 = vmatpush1.bf16.msra.mxu0 0
  %134 = vmatprep.subr.bf16.mxu0 0
  %135 = vmatpush1.bf16.msra.mxu0 0
  %136 = vmatprep.subr.bf16.mxu0 0
  %137 = vmatpush1.bf16.msra.mxu0 0
  %138 = vmatprep.subr.bf16.mxu0 0
  %139 = vmatpush1.bf16.msra.mxu0 0
  %140 = vmatprep.subr.bf16.mxu0 0
  %141 = vmatpush1.bf16.msra.mxu0 0
  %142 = vmatprep.subr.bf16.mxu0 0
  %143 = vmatpush1.bf16.msra.mxu0 0
  %144 = vmatprep.mubr.bf16.mxu0 0
  %145 = vmatmul.mubr.bf16.gmra.mrb[0].mxu0 %v62
  %v146 = vpop.f32.mrb[0].mxu0
  %v147 = vadd.f32 %v56, %v146
  %v148 = vpop.f32.mrb[0].mxu0
  %v149 = vpop.f32.mrb[0].mxu0
  %v150 = vadd.f32 %v56, %v149
  %v151 = vpop.f32.mrb[0].mxu0
  %152 = vdwg.mxu0
  %vm153 = vcmp.ge.f32.partialorder %v147, 0.0
  %vm154 = vcmp.ge.f32.partialorder %v150, 0.0
  %v155 = vmul.f32 %v147, 0.2
  %v156 = vmul.f32 %v150, 0.2
  %v157 = vsel %vm153, %v147, %v155
  %v158 = vsel %vm154, %v150, %v156
  %v159 = vpack.c.bf16 %v158, %v157
  %v160 = vld [vmem:[%s3] sm:$0xf]
  %v161 = vld [vmem:[%s3 + $0x4] sm:$0xf]
  %v162 = vld [vmem:[%s3 + $0x8] sm:$0xf]
  %v163 = vld [vmem:[%s3 + $0xc] sm:$0xf]
  %v164 = vld [vmem:[%s3 + $0x10] sm:$0xf]
  %v165 = vld [vmem:[%s3 + $0x14] sm:$0xf]
  %v166 = vld [vmem:[%s3 + $0x18] sm:$0xf]
  %v167 = vld [vmem:[%s3 + $0x1c] sm:$0xf]
  %v168 = vld [vmem:[%s4] sm:$0x1]
  %v170 = vlaneseq
  %v171 = vshrl.u32 %v170, 7
  %v172 = vsub.s32 0, %v171
  %v173 = vrot.slane %v168, %v172
  %v183 = vunpack.c.l.b16 %v160
  %v184 = vunpack.c.l.b16 %v161
  %v185 = vunpack.c.l.b16 %v162
  %v186 = vunpack.c.l.b16 %v163
  %v187 = vunpack.c.l.b16 %v164
  %v188 = vunpack.c.l.b16 %v165
  %v189 = vunpack.c.l.b16 %v166
  %v190 = vunpack.c.l.b16 %v167
  %v191 = vpack.c.b16 %v184, %v183
  %v192 = vpack.c.b16 %v186, %v185
  %v193 = vpack.c.b16 %v188, %v187
  %v194 = vpack.c.b16 %v190, %v189
  %vm199 = vcmask 523264
  %v201 = vsel %vm199, %v159, 0
  %203 = vmatprep.subr.bf16.mxu0 0
  %204 = vmatpush1.bf16.msra.mxu0 %v191
  %205 = vmatprep.subr.bf16.mxu0 0
  %206 = vmatpush1.bf16.msra.mxu0 %v192
  %207 = vmatprep.subr.bf16.mxu0 0
  %208 = vmatpush1.bf16.msra.mxu0 %v193
  %209 = vmatprep.subr.bf16.mxu0 0
  %210 = vmatpush1.bf16.msra.mxu0 %v194
  %211 = vmatprep.subr.bf16.mxu0 0
  %212 = vmatpush1.bf16.msra.mxu0 0
  %213 = vmatprep.subr.bf16.mxu0 0
  %214 = vmatpush1.bf16.msra.mxu0 0
  %215 = vmatprep.subr.bf16.mxu0 0
  %216 = vmatpush1.bf16.msra.mxu0 0
  %217 = vmatprep.subr.bf16.mxu0 0
  %218 = vmatpush1.bf16.msra.mxu0 0
  %219 = vmatprep.subr.bf16.mxu0 0
  %220 = vmatpush1.bf16.msra.mxu0 0
  %221 = vmatprep.subr.bf16.mxu0 0
  %222 = vmatpush1.bf16.msra.mxu0 0
  %223 = vmatprep.subr.bf16.mxu0 0
  %224 = vmatpush1.bf16.msra.mxu0 0
  %225 = vmatprep.subr.bf16.mxu0 0
  %226 = vmatpush1.bf16.msra.mxu0 0
  %227 = vmatprep.subr.bf16.mxu0 0
  %228 = vmatpush1.bf16.msra.mxu0 0
  %229 = vmatprep.subr.bf16.mxu0 0
  %230 = vmatpush1.bf16.msra.mxu0 0
  %231 = vmatprep.subr.bf16.mxu0 0
  %232 = vmatpush1.bf16.msra.mxu0 0
  %233 = vmatprep.subr.bf16.mxu0 0
  %234 = vmatpush1.bf16.msra.mxu0 0
  %235 = vmatprep.mubr.bf16.mxu0 0
  %236 = vmatmul.mubr.bf16.gmra.mrb[0].mxu0 %v201
  %v237 = vpop.f32.mrb[0].mxu0
  %v238 = vadd.f32 %v173, %v237
  %v239 = vpop.f32.mrb[0].mxu0
  %v240 = vpop.f32.mrb[0].mxu0
  %v241 = vadd.f32 %v173, %v240
  %v242 = vpop.f32.mrb[0].mxu0
  %243 = vdwg.mxu0
  %vm244 = vcmp.ge.f32.partialorder %v238, 0.0
  %vm245 = vcmp.ge.f32.partialorder %v241, 0.0
  %v246 = vmul.f32 %v238, 0.2
  %v247 = vmul.f32 %v241, 0.2
  %v248 = vsel %vm244, %v238, %v246
  %v249 = vsel %vm245, %v241, %v247
  %v250 = vpack.c.bf16 %v249, %v248
  %v251 = vld [vmem:[%s5] sm:$0xf]
  %v252 = vld [vmem:[%s5 + $0x4] sm:$0xf]
  %v253 = vld [vmem:[%s5 + $0x8] sm:$0xf]
  %v254 = vld [vmem:[%s5 + $0xc] sm:$0xf]
  %v255 = vld [vmem:[%s6] sm:$0x1]
  %v257 = vlaneseq
  %v258 = vshrl.u32 %v257, 7
  %v259 = vsub.s32 0, %v258
  %v260 = vrot.slane %v255, %v259
  %v266 = vunpack.c.l.b16 %v251
  %v267 = vunpack.c.l.b16 %v252
  %v268 = vunpack.c.l.b16 %v253
  %v269 = vunpack.c.l.b16 %v254
  %v270 = vpack.c.b16 %v267, %v266
  %v271 = vpack.c.b16 %v269, %v268
  %vm274 = vcmask 261120
  %v276 = vsel %vm274, %v250, 0
  %278 = vmatprep.subr.bf16.mxu0 0
  %279 = vmatpush1.bf16.msra.mxu0 %v270
  %280 = vmatprep.subr.bf16.mxu0 0
  %281 = vmatpush1.bf16.msra.mxu0 %v271
  %282 = vmatprep.subr.bf16.mxu0 0
  %283 = vmatpush1.bf16.msra.mxu0 0
  %284 = vmatprep.subr.bf16.mxu0 0
  %285 = vmatpush1.bf16.msra.mxu0 0
  %286 = vmatprep.subr.bf16.mxu0 0
  %287 = vmatpush1.bf16.msra.mxu0 0
  %288 = vmatprep.subr.bf16.mxu0 0
  %289 = vmatpush1.bf16.msra.mxu0 0
  %290 = vmatprep.subr.bf16.mxu0 0
  %291 = vmatpush1.bf16.msra.mxu0 0
  %292 = vmatprep.subr.bf16.mxu0 0
  %293 = vmatpush1.bf16.msra.mxu0 0
  %294 = vmatprep.subr.bf16.mxu0 0
  %295 = vmatpush1.bf16.msra.mxu0 0
  %296 = vmatprep.subr.bf16.mxu0 0
  %297 = vmatpush1.bf16.msra.mxu0 0
  %298 = vmatprep.subr.bf16.mxu0 0
  %299 = vmatpush1.bf16.msra.mxu0 0
  %300 = vmatprep.subr.bf16.mxu0 0
  %301 = vmatpush1.bf16.msra.mxu0 0
  %302 = vmatprep.subr.bf16.mxu0 0
  %303 = vmatpush1.bf16.msra.mxu0 0
  %304 = vmatprep.subr.bf16.mxu0 0
  %305 = vmatpush1.bf16.msra.mxu0 0
  %306 = vmatprep.subr.bf16.mxu0 0
  %307 = vmatpush1.bf16.msra.mxu0 0
  %308 = vmatprep.subr.bf16.mxu0 0
  %309 = vmatpush1.bf16.msra.mxu0 0
  %310 = vmatprep.mubr.bf16.mxu0 0
  %311 = vmatmul.mubr.bf16.gmra.mrb[0].mxu0 %v276
  %v312 = vpop.f32.mrb[0].mxu0
  %v313 = vadd.f32 %v260, %v312
  %v314 = vpop.f32.mrb[0].mxu0
  %v315 = vpop.f32.mrb[0].mxu0
  %v316 = vadd.f32 %v260, %v315
  %v317 = vpop.f32.mrb[0].mxu0
  %318 = vdwg.mxu0
  %vm319 = vcmp.ge.f32.partialorder %v313, 0.0
  %vm320 = vcmp.ge.f32.partialorder %v316, 0.0
  %v321 = vmul.f32 %v313, 0.2
  %v322 = vmul.f32 %v316, 0.2
  %v323 = vsel %vm319, %v313, %v321
  %v324 = vsel %vm320, %v316, %v322
  %v325 = vpack.c.bf16 %v324, %v323
  %v326 = vld [vmem:[%s7] sm:$0xf]
  %v327 = vld [vmem:[%s7 + $0x4] sm:$0xf]
  %v328 = vld [vmem:[%s7 + $0x8] sm:$0xf]
  %v329 = vld [vmem:[%s7 + $0xc] sm:$0xf]
  %v330 = vld [vmem:[%s8] sm:$0x1]
  %v332 = vlaneseq
  %v333 = vshrl.u32 %v332, 7
  %v334 = vsub.s32 0, %v333
  %v335 = vrot.slane %v330, %v334
  %v341 = vunpack.c.l.b16 %v326
  %v342 = vunpack.c.l.b16 %v327
  %v343 = vunpack.c.l.b16 %v328
  %v344 = vunpack.c.l.b16 %v329
  %v345 = vpack.c.b16 %v342, %v341
  %v346 = vpack.c.b16 %v344, %v343
  %v350 = vsel %vm274, %v325, 0
  %352 = vmatprep.subr.bf16.mxu0 0
  %353 = vmatpush1.bf16.msra.mxu0 %v345
  %354 = vmatprep.subr.bf16.mxu0 0
  %355 = vmatpush1.bf16.msra.mxu0 %v346
  %356 = vmatprep.subr.bf16.mxu0 0
  %357 = vmatpush1.bf16.msra.mxu0 0
  %358 = vmatprep.subr.bf16.mxu0 0
  %359 = vmatpush1.bf16.msra.mxu0 0
  %360 = vmatprep.subr.bf16.mxu0 0
  %361 = vmatpush1.bf16.msra.mxu0 0
  %362 = vmatprep.subr.bf16.mxu0 0
  %363 = vmatpush1.bf16.msra.mxu0 0
  %364 = vmatprep.subr.bf16.mxu0 0
  %365 = vmatpush1.bf16.msra.mxu0 0
  %366 = vmatprep.subr.bf16.mxu0 0
  %367 = vmatpush1.bf16.msra.mxu0 0
  %368 = vmatprep.subr.bf16.mxu0 0
  %369 = vmatpush1.bf16.msra.mxu0 0
  %370 = vmatprep.subr.bf16.mxu0 0
  %371 = vmatpush1.bf16.msra.mxu0 0
  %372 = vmatprep.subr.bf16.mxu0 0
  %373 = vmatpush1.bf16.msra.mxu0 0
  %374 = vmatprep.subr.bf16.mxu0 0
  %375 = vmatpush1.bf16.msra.mxu0 0
  %376 = vmatprep.subr.bf16.mxu0 0
  %377 = vmatpush1.bf16.msra.mxu0 0
  %378 = vmatprep.subr.bf16.mxu0 0
  %379 = vmatpush1.bf16.msra.mxu0 0
  %380 = vmatprep.subr.bf16.mxu0 0
  %381 = vmatpush1.bf16.msra.mxu0 0
  %382 = vmatprep.subr.bf16.mxu0 0
  %383 = vmatpush1.bf16.msra.mxu0 0
  %384 = vmatprep.mubr.bf16.mxu0 0
  %385 = vmatmul.mubr.bf16.gmra.mrb[0].mxu0 %v350
  %v386 = vpop.f32.mrb[0].mxu0
  %v387 = vadd.f32 %v335, %v386
  %v388 = vpop.f32.mrb[0].mxu0
  %v389 = vpop.f32.mrb[0].mxu0
  %v390 = vadd.f32 %v335, %v389
  %v391 = vpop.f32.mrb[0].mxu0
  %392 = vdwg.mxu0
  %393 = vst [vmem:[%s9] sm:$0xff] %v387
  %394 = vst [vmem:[%s9 + $0x8] sm:$0xff] %v390
  // Predicated region
  $region38: #{forward.15} parent=0 // pred_check
    _
  $region39: #{forward.15} parent=0 // pred_check_branch
    %396 = sbr.rel (0) target = $region41
  $region40: #{forward.15} parent=0 // pred_region
    _
  $region41: #{forward.15} parent=0 // pred_fallthru
    _
  // Predicated region
  $region42: #{forward.15} parent=0 // pred_check
    _
  $region43: #{forward.15} parent=0 // pred_check_branch
    %398 = sbr.rel (0) target = $region45
  $region44: #{forward.15} parent=0 // pred_region
    _
  $region45: #{forward.15} parent=0 // pred_fallthru
    _

</llo_original>
